<compile_context>
chip_gen: v5e
topology: v5e:2x2
jax: 0.10.0
libtpu: 0.0.40
codegen_flags: <defaults>
</compile_context>

<pallas_src>
import functools

import jax
import jax.numpy as jnp
from jax import lax
from jax.experimental import pallas as pl
from jax.experimental.pallas import tpu as pltpu


_LPAD = 16  # left pad of the activation scratch: bf16 sublane tile = 16 -> aligned store


def _round_up(x, m):
    return (x + m - 1) // m * m


def _fused_downsample_kernel(x_ref, w1_ref, b1_ref, w2t_ref, b2t_ref, o_ref, h_ref,
                             *, th, ow, cin4p, c1p, c2, hwidth):
    """One (batch, row-tile) grid step.

    x_ref : (TH+3, OW+1, 4*Cin_p)  bf16 halo'd space-to-depth conv1 input slab
    w1_ref: (4*4*Cin_p, C1_p)      bf16 conv1 im2col weight, rows = (bI, bJ, (di,dj,c))
    b1_ref: (1, C1_p)              f32
    w2t_ref:(C2_p, 9*C1_p)         bf16 conv2 im2col weight (transposed), cols = (kh,kw,c)
    b2t_ref:(C2_p, 1)              f32
    o_ref : (C2, TH*OW)            lane-dense NCHW output block (flattened H*W in lanes)
    h_ref : (TH+2, HWIDTH, C1_p)   bf16 VMEM scratch holding the conv1 activation (+halo)
    """
    t = pl.program_id(1)
    nrows = th + 2                     # conv1-activation rows incl. 2-row halo
    p1 = nrows * ow
    p2 = th * ow

    # ---- conv1: stride-2 3x3 conv == 2x2 conv over space-to-depth input; one matmul ----
    cols1 = jnp.concatenate(
        [x_ref[bi:bi + nrows, bj:bj + ow, :].reshape(p1, cin4p)
         for bi in range(2) for bj in range(2)],
        axis=-1)                                                     # (P1, 16*Cin_p) bf16
    y1 = jnp.dot(cols1, w1_ref[...], preferred_element_type=jnp.float32)
    y1 = jnp.maximum(y1 + b1_ref[...], 0.0)                          # f32 bias + ReLU

    # ---- stash conv1 activation in VMEM (bf16), sublane-aligned store at col _LPAD ----
    h_ref[:, _LPAD:_LPAD + ow, :] = y1.reshape(nrows, ow, c1p).astype(h_ref.dtype)
    zcol = jnp.zeros((nrows, 1, c1p), h_ref.dtype)
    h_ref[:, _LPAD - 1:_LPAD, :] = zcol                  # left conv2 zero-pad column
    h_ref[:, _LPAD + ow:_LPAD + ow + 1, :] = zcol        # right conv2 zero-pad column
    zrow = jnp.zeros((1, hwidth, c1p), h_ref.dtype)

    @pl.when(t == 0)
    def _():                                             # conv2 top zero-pad row
        h_ref[0:1, :, :] = zrow

    @pl.when(t == pl.num_programs(1) - 1)
    def _():                                             # conv2 bottom zero-pad row
        h_ref[nrows - 1:nrows, :, :] = zrow

    # ---- conv2: 3x3 stride-1 conv, one A @ B.T matmul -> output already (C2, P) ----
    cols2 = jnp.concatenate(
        [h_ref[kh:kh + th, _LPAD - 1 + kw:_LPAD - 1 + kw + ow, :].reshape(p2, c1p)
         for kh in range(3) for kw in range(3)],
        axis=-1)                                                     # (P2, 9*C1_p) bf16
    y2t = lax.dot_general(w2t_ref[...], cols2,
                          dimension_numbers=(((1,), (1,)), ((), ())),
                          preferred_element_type=jnp.float32)        # (C2_p, P2) f32
    y2t = jnp.maximum(y2t + b2t_ref[...], 0.0)
    o_ref[...] = y2t[:c2, :].astype(o_ref.dtype)


def _space_to_depth(x_pad):
    """(N, Hp, Wp, C) -> (N, Hp/2, Wp/2, 4C); channel index = di*2C + dj*C + c."""
    n, hp, wp, c = x_pad.shape
    x = x_pad.reshape(n, hp // 2, 2, wp // 2, 2, c)
    x = x.transpose(0, 1, 3, 2, 4, 5)
    return x.reshape(n, hp // 2, wp // 2, 4 * c)


def _conv1_weight_mat(w1, cin4p, c1p):
    """(3,3,Cin,C1) HWIO -> (4*cin4p, c1p) im2col matrix, rows = (bI, bJ, (di,dj,c)+pad)."""
    _, _, cin, cout = w1.shape
    w_ext = jnp.zeros((4, 4, cin, cout), w1.dtype).at[:3, :3].set(w1)
    w_ext = w_ext.reshape(2, 2, 2, 2, cin, cout)         # (bI, di, bJ, dj, c, co)
    w_ext = w_ext.transpose(0, 2, 1, 3, 4, 5)            # (bI, bJ, di, dj, c, co)
    w_blk = w_ext.reshape(4, 4 * cin, cout)              # one (di,dj,c) block per (bI,bJ)
    w_blk = jnp.pad(w_blk, ((0, 0), (0, cin4p - 4 * cin), (0, c1p - cout)))
    return w_blk.reshape(4 * cin4p, c1p)


def _conv2_weight_mat_t(w2, c1p, c2p):
    """(3,3,C1,C2) HWIO -> (c2p, 9*c1p): transposed im2col matrix, cols = (kh, kw, c)."""
    k, _, c1, c2 = w2.shape
    w = jnp.pad(w2, ((0, 0), (0, 0), (0, c1p - c1), (0, c2p - c2)))
    return w.reshape(k * k * c1p, c2p).T


def _pick_row_tile(oh, ow, max_positions=2048):
    """Largest divisor of OH whose (rows*OW) output block is 128-lane dense and small
    enough to keep per-tile im2col buffers VMEM-friendly; falls back to whole image."""
    cap = max(1, min(oh, max_positions // max(ow, 1)))
    for th in range(cap, 0, -1):
        if oh % th == 0 and (th * ow) % 128 == 0:
            return th
    return oh


def _pick_vmem_limit():
    """Generation-aware scoped-VMEM budget: ~80% of physical VMEM, >= 32 MiB."""
    try:
        cap = int(pltpu.get_tpu_info().vmem_capacity_bytes)
    except Exception:
        cap = 64 << 20
    return max(32 << 20, min(int(cap * 0.8), cap - (12 << 20)))


def init_downsample_params(key, in_channels, kernel_size=3, stride=2, dtype=jnp.float32):
    """Deterministic PyTorch-default-style init (kaiming-uniform-ish bounds)."""
    k1, k2, k3, k4 = jax.random.split(key, 4)
    fan = in_channels * kernel_size * kernel_size
    bound = 1.0 / jnp.sqrt(fan)
    w1 = jax.random.uniform(k1, (kernel_size, kernel_size, in_channels, in_channels),
                            dtype, -bound, bound)
    b1 = jax.random.uniform(k2, (in_channels,), dtype, -bound, bound)
    out2 = stride * in_channels
    w2 = jax.random.uniform(k3, (kernel_size, kernel_size, in_channels, out2),
                            dtype, -bound, bound)
    b2 = jax.random.uniform(k4, (out2,), dtype, -bound, bound)
    return {"w1": w1, "b1": b1, "w2": w2, "b2": b2}


def downsample_forward(x_nchw, params, *, kernel_size=3, stride=2, row_tile=None):
    """Matches DownSample.forward: relu(conv2(relu(conv1(x)))), NCHW in / NCHW out."""
    assert kernel_size == 3 and stride == 2, "kernel specialized to k=3, stride=2"
    n, cin, h, w = x_nchw.shape
    assert h % 2 == 0 and w % 2 == 0, "even spatial dims required (stride-2, pad-1 conv)"
    c1 = params["w1"].shape[-1]
    c2 = params["w2"].shape[-1]
    oh, ow = h // stride, w // stride           # conv1 (s=2) and conv2 (s=1) output spatial

    cin4 = 4 * cin
    cin4p = _round_up(cin4, 128)                # lane-pad every channel dim
    c1p = _round_up(c1, 128)
    c2p = _round_up(c2, 128)

    th = row_tile if row_tile is not None else _pick_row_tile(oh, ow)
    assert oh % th == 0, "row_tile must divide OH"
    assert th == oh or (th * ow) % 128 == 0, "row_tile*OW must be a multiple of 128"
    nt = oh // th
    hwidth = _LPAD + ow + 8

    # ---------------- wrapper-side layout plumbing (XLA) ----------------
    x_nhwc = jnp.transpose(x_nchw, (0, 2, 3, 1)).astype(jnp.bfloat16)
    x_pad = jnp.pad(x_nhwc, ((0, 0), (1, 1), (1, 1), (0, 0)))                # conv1 pad=1
    x_s2d = _space_to_depth(x_pad)                                           # (N, OH+1, OW+1, 4Cin)
    x_s2d = jnp.pad(x_s2d, ((0, 0), (1, 1), (0, 0), (0, cin4p - cin4)))      # halo rows + lane pad
    # Overlapping (TH+3)-row halo slabs so every BlockSpec stays plainly blocked.
    x_halo = jnp.stack([x_s2d[:, t * th:t * th + th + 3] for t in range(nt)], axis=1)

    w1_mat = _conv1_weight_mat(params["w1"], cin4p, c1p).astype(jnp.bfloat16)
    w2t_mat = _conv2_weight_mat_t(params["w2"], c1p, c2p).astype(jnp.bfloat16)
    b1 = jnp.pad(params["b1"].astype(jnp.float32), (0, c1p - c1)).reshape(1, c1p)
    b2t = jnp.pad(params["b2"].astype(jnp.float32), (0, c2p - c2)).reshape(c2p, 1)

    ws = ow + 1
    kernel = functools.partial(_fused_downsample_kernel, th=th, ow=ow, cin4p=cin4p,
                               c1p=c1p, c2=c2, hwidth=hwidth)

    flops = 2 * n * nt * ((th + 2) * ow * (4 * cin4p) * c1p + th * ow * (9 * c1p) * c2p)
    bytes_accessed = int(x_halo.size * 2 + w1_mat.size * 2 + w2t_mat.size * 2
                         + b1.size * 4 + b2t.size * 4
                         + n * c2 * oh * ow * x_nchw.dtype.itemsize)

    out_flat = pl.pallas_call(
        kernel,
        out_shape=jax.ShapeDtypeStruct((n, c2, oh * ow), x_nchw.dtype),
        grid_spec=pltpu.PrefetchScalarGridSpec(
            num_scalar_prefetch=0,
            grid=(n, nt),
            in_specs=[
                pl.BlockSpec((None, None, th + 3, ws, cin4p), lambda i, t: (i, t, 0, 0, 0)),
                # Constant-index weight/bias operands (VMEM-resident across the grid).
                pl.BlockSpec(w1_mat.shape, lambda i, t: (0, 0)),
                pl.BlockSpec(b1.shape, lambda i, t: (0, 0)),
                pl.BlockSpec(w2t_mat.shape, lambda i, t: (0, 0)),
                pl.BlockSpec(b2t.shape, lambda i, t: (0, 0)),
            ],
            out_specs=pl.BlockSpec((None, c2, th * ow), lambda i, t: (i, 0, t)),
            scratch_shapes=[pltpu.VMEM((th + 2, hwidth, c1p), jnp.bfloat16)],
        ),
        compiler_params=pltpu.CompilerParams(
            dimension_semantics=("parallel", "parallel"),
            vmem_limit_bytes=_pick_vmem_limit(),
        ),
        cost_estimate=pl.CostEstimate(flops=flops, transcendentals=0,
                                      bytes_accessed=bytes_accessed),
    )(x_halo, w1_mat, b1, w2t_mat, b2t)

    return out_flat.reshape(n, c2, oh, ow)               # already NCHW; no transpose needed


def _reference_forward(x_nchw, params, *, kernel_size=3, stride=2):
    """Pure-JAX reference (lax conv).  Operands are rounded through bf16 exactly like
    the kernel (f32 accumulation), so the comparison tolerance can stay tight."""
    def rt(a):
        return a.astype(jnp.bfloat16).astype(jnp.float32)
    pad = (kernel_size - 1) // 2
    dn = ("NHWC", "HWIO", "NHWC")
    x = jnp.transpose(x_nchw, (0, 2, 3, 1))
    y = lax.conv_general_dilated(rt(x), rt(params["w1"]), (stride, stride),
                                 [(pad, pad), (pad, pad)], dimension_numbers=dn,
                                 precision=lax.Precision.HIGHEST)
    y = jax.nn.relu(y + params["b1"].astype(jnp.float32))
    y = lax.conv_general_dilated(rt(y), rt(params["w2"]), (1, 1),
                                 [(pad, pad), (pad, pad)], dimension_numbers=dn,
                                 precision=lax.Precision.HIGHEST)
    y = jax.nn.relu(y + params["b2"].astype(jnp.float32))
    return jnp.transpose(y, (0, 3, 1, 2))


if __name__ == "__main__":
    key = jax.random.PRNGKey(0)
    kx, kp = jax.random.split(key)

    # Small demo; 32x32 spatial with row_tile=8 gives 2 row tiles per image so the
    # halo / boundary-row code path is exercised on both TensorCore shards.
    N, C, H, W = 2, 4, 32, 32
    x = jax.random.normal(kx, (N, C, H, W), dtype=jnp.float32)
    params = init_downsample_params(kp, in_channels=C, kernel_size=3, stride=2)

    fwd = jax.jit(functools.partial(downsample_forward, row_tile=8))
    out = jax.block_until_ready(fwd(x, params))

    expected_shape = (N, 2 * C, H // 2, W // 2)
    assert out.shape == expected_shape, (out.shape, expected_shape)

    ref = jax.block_until_ready(_reference_forward(x, params))
    max_err = float(jnp.max(jnp.abs(out - ref)))
    assert jnp.allclose(out, ref, atol=2e-2, rtol=2e-2), (
        f"mismatch vs JAX reference (max|err|={max_err})")

    print("KERNEL_OK")
</pallas_src>

<mosaic_0001>
module attributes {stable_mosaic.version = 11 : i64} {
  func.func @_fused_downsample_kernel(%arg0: i32, %arg1: i32, %arg2: memref<1x1x11x17x128xbf16, #tpu.memory_space<vmem>>, %arg3: memref<512x128xbf16, #tpu.memory_space<vmem>>, %arg4: memref<1x128xf32, #tpu.memory_space<vmem>>, %arg5: memref<128x1152xbf16, #tpu.memory_space<vmem>>, %arg6: memref<128x1xf32, #tpu.memory_space<vmem>>, %arg7: memref<1x8x128xf32, #tpu.memory_space<vmem>>, %arg8: memref<10x40x128xbf16, #tpu.memory_space<vmem>>) attributes {dimension_semantics = [#tpu.dimension_semantics<parallel>, #tpu.dimension_semantics<parallel>], iteration_bounds = array<i64: 2, 2>, scalar_prefetch = 0 : i64, scratch_operands = 1 : i64, tpu.core_type = #tpu.core_type<tc>, window_params = [{transform_indices = @transform_0, window_bounds = array<i64: 1, 1, 11, 17, 128>}, {pipeline_mode = #tpu.pipeline_mode<synchronous>, transform_indices = @transform_1, window_bounds = array<i64: 512, 128>}, {pipeline_mode = #tpu.pipeline_mode<synchronous>, transform_indices = @transform_2, window_bounds = array<i64: 1, 128>}, {pipeline_mode = #tpu.pipeline_mode<synchronous>, transform_indices = @transform_3, window_bounds = array<i64: 128, 1152>}, {pipeline_mode = #tpu.pipeline_mode<synchronous>, transform_indices = @transform_4, window_bounds = array<i64: 128, 1>}, {transform_indices = @transform_5, window_bounds = array<i64: 1, 8, 128>}]} {
    %c0 = arith.constant 0 : index
    %c0_0 = arith.constant 0 : index
    %c0_1 = arith.constant 0 : index
    %c0_2 = arith.constant 0 : index
    %c0_3 = arith.constant 0 : index
    %0 = vector.load %arg2[%c0, %c0_0, %c0_1, %c0_2, %c0_3] : memref<1x1x11x17x128xbf16, #tpu.memory_space<vmem>>, vector<1x1x10x16x128xbf16>
    %1 = vector.shape_cast %0 : vector<1x1x10x16x128xbf16> to vector<10x16x128xbf16>
    %2 = vector.shape_cast %1 : vector<10x16x128xbf16> to vector<160x128xbf16>
    %c0_4 = arith.constant 0 : index
    %c0_5 = arith.constant 0 : index
    %c0_6 = arith.constant 0 : index
    %c1 = arith.constant 1 : index
    %c0_7 = arith.constant 0 : index
    %3 = vector.load %arg2[%c0_4, %c0_5, %c0_6, %c1, %c0_7] : memref<1x1x11x17x128xbf16, #tpu.memory_space<vmem>>, vector<1x1x10x16x128xbf16>
    %4 = vector.shape_cast %3 : vector<1x1x10x16x128xbf16> to vector<10x16x128xbf16>
    %5 = vector.shape_cast %4 : vector<10x16x128xbf16> to vector<160x128xbf16>
    %c0_8 = arith.constant 0 : index
    %c0_9 = arith.constant 0 : index
    %c1_10 = arith.constant 1 : index
    %c0_11 = arith.constant 0 : index
    %c0_12 = arith.constant 0 : index
    %6 = vector.load %arg2[%c0_8, %c0_9, %c1_10, %c0_11, %c0_12] : memref<1x1x11x17x128xbf16, #tpu.memory_space<vmem>>, vector<1x1x10x16x128xbf16>
    %7 = vector.shape_cast %6 : vector<1x1x10x16x128xbf16> to vector<10x16x128xbf16>
    %8 = vector.shape_cast %7 : vector<10x16x128xbf16> to vector<160x128xbf16>
    %c0_13 = arith.constant 0 : index
    %c0_14 = arith.constant 0 : index
    %c1_15 = arith.constant 1 : index
    %c1_16 = arith.constant 1 : index
    %c0_17 = arith.constant 0 : index
    %9 = vector.load %arg2[%c0_13, %c0_14, %c1_15, %c1_16, %c0_17] : memref<1x1x11x17x128xbf16, #tpu.memory_space<vmem>>, vector<1x1x10x16x128xbf16>
    %10 = vector.shape_cast %9 : vector<1x1x10x16x128xbf16> to vector<10x16x128xbf16>
    %11 = vector.shape_cast %10 : vector<10x16x128xbf16> to vector<160x128xbf16>
    %12 = tpu.concatenate %2, %5, %8, %11 in 1 : vector<160x128xbf16>, vector<160x128xbf16>, vector<160x128xbf16>, vector<160x128xbf16> -> vector<160x512xbf16>
    %c0_18 = arith.constant 0 : index
    %c0_19 = arith.constant 0 : index
    %13 = vector.load %arg3[%c0_18, %c0_19] : memref<512x128xbf16, #tpu.memory_space<vmem>>, vector<512x128xbf16>
    %cst = arith.constant dense<0.000000e+00> : vector<160x128xf32>
    %14 = tpu.matmul %12, %13, %cst {dimension_numbers = #tpu.dot_dimension_numbers<[1], [0], [0], [1], [0, 0, 1, 1], [], []>} : vector<160x512xbf16>, vector<512x128xbf16>, vector<160x128xf32> -> vector<160x128xf32>
    %c0_20 = arith.constant 0 : index
    %c0_21 = arith.constant 0 : index
    %15 = vector.load %arg4[%c0_20, %c0_21] : memref<1x128xf32, #tpu.memory_space<vmem>>, vector<1x128xf32>
    %16 = vector.broadcast %15 : vector<1x128xf32> to vector<160x128xf32>
    %17 = arith.addf %14, %16 : vector<160x128xf32>
    %cst_22 = arith.constant 0.000000e+00 : f32
    %18 = vector.broadcast %cst_22 : f32 to vector<160x128xf32>
    %19 = arith.maximumf %17, %18 : vector<160x128xf32>
    %20 = vector.shape_cast %19 : vector<160x128xf32> to vector<10x16x128xf32>
    %21 = arith.truncf %20 : vector<10x16x128xf32> to vector<10x16x128xbf16>
    %c0_23 = arith.constant 0 : index
    %c16 = arith.constant 16 : index
    %c0_24 = arith.constant 0 : index
    %22 = vector.load %arg8[%c0_23, %c16, %c0_24] : memref<10x40x128xbf16, #tpu.memory_space<vmem>>, vector<10x16x128xbf16>
    tpu.vector_store %arg8[%c0_23, %c16, %c0_24], %21 {strides = array<i32>} : memref<10x40x128xbf16, #tpu.memory_space<vmem>>, vector<10x16x128xbf16>,
    %cst_25 = arith.constant 0.000000e+00 : bf16
    %23 = vector.broadcast %cst_25 : bf16 to vector<10x1x128xbf16>
    %c0_26 = arith.constant 0 : index
    %c15 = arith.constant 15 : index
    %c0_27 = arith.constant 0 : index
    %24 = vector.load %arg8[%c0_26, %c15, %c0_27] : memref<10x40x128xbf16, #tpu.memory_space<vmem>>, vector<10x1x128xbf16>
    tpu.vector_store %arg8[%c0_26, %c15, %c0_27], %23 {strides = array<i32>} : memref<10x40x128xbf16, #tpu.memory_space<vmem>>, vector<10x1x128xbf16>,
    %c0_28 = arith.constant 0 : index
    %c32 = arith.constant 32 : index
    %c0_29 = arith.constant 0 : index
    %25 = vector.load %arg8[%c0_28, %c32, %c0_29] : memref<10x40x128xbf16, #tpu.memory_space<vmem>>, vector<10x1x128xbf16>
    tpu.vector_store %arg8[%c0_28, %c32, %c0_29], %23 {strides = array<i32>} : memref<10x40x128xbf16, #tpu.memory_space<vmem>>, vector<10x1x128xbf16>,
    %cst_30 = arith.constant 0.000000e+00 : bf16
    %26 = vector.broadcast %cst_30 : bf16 to vector<1x40x128xbf16>
    %c0_i32 = arith.constant 0 : i32
    %27 = arith.cmpi eq, %arg1, %c0_i32 : i32
    %28 = arith.extui %27 : i1 to i32
    %c0_i32_31 = arith.constant 0 : i32
    %29 = arith.cmpi ne, %28, %c0_i32_31 : i32
    scf.if %29 {
      %c0_67 = arith.constant 0 : index
      %c0_68 = arith.constant 0 : index
      %c0_69 = arith.constant 0 : index
      %63 = vector.load %arg8[%c0_67, %c0_68, %c0_69] : memref<10x40x128xbf16, #tpu.memory_space<vmem>>, vector<1x40x128xbf16>
      tpu.vector_store %arg8[%c0_67, %c0_68, %c0_69], %26 {strides = array<i32>} : memref<10x40x128xbf16, #tpu.memory_space<vmem>>, vector<1x40x128xbf16>,
    } else {
    }
    %c1_i32 = arith.constant 1 : i32
    %30 = arith.cmpi eq, %arg1, %c1_i32 : i32
    %31 = arith.extui %30 : i1 to i32
    %c0_i32_32 = arith.constant 0 : i32
    %32 = arith.cmpi ne, %31, %c0_i32_32 : i32
    scf.if %32 {
      %c9 = arith.constant 9 : index
      %c0_67 = arith.constant 0 : index
      %c0_68 = arith.constant 0 : index
      %63 = vector.load %arg8[%c9, %c0_67, %c0_68] : memref<10x40x128xbf16, #tpu.memory_space<vmem>>, vector<1x40x128xbf16>
      tpu.vector_store %arg8[%c9, %c0_67, %c0_68], %26 {strides = array<i32>} : memref<10x40x128xbf16, #tpu.memory_space<vmem>>, vector<1x40x128xbf16>,
    } else {
    }
    %c0_33 = arith.constant 0 : index
    %c15_34 = arith.constant 15 : index
    %c0_35 = arith.constant 0 : index
    %33 = vector.load %arg8[%c0_33, %c15_34, %c0_35] : memref<10x40x128xbf16, #tpu.memory_space<vmem>>, vector<8x16x128xbf16>
    %34 = vector.shape_cast %33 : vector<8x16x128xbf16> to vector<128x128xbf16>
    %c0_36 = arith.constant 0 : index
    %c16_37 = arith.constant 16 : index
    %c0_38 = arith.constant 0 : index
    %35 = vector.load %arg8[%c0_36, %c16_37, %c0_38] : memref<10x40x128xbf16, #tpu.memory_space<vmem>>, vector<8x16x128xbf16>
    %36 = vector.shape_cast %35 : vector<8x16x128xbf16> to vector<128x128xbf16>
    %c0_39 = arith.constant 0 : index
    %c17 = arith.constant 17 : index
    %c0_40 = arith.constant 0 : index
    %37 = vector.load %arg8[%c0_39, %c17, %c0_40] : memref<10x40x128xbf16, #tpu.memory_space<vmem>>, vector<8x16x128xbf16>
    %38 = vector.shape_cast %37 : vector<8x16x128xbf16> to vector<128x128xbf16>
    %c1_41 = arith.constant 1 : index
    %c15_42 = arith.constant 15 : index
    %c0_43 = arith.constant 0 : index
    %39 = vector.load %arg8[%c1_41, %c15_42, %c0_43] : memref<10x40x128xbf16, #tpu.memory_space<vmem>>, vector<8x16x128xbf16>
    %40 = vector.shape_cast %39 : vector<8x16x128xbf16> to vector<128x128xbf16>
    %c1_44 = arith.constant 1 : index
    %c16_45 = arith.constant 16 : index
    %c0_46 = arith.constant 0 : index
    %41 = vector.load %arg8[%c1_44, %c16_45, %c0_46] : memref<10x40x128xbf16, #tpu.memory_space<vmem>>, vector<8x16x128xbf16>
    %42 = vector.shape_cast %41 : vector<8x16x128xbf16> to vector<128x128xbf16>
    %c1_47 = arith.constant 1 : index
    %c17_48 = arith.constant 17 : index
    %c0_49 = arith.constant 0 : index
    %43 = vector.load %arg8[%c1_47, %c17_48, %c0_49] : memref<10x40x128xbf16, #tpu.memory_space<vmem>>, vector<8x16x128xbf16>
    %44 = vector.shape_cast %43 : vector<8x16x128xbf16> to vector<128x128xbf16>
    %c2 = arith.constant 2 : index
    %c15_50 = arith.constant 15 : index
    %c0_51 = arith.constant 0 : index
    %45 = vector.load %arg8[%c2, %c15_50, %c0_51] : memref<10x40x128xbf16, #tpu.memory_space<vmem>>, vector<8x16x128xbf16>
    %46 = vector.shape_cast %45 : vector<8x16x128xbf16> to vector<128x128xbf16>
    %c2_52 = arith.constant 2 : index
    %c16_53 = arith.constant 16 : index
    %c0_54 = arith.constant 0 : index
    %47 = vector.load %arg8[%c2_52, %c16_53, %c0_54] : memref<10x40x128xbf16, #tpu.memory_space<vmem>>, vector<8x16x128xbf16>
    %48 = vector.shape_cast %47 : vector<8x16x128xbf16> to vector<128x128xbf16>
    %c2_55 = arith.constant 2 : index
    %c17_56 = arith.constant 17 : index
    %c0_57 = arith.constant 0 : index
    %49 = vector.load %arg8[%c2_55, %c17_56, %c0_57] : memref<10x40x128xbf16, #tpu.memory_space<vmem>>, vector<8x16x128xbf16>
    %50 = vector.shape_cast %49 : vector<8x16x128xbf16> to vector<128x128xbf16>
    %51 = tpu.concatenate %34, %36, %38, %40, %42, %44, %46, %48, %50 in 1 : vector<128x128xbf16>, vector<128x128xbf16>, vector<128x128xbf16>, vector<128x128xbf16>, vector<128x128xbf16>, vector<128x128xbf16>, vector<128x128xbf16>, vector<128x128xbf16>, vector<128x128xbf16> -> vector<128x1152xbf16>
    %c0_58 = arith.constant 0 : index
    %c0_59 = arith.constant 0 : index
    %52 = vector.load %arg5[%c0_58, %c0_59] : memref<128x1152xbf16, #tpu.memory_space<vmem>>, vector<128x1152xbf16>
    %cst_60 = arith.constant dense<0.000000e+00> : vector<128x128xf32>
    %53 = tpu.matmul %52, %51, %cst_60 {dimension_numbers = #tpu.dot_dimension_numbers<[1], [1], [0], [0], [0, 0, 1, 0], [], []>} : vector<128x1152xbf16>, vector<128x1152xbf16>, vector<128x128xf32> -> vector<128x128xf32>
    %c0_61 = arith.constant 0 : index
    %c0_62 = arith.constant 0 : index
    %54 = vector.load %arg6[%c0_61, %c0_62] : memref<128x1xf32, #tpu.memory_space<vmem>>, vector<128x1xf32>
    %55 = vector.broadcast %54 : vector<128x1xf32> to vector<128x128xf32>
    %56 = arith.addf %53, %55 : vector<128x128xf32>
    %cst_63 = arith.constant 0.000000e+00 : f32
    %57 = vector.broadcast %cst_63 : f32 to vector<128x128xf32>
    %58 = arith.maximumf %56, %57 : vector<128x128xf32>
    %59 = vector.extract_strided_slice %58 {offsets = [0, 0], sizes = [8, 128], strides = [1, 1]} : vector<128x128xf32> to vector<8x128xf32>
    %c0_64 = arith.constant 0 : index
    %c0_65 = arith.constant 0 : index
    %c0_66 = arith.constant 0 : index
    %60 = vector.load %arg7[%c0_64, %c0_65, %c0_66] : memref<1x8x128xf32, #tpu.memory_space<vmem>>, vector<1x8x128xf32>
    %61 = vector.shape_cast %60 : vector<1x8x128xf32> to vector<8x128xf32>
    %62 = vector.shape_cast %59 : vector<8x128xf32> to vector<1x8x128xf32>
    tpu.vector_store %arg7[%c0_64, %c0_65, %c0_66], %62 {strides = array<i32>} : memref<1x8x128xf32, #tpu.memory_space<vmem>>, vector<1x8x128xf32>,
    return
  }
  func.func @transform_0(%arg0: i32, %arg1: i32) -> (i32, i32, i32, i32, i32) {
    %c0_i32 = arith.constant 0 : i32
    %c0_i32_0 = arith.constant 0 : i32
    %c0_i32_1 = arith.constant 0 : i32
    %c0_i32_2 = arith.constant 0 : i32
    return %arg0, %arg1, %c0_i32, %c0_i32_0, %c0_i32_1 : i32, i32, i32, i32, i32
  }
  func.func @transform_1(%arg0: i32, %arg1: i32) -> (i32, i32) {
    %c0_i32 = arith.constant 0 : i32
    %c0_i32_0 = arith.constant 0 : i32
    %c0_i32_1 = arith.constant 0 : i32
    return %c0_i32, %c0_i32_0 : i32, i32
  }
  func.func @transform_2(%arg0: i32, %arg1: i32) -> (i32, i32) {
    %c0_i32 = arith.constant 0 : i32
    %c0_i32_0 = arith.constant 0 : i32
    %c0_i32_1 = arith.constant 0 : i32
    return %c0_i32, %c0_i32_0 : i32, i32
  }
  func.func @transform_3(%arg0: i32, %arg1: i32) -> (i32, i32) {
    %c0_i32 = arith.constant 0 : i32
    %c0_i32_0 = arith.constant 0 : i32
    %c0_i32_1 = arith.constant 0 : i32
    return %c0_i32, %c0_i32_0 : i32, i32
  }
  func.func @transform_4(%arg0: i32, %arg1: i32) -> (i32, i32) {
    %c0_i32 = arith.constant 0 : i32
    %c0_i32_0 = arith.constant 0 : i32
    %c0_i32_1 = arith.constant 0 : i32
    return %c0_i32, %c0_i32_0 : i32, i32
  }
  func.func @transform_5(%arg0: i32, %arg1: i32) -> (i32, i32, i32) {
    %c0_i32 = arith.constant 0 : i32
    %c0_i32_0 = arith.constant 0 : i32
    return %arg0, %c0_i32, %arg1 : i32, i32, i32
  }
}

</mosaic_0001>

<llo_original>
// kernel: downsample_forward.1
$region0: #{downsample_forward.1}
  #allocation0 [shape = 'u32[]', space=smem, size = 0x4, offset = 0x4, fixed_abs, tag = 'smem constant byte address 0x4 - core index']
  #allocation1 [shape = 'u32[72,128]{1,0:T(1,128)}', space=vmem, size = 0x9000, scoped, tag = 'internal scratch']
  #allocation2 [shape = 'bf16[10,40,128]{2,1,0:T(8,128)(2,1)}', space=vmem, size = 0x19000, scoped, tag = 'scratch operand']
  %s0 = inlined_call_operand.vmem [shape: bf16[2,2,11,17,128], index: 0, kind: input, shape index: {}]
  %s1 = inlined_call_operand.vmem [shape: bf16[512,128], index: 1, kind: input, shape index: {}]
  %s2 = inlined_call_operand.vmem [shape: f32[1,128], index: 2, kind: input, shape index: {}]
  %s3 = inlined_call_operand.vmem [shape: bf16[128,1152], index: 3, kind: input, shape index: {}]
  %s4 = inlined_call_operand.vmem [shape: f32[128,1], index: 4, kind: input, shape index: {}]
  %s5 = inlined_call_operand.vmem [shape: f32[2,8,256], index: 5, kind: output, shape index: {}]
  %s6 = sld [smem:[#allocation0]]
  $region61: #{downsample_forward.1} parent=0
    _
  %s8 = ssub.s32 1, %s6
  %s9 = scalar_select 0, %s8, %s6
  loop: start=0, step=1, limit=6
  $region2: #{downsample_forward.1} parent=0 // loop_pre_header
    _
  $region3: #{downsample_forward.1} parent=0 // loop_header
    %s11 = sphi 0, %s15
    %p12 = scmp.ge.s32.totalorder %s11, 6
    %s18 = sphi 0, %s30
    %s19 = sphi 0, %s26
    %s20 = sphi 0, %s18
    %s21 = sphi 0, %s19
    %s22 = sphi 0, %s20
    %s23 = sphi 0, %s21
    %s35 = sphi 0, %s37
    %s38 = sphi 0, %s35
    %s39 = sphi 0, %s38
    %s55 = sphi 0, %s39
    %s59 = sphi 0, %s59
    %s61 = sphi 0, %s59
    %s62 = sphi 0, %s61
    %s76 = sphi 0, %s62
    %s80 = sphi 0, %s80
    %s82 = sphi 0, %s80
    %s83 = sphi 0, %s82
    %s97 = sphi 0, %s83
    %s101 = sphi 0, %s101
    %s103 = sphi 0, %s101
    %s104 = sphi 0, %s103
    %s118 = sphi 0, %s104
    %s122 = sphi 0, %s122
    %s124 = sphi 0, %s122
    %s125 = sphi 0, %s124
    %s139 = sphi 0, %s125
    %s147 = sphi 0, %s149
    %s150 = sphi 0, %s147
    %s151 = sphi 0, %s150
    %s167 = sphi 0, %s151
  $region4: #{downsample_forward.1} parent=0 // loop_header_branch
    %14 = sbr.rel (%p12) target = $region8
  $region5: #{downsample_forward.1} parent=0 // loop_body
    %s16 = ssub.s32 %s11, 1
    %s17 = ssub.s32 %s11, 2
    %s24 = sadd.s32 1, %s19
    %p25 = scmp.ge.s32.totalorder %s24, 2
    %s26 = scalar_select %p25, 0, %s24
    %s27 = sadd.s32 1, %s18
    %s28 = scalar_select %p25, %s27, %s18
    %p29 = scmp.ge.s32.totalorder %s28, 2
    %s30 = scalar_select %p29, 0, %s28
    %s31 = ssub.s32 %s18, %s30
    %s32 = ssub.s32 %s19, %s26
    %s33 = sor.u32 %s31, %s32
    %p34 = scmp.eq.s32.totalorder %s33, 0
    %s36 = sadd.s32 %s35, 1
    %s37 = scalar_select %p34, %s35, %s36
    %p40 = pneg %p34
    %p41 = scmp.eq.s32.totalorder %s11, 3
    %p42 = por %p40, %p41
    %p43 = scmp.ne.s32.totalorder %s35, %s38
    %p44 = scmp.eq.s32.totalorder %s11, 0
    %p45 = por %p43, %p44
    %p46 = scmp.ne.s32.totalorder %s35, %s38
    %p47 = scmp.eq.s32.totalorder %s16, 3
    %p48 = por %p46, %p47
    %p49 = scmp.ne.s32.totalorder %s38, %s39
    %p50 = scmp.eq.s32.totalorder %s16, 0
    %p51 = por %p49, %p50
    %p52 = scmp.ne.s32.totalorder %s38, %s39
    %p53 = scmp.eq.s32.totalorder %s17, 3
    %p54 = por %p52, %p53
    %p56 = scmp.ne.s32.totalorder %s39, %s55
    %p57 = scmp.eq.s32.totalorder %s17, 0
    %p58 = por %p56, %p57
    %s60 = sadd.s32 %s59, 1
    %p63 = scmp.eq.s32.totalorder %s11, 3
    %p64 = scmp.ne.s32.totalorder %s59, %s61
    %p65 = scmp.eq.s32.totalorder %s11, 0
    %p66 = por %p64, %p65
    %p67 = scmp.ne.s32.totalorder %s59, %s61
    %p68 = scmp.eq.s32.totalorder %s16, 3
    %p69 = por %p67, %p68
    %p70 = scmp.ne.s32.totalorder %s61, %s62
    %p71 = scmp.eq.s32.totalorder %s16, 0
    %p72 = por %p70, %p71
    %p73 = scmp.ne.s32.totalorder %s61, %s62
    %p74 = scmp.eq.s32.totalorder %s17, 3
    %p75 = por %p73, %p74
    %p77 = scmp.ne.s32.totalorder %s62, %s76
    %p78 = scmp.eq.s32.totalorder %s17, 0
    %p79 = por %p77, %p78
    %s81 = sadd.s32 %s80, 1
    %p84 = scmp.eq.s32.totalorder %s11, 3
    %p85 = scmp.ne.s32.totalorder %s80, %s82
    %p86 = scmp.eq.s32.totalorder %s11, 0
    %p87 = por %p85, %p86
    %p88 = scmp.ne.s32.totalorder %s80, %s82
    %p89 = scmp.eq.s32.totalorder %s16, 3
    %p90 = por %p88, %p89
    %p91 = scmp.ne.s32.totalorder %s82, %s83
    %p92 = scmp.eq.s32.totalorder %s16, 0
    %p93 = por %p91, %p92
    %p94 = scmp.ne.s32.totalorder %s82, %s83
    %p95 = scmp.eq.s32.totalorder %s17, 3
    %p96 = por %p94, %p95
    %p98 = scmp.ne.s32.totalorder %s83, %s97
    %p99 = scmp.eq.s32.totalorder %s17, 0
    %p100 = por %p98, %p99
    %s102 = sadd.s32 %s101, 1
    %p105 = scmp.eq.s32.totalorder %s11, 3
    %p106 = scmp.ne.s32.totalorder %s101, %s103
    %p107 = scmp.eq.s32.totalorder %s11, 0
    %p108 = por %p106, %p107
    %p109 = scmp.ne.s32.totalorder %s101, %s103
    %p110 = scmp.eq.s32.totalorder %s16, 3
    %p111 = por %p109, %p110
    %p112 = scmp.ne.s32.totalorder %s103, %s104
    %p113 = scmp.eq.s32.totalorder %s16, 0
    %p114 = por %p112, %p113
    %p115 = scmp.ne.s32.totalorder %s103, %s104
    %p116 = scmp.eq.s32.totalorder %s17, 3
    %p117 = por %p115, %p116
    %p119 = scmp.ne.s32.totalorder %s104, %s118
    %p120 = scmp.eq.s32.totalorder %s17, 0
    %p121 = por %p119, %p120
    %s123 = sadd.s32 %s122, 1
    %p126 = scmp.eq.s32.totalorder %s11, 3
    %p127 = scmp.ne.s32.totalorder %s122, %s124
    %p128 = scmp.eq.s32.totalorder %s11, 0
    %p129 = por %p127, %p128
    %p130 = scmp.ne.s32.totalorder %s122, %s124
    %p131 = scmp.eq.s32.totalorder %s16, 3
    %p132 = por %p130, %p131
    %p133 = scmp.ne.s32.totalorder %s124, %s125
    %p134 = scmp.eq.s32.totalorder %s16, 0
    %p135 = por %p133, %p134
    %p136 = scmp.ne.s32.totalorder %s124, %s125
    %p137 = scmp.eq.s32.totalorder %s17, 3
    %p138 = por %p136, %p137
    %p140 = scmp.ne.s32.totalorder %s125, %s139
    %p141 = scmp.eq.s32.totalorder %s17, 0
    %p142 = por %p140, %p141
    %s143 = ssub.s32 %s18, %s30
    %s144 = ssub.s32 %s19, %s26
    %s145 = sor.u32 %s143, %s144
    %p146 = scmp.eq.s32.totalorder %s145, 0
    %s148 = sadd.s32 %s147, 1
    %s149 = scalar_select %p146, %s147, %s148
    %p152 = pneg %p146
    %p153 = scmp.eq.s32.totalorder %s11, 3
    %p154 = por %p152, %p153
    %p155 = scmp.ne.s32.totalorder %s147, %s150
    %p156 = scmp.eq.s32.totalorder %s11, 0
    %p157 = por %p155, %p156
    %p158 = scmp.ne.s32.totalorder %s147, %s150
    %p159 = scmp.eq.s32.totalorder %s16, 3
    %p160 = por %p158, %p159
    %p161 = scmp.ne.s32.totalorder %s150, %s151
    %p162 = scmp.eq.s32.totalorder %s16, 0
    %p163 = por %p161, %p162
    %p164 = scmp.ne.s32.totalorder %s150, %s151
    %p165 = scmp.eq.s32.totalorder %s17, 3
    %p166 = por %p164, %p165
    %p168 = scmp.ne.s32.totalorder %s151, %s167
    %p169 = scmp.eq.s32.totalorder %s17, 0
    %p170 = por %p168, %p169
    %p171 = scmp.le.s32.totalorder 1, %s11
    %p172 = scmp.lt.s32.totalorder %s11, 5
    %p173 = pnand %p171, %p172
    %p174 = pneg %p173
    // Predicated region
    $region9: #{downsample_forward.1} parent=5 // pred_check
      _
    $region10: #{downsample_forward.1} parent=5 // pred_check_branch
      %176 = sbr.rel (%p173) target = $region12
    $region11: #{downsample_forward.1} parent=5 // pred_region
      %s177 = ssub.s32 %s11, 1
      // Predicated region
      $region13: #{downsample_forward.1} parent=11 // pred_check
        %p178 = pneg %p72
      $region14: #{downsample_forward.1} parent=11 // pred_check_branch
        %180 = sbr.rel (%p178) target = $region16
      $region15: #{downsample_forward.1} parent=11 // pred_region
        _
      $region16: #{downsample_forward.1} parent=11 // pred_fallthru
        _
      // Predicated region
      $region17: #{downsample_forward.1} parent=11 // pred_check
        %p181 = pneg %p93
      $region18: #{downsample_forward.1} parent=11 // pred_check_branch
        %183 = sbr.rel (%p181) target = $region20
      $region19: #{downsample_forward.1} parent=11 // pred_region
        _
      $region20: #{downsample_forward.1} parent=11 // pred_fallthru
        _
      // Predicated region
      $region21: #{downsample_forward.1} parent=11 // pred_check
        %p184 = pneg %p114
      $region22: #{downsample_forward.1} parent=11 // pred_check_branch
        %186 = sbr.rel (%p184) target = $region24
      $region23: #{downsample_forward.1} parent=11 // pred_region
        _
      $region24: #{downsample_forward.1} parent=11 // pred_fallthru
        _
      // Predicated region
      $region25: #{downsample_forward.1} parent=11 // pred_check
        %p187 = pneg %p135
      $region26: #{downsample_forward.1} parent=11 // pred_check_branch
        %189 = sbr.rel (%p187) target = $region28
      $region27: #{downsample_forward.1} parent=11 // pred_region
        _
      $region28: #{downsample_forward.1} parent=11 // pred_fallthru
        _
    $region12: #{downsample_forward.1} parent=5 // pred_fallthru
      _
    %p190 = scmp.lt.s32.totalorder %s11, 4
    // Predicated region
    $region29: #{downsample_forward.1} parent=5 // pred_check
      %p191 = pneg %p190
    $region30: #{downsample_forward.1} parent=5 // pred_check_branch
      %193 = sbr.rel (%p191) target = $region32
    $region31: #{downsample_forward.1} parent=5 // pred_region
      // Predicated region
      $region33: #{downsample_forward.1} parent=31 // pred_check
        %p194 = pneg %p45
      $region34: #{downsample_forward.1} parent=31 // pred_check_branch
        %196 = sbr.rel (%p194) target = $region36
      $region35: #{downsample_forward.1} parent=31 // pred_region
        %p197 = scmp.lt.s32.totalorder %s18, 1
        %s198 = scalar_select %p197, %s18, 1
        %p199 = scmp.lt.s32.totalorder %s19, 1
        %s200 = scalar_select %p199, %s19, 1
        %s201 = smul.addr %s200, 33
        %s202 = smul.addr %s198, 66
        %s203 = sadd.s32 %s201, %s202
        %s204 = smul.addr %s203, 4
        %s205 = scalar_lea.vmem %s0, %s204
      $region36: #{downsample_forward.1} parent=31 // pred_fallthru
        _
    $region32: #{downsample_forward.1} parent=5 // pred_fallthru
      _
    %p206 = scmp.le.s32.totalorder 1, %s11
    %p207 = scmp.lt.s32.totalorder %s11, 5
    %p208 = pnand %p206, %p207
    %p209 = pneg %p208
    // Predicated region
    $region37: #{downsample_forward.1} parent=5 // pred_check
      _
    $region38: #{downsample_forward.1} parent=5 // pred_check_branch
      %211 = sbr.rel (%p208) target = $region40
    $region39: #{downsample_forward.1} parent=5 // pred_region
      %s212 = ssub.s32 %s11, 1
      %p213 = scmp.lt.s32.totalorder %s20, 1
      %s214 = scalar_select %p213, %s20, 1
      %p215 = scmp.lt.s32.totalorder %s21, 1
      %s216 = scalar_select %p215, %s21, 1
      %s217 = smul.addr %s216, 33
      %s218 = smul.addr %s214, 66
      %s219 = sadd.s32 %s217, %s218
      %s220 = smul.addr %s219, 4
      %s221 = scalar_lea.vmem %s0, %s220
      %p222 = pneg %p51
      %p223 = pneg %p48
      %p224 = pneg %p72
      %p225 = pneg %p69
      %p226 = pneg %p93
      %p227 = pneg %p90
      %p228 = pneg %p114
      %p229 = pneg %p111
      %p230 = pneg %p135
      %p231 = pneg %p132
      %p232 = pneg %p163
      %p233 = pneg %p160
      %p234 = scmp.lt.s32.totalorder %s20, 1
      %s235 = scalar_select %p234, %s20, 1
      %p236 = scmp.lt.s32.totalorder %s21, 1
      %s237 = scalar_select %p236, %s21, 1
      %s238 = smul.addr %s235, 2
      %s239 = sadd.s32 %s237, %s238
      %s240 = smul.addr %s239, 8
      %s241 = scalar_lea.vmem %s5, %s240
      %p242 = scmp.lt.s32.totalorder %s20, 1
      %s243 = scalar_select %p242, %s20, 1
      %p244 = scmp.lt.s32.totalorder %s21, 1
      %s245 = scalar_select %p244, %s21, 1
      %s246 = smul.addr %s245, 33
      %s247 = smul.addr %s243, 66
      %s248 = sadd.s32 %s246, %s247
      %s249 = smul.addr %s248, 4
      %s250 = scalar_lea.vmem %s0, %s249
      %p251 = scmp.lt.s32.totalorder %s20, 1
      %s252 = scalar_select %p251, %s20, 1
      %p253 = scmp.lt.s32.totalorder %s21, 1
      %s254 = scalar_select %p253, %s21, 1
      %s255 = smul.addr %s252, 2
      %s256 = sadd.s32 %s254, %s255
      %s257 = smul.addr %s256, 8
      %s258 = scalar_lea.vmem %s5, %s257
      %v260 = vld [vmem:[%s250] sm:$0xf]
      %v261 = vld [vmem:[%s250 + $0x4] sm:$0xf]
      %v262 = vld [vmem:[%s250 + $0xc] sm:$0xf]
      %v263 = vld [vmem:[%s250 + $0x10] sm:$0xf]
      %v264 = vld [vmem:[%s250 + $0x18] sm:$0xf]
      %v265 = vld [vmem:[%s250 + $0x1c] sm:$0xf]
      %v266 = vld [vmem:[%s250 + $0x24] sm:$0xf]
      %v267 = vld [vmem:[%s250 + $0x28] sm:$0xf]
      %v268 = vld [vmem:[%s250 + $0x30] sm:$0xf]
      %v269 = vld [vmem:[%s250 + $0x34] sm:$0xf]
      %v270 = vld [vmem:[%s250 + $0x3c] sm:$0xf]
      %v271 = vld [vmem:[%s250 + $0x40] sm:$0xf]
      %v272 = vld [vmem:[%s250 + $0x48] sm:$0xf]
      %v273 = vld [vmem:[%s250 + $0x4c] sm:$0xf]
      %v274 = vld [vmem:[%s250 + $0x54] sm:$0xf]
      %v275 = vld [vmem:[%s250 + $0x58] sm:$0xf]
      %v276 = vld [vmem:[%s250 + $0x60] sm:$0xf]
      %v277 = vld [vmem:[%s250 + $0x64] sm:$0xf]
      %v278 = vld [vmem:[%s250 + $0x6c] sm:$0xf]
      %v279 = vld [vmem:[%s250 + $0x70] sm:$0xf]
      %v280 = vld [vmem:[%s250 + $0x8] sm:$0x1]
      %v281 = vld [vmem:[%s250 + $0x14] sm:$0x1]
      %v282 = vld [vmem:[%s250 + $0x20] sm:$0x1]
      %v283 = vld [vmem:[%s250 + $0x2c] sm:$0x1]
      %v284 = vld [vmem:[%s250 + $0x38] sm:$0x1]
      %v285 = vld [vmem:[%s250 + $0x44] sm:$0x1]
      %v286 = vld [vmem:[%s250 + $0x50] sm:$0x1]
      %v287 = vld [vmem:[%s250 + $0x5c] sm:$0x1]
      %v288 = vld [vmem:[%s250 + $0x68] sm:$0x1]
      %v289 = vld [vmem:[%s250 + $0x74] sm:$0x1]
      %vm290 = vsmask.f32 3328
      %vm291 = vsmask.f32 7440
      %vm292 = vmor %vm290, %vm291
      %v294 = vshrl.u32 %v260, 16
      %v296 = vrot.slane %v294, 4
      %v297 = vshll.u32 %v260, 16
      %v299 = vrot.slane %v297, 5
      %v300 = vor.u32 %v296, %v299
      %v301 = vrot.slane %v300, 4
      %v303 = vshll.u32 %v261, 16
      %v305 = vrot.slane %v303, 5
      %v306 = vsel %vm292, %v301, %v305
      %v307 = vshrl.u32 %v261, 16
      %v309 = vrot.slane %v307, 4
      %v310 = vor.u32 %v309, %v305
      %v311 = vrot.slane %v310, 4
      %v313 = vshll.u32 %v280, 16
      %v315 = vrot.slane %v313, 5
      %v316 = vsel %vm292, %v311, %v315
      %v318 = vshrl.u32 %v262, 16
      %v320 = vrot.slane %v318, 4
      %v321 = vshll.u32 %v262, 16
      %v323 = vrot.slane %v321, 5
      %v324 = vor.u32 %v320, %v323
      %v325 = vrot.slane %v324, 4
      %v327 = vshll.u32 %v263, 16
      %v329 = vrot.slane %v327, 5
      %v330 = vsel %vm292, %v325, %v329
      %v331 = vshrl.u32 %v263, 16
      %v333 = vrot.slane %v331, 4
      %v334 = vor.u32 %v333, %v329
      %v335 = vrot.slane %v334, 4
      %v337 = vshll.u32 %v281, 16
      %v339 = vrot.slane %v337, 5
      %v340 = vsel %vm292, %v335, %v339
      %v342 = vshrl.u32 %v264, 16
      %v344 = vrot.slane %v342, 4
      %v345 = vshll.u32 %v264, 16
      %v347 = vrot.slane %v345, 5
      %v348 = vor.u32 %v344, %v347
      %v349 = vrot.slane %v348, 4
      %v351 = vshll.u32 %v265, 16
      %v353 = vrot.slane %v351, 5
      %v354 = vsel %vm292, %v349, %v353
      %v355 = vshrl.u32 %v265, 16
      %v357 = vrot.slane %v355, 4
      %v358 = vor.u32 %v357, %v353
      %v359 = vrot.slane %v358, 4
      %v361 = vshll.u32 %v282, 16
      %v363 = vrot.slane %v361, 5
      %v364 = vsel %vm292, %v359, %v363
      %v366 = vshrl.u32 %v266, 16
      %v368 = vrot.slane %v366, 4
      %v369 = vshll.u32 %v266, 16
      %v371 = vrot.slane %v369, 5
      %v372 = vor.u32 %v368, %v371
      %v373 = vrot.slane %v372, 4
      %v375 = vshll.u32 %v267, 16
      %v377 = vrot.slane %v375, 5
      %v378 = vsel %vm292, %v373, %v377
      %v379 = vshrl.u32 %v267, 16
      %v381 = vrot.slane %v379, 4
      %v382 = vor.u32 %v381, %v377
      %v383 = vrot.slane %v382, 4
      %v385 = vshll.u32 %v283, 16
      %v387 = vrot.slane %v385, 5
      %v388 = vsel %vm292, %v383, %v387
      %v390 = vshrl.u32 %v268, 16
      %v392 = vrot.slane %v390, 4
      %v393 = vshll.u32 %v268, 16
      %v395 = vrot.slane %v393, 5
      %v396 = vor.u32 %v392, %v395
      %v397 = vrot.slane %v396, 4
      %v399 = vshll.u32 %v269, 16
      %v401 = vrot.slane %v399, 5
      %v402 = vsel %vm292, %v397, %v401
      %v403 = vshrl.u32 %v269, 16
      %v405 = vrot.slane %v403, 4
      %v406 = vor.u32 %v405, %v401
      %v407 = vrot.slane %v406, 4
      %v409 = vshll.u32 %v284, 16
      %v411 = vrot.slane %v409, 5
      %v412 = vsel %vm292, %v407, %v411
      %v414 = vshrl.u32 %v270, 16
      %v416 = vrot.slane %v414, 4
      %v417 = vshll.u32 %v270, 16
      %v419 = vrot.slane %v417, 5
      %v420 = vor.u32 %v416, %v419
      %v421 = vrot.slane %v420, 4
      %v423 = vshll.u32 %v271, 16
      %v425 = vrot.slane %v423, 5
      %v426 = vsel %vm292, %v421, %v425
      %v427 = vshrl.u32 %v271, 16
      %v429 = vrot.slane %v427, 4
      %v430 = vor.u32 %v429, %v425
      %v431 = vrot.slane %v430, 4
      %v433 = vshll.u32 %v285, 16
      %v435 = vrot.slane %v433, 5
      %v436 = vsel %vm292, %v431, %v435
      %v438 = vshrl.u32 %v272, 16
      %v440 = vrot.slane %v438, 4
      %v441 = vshll.u32 %v272, 16
      %v443 = vrot.slane %v441, 5
      %v444 = vor.u32 %v440, %v443
      %v445 = vrot.slane %v444, 4
      %v447 = vshll.u32 %v273, 16
      %v449 = vrot.slane %v447, 5
      %v450 = vsel %vm292, %v445, %v449
      %v451 = vshrl.u32 %v273, 16
      %v453 = vrot.slane %v451, 4
      %v454 = vor.u32 %v453, %v449
      %v455 = vrot.slane %v454, 4
      %v457 = vshll.u32 %v286, 16
      %v459 = vrot.slane %v457, 5
      %v460 = vsel %vm292, %v455, %v459
      %v462 = vshrl.u32 %v274, 16
      %v464 = vrot.slane %v462, 4
      %v465 = vshll.u32 %v274, 16
      %v467 = vrot.slane %v465, 5
      %v468 = vor.u32 %v464, %v467
      %v469 = vrot.slane %v468, 4
      %v471 = vshll.u32 %v275, 16
      %v473 = vrot.slane %v471, 5
      %v474 = vsel %vm292, %v469, %v473
      %v475 = vshrl.u32 %v275, 16
      %v477 = vrot.slane %v475, 4
      %v478 = vor.u32 %v477, %v473
      %v479 = vrot.slane %v478, 4
      %v481 = vshll.u32 %v287, 16
      %v483 = vrot.slane %v481, 5
      %v484 = vsel %vm292, %v479, %v483
      %v486 = vshrl.u32 %v276, 16
      %v488 = vrot.slane %v486, 4
      %v489 = vshll.u32 %v276, 16
      %v491 = vrot.slane %v489, 5
      %v492 = vor.u32 %v488, %v491
      %v493 = vrot.slane %v492, 4
      %v495 = vshll.u32 %v277, 16
      %v497 = vrot.slane %v495, 5
      %v498 = vsel %vm292, %v493, %v497
      %v499 = vshrl.u32 %v277, 16
      %v501 = vrot.slane %v499, 4
      %v502 = vor.u32 %v501, %v497
      %v503 = vrot.slane %v502, 4
      %v505 = vshll.u32 %v288, 16
      %v507 = vrot.slane %v505, 5
      %v508 = vsel %vm292, %v503, %v507
      %v510 = vshrl.u32 %v278, 16
      %v512 = vrot.slane %v510, 4
      %v513 = vshll.u32 %v278, 16
      %v515 = vrot.slane %v513, 5
      %v516 = vor.u32 %v512, %v515
      %v517 = vrot.slane %v516, 4
      %v519 = vshll.u32 %v279, 16
      %v521 = vrot.slane %v519, 5
      %v522 = vsel %vm292, %v517, %v521
      %v523 = vshrl.u32 %v279, 16
      %v525 = vrot.slane %v523, 4
      %v526 = vor.u32 %v525, %v521
      %v527 = vrot.slane %v526, 4
      %v529 = vshll.u32 %v289, 16
      %v531 = vrot.slane %v529, 5
      %v532 = vsel %vm292, %v527, %v531
      %s533 = scalar_lea.vmem %s250, 12
      %v534 = vld [vmem:[%s533] sm:$0xf]
      %v535 = vld [vmem:[%s533 + $0x4] sm:$0xf]
      %v536 = vld [vmem:[%s533 + $0xc] sm:$0xf]
      %v537 = vld [vmem:[%s533 + $0x10] sm:$0xf]
      %v538 = vld [vmem:[%s533 + $0x18] sm:$0xf]
      %v539 = vld [vmem:[%s533 + $0x1c] sm:$0xf]
      %v540 = vld [vmem:[%s533 + $0x24] sm:$0xf]
      %v541 = vld [vmem:[%s533 + $0x28] sm:$0xf]
      %v542 = vld [vmem:[%s533 + $0x30] sm:$0xf]
      %v543 = vld [vmem:[%s533 + $0x34] sm:$0xf]
      %v544 = vld [vmem:[%s533 + $0x3c] sm:$0xf]
      %v545 = vld [vmem:[%s533 + $0x40] sm:$0xf]
      %v546 = vld [vmem:[%s533 + $0x48] sm:$0xf]
      %v547 = vld [vmem:[%s533 + $0x4c] sm:$0xf]
      %v548 = vld [vmem:[%s533 + $0x54] sm:$0xf]
      %v549 = vld [vmem:[%s533 + $0x58] sm:$0xf]
      %v550 = vld [vmem:[%s533 + $0x60] sm:$0xf]
      %v551 = vld [vmem:[%s533 + $0x64] sm:$0xf]
      %v552 = vld [vmem:[%s533 + $0x6c] sm:$0xf]
      %v553 = vld [vmem:[%s533 + $0x70] sm:$0xf]
      %v554 = vld [vmem:[%s533 + $0x8] sm:$0x1]
      %v555 = vld [vmem:[%s533 + $0x14] sm:$0x1]
      %v556 = vld [vmem:[%s533 + $0x20] sm:$0x1]
      %v557 = vld [vmem:[%s533 + $0x2c] sm:$0x1]
      %v558 = vld [vmem:[%s533 + $0x38] sm:$0x1]
      %v559 = vld [vmem:[%s533 + $0x44] sm:$0x1]
      %v560 = vld [vmem:[%s533 + $0x50] sm:$0x1]
      %v561 = vld [vmem:[%s533 + $0x5c] sm:$0x1]
      %v562 = vld [vmem:[%s533 + $0x68] sm:$0x1]
      %v563 = vld [vmem:[%s533 + $0x74] sm:$0x1]
      %v565 = vshrl.u32 %v534, 16
      %v567 = vrot.slane %v565, 4
      %v568 = vshll.u32 %v534, 16
      %v570 = vrot.slane %v568, 5
      %v571 = vor.u32 %v567, %v570
      %v572 = vrot.slane %v571, 4
      %v574 = vshll.u32 %v535, 16
      %v576 = vrot.slane %v574, 5
      %v577 = vsel %vm292, %v572, %v576
      %v578 = vshrl.u32 %v535, 16
      %v580 = vrot.slane %v578, 4
      %v581 = vor.u32 %v580, %v576
      %v582 = vrot.slane %v581, 4
      %v584 = vshll.u32 %v554, 16
      %v586 = vrot.slane %v584, 5
      %v587 = vsel %vm292, %v582, %v586
      %v589 = vshrl.u32 %v536, 16
      %v591 = vrot.slane %v589, 4
      %v592 = vshll.u32 %v536, 16
      %v594 = vrot.slane %v592, 5
      %v595 = vor.u32 %v591, %v594
      %v596 = vrot.slane %v595, 4
      %v598 = vshll.u32 %v537, 16
      %v600 = vrot.slane %v598, 5
      %v601 = vsel %vm292, %v596, %v600
      %v602 = vshrl.u32 %v537, 16
      %v604 = vrot.slane %v602, 4
      %v605 = vor.u32 %v604, %v600
      %v606 = vrot.slane %v605, 4
      %v608 = vshll.u32 %v555, 16
      %v610 = vrot.slane %v608, 5
      %v611 = vsel %vm292, %v606, %v610
      %v613 = vshrl.u32 %v538, 16
      %v615 = vrot.slane %v613, 4
      %v616 = vshll.u32 %v538, 16
      %v618 = vrot.slane %v616, 5
      %v619 = vor.u32 %v615, %v618
      %v620 = vrot.slane %v619, 4
      %v622 = vshll.u32 %v539, 16
      %v624 = vrot.slane %v622, 5
      %v625 = vsel %vm292, %v620, %v624
      %v626 = vshrl.u32 %v539, 16
      %v628 = vrot.slane %v626, 4
      %v629 = vor.u32 %v628, %v624
      %v630 = vrot.slane %v629, 4
      %v632 = vshll.u32 %v556, 16
      %v634 = vrot.slane %v632, 5
      %v635 = vsel %vm292, %v630, %v634
      %v637 = vshrl.u32 %v540, 16
      %v639 = vrot.slane %v637, 4
      %v640 = vshll.u32 %v540, 16
      %v642 = vrot.slane %v640, 5
      %v643 = vor.u32 %v639, %v642
      %v644 = vrot.slane %v643, 4
      %v646 = vshll.u32 %v541, 16
      %v648 = vrot.slane %v646, 5
      %v649 = vsel %vm292, %v644, %v648
      %v650 = vshrl.u32 %v541, 16
      %v652 = vrot.slane %v650, 4
      %v653 = vor.u32 %v652, %v648
      %v654 = vrot.slane %v653, 4
      %v656 = vshll.u32 %v557, 16
      %v658 = vrot.slane %v656, 5
      %v659 = vsel %vm292, %v654, %v658
      %v661 = vshrl.u32 %v542, 16
      %v663 = vrot.slane %v661, 4
      %v664 = vshll.u32 %v542, 16
      %v666 = vrot.slane %v664, 5
      %v667 = vor.u32 %v663, %v666
      %v668 = vrot.slane %v667, 4
      %v670 = vshll.u32 %v543, 16
      %v672 = vrot.slane %v670, 5
      %v673 = vsel %vm292, %v668, %v672
      %v674 = vshrl.u32 %v543, 16
      %v676 = vrot.slane %v674, 4
      %v677 = vor.u32 %v676, %v672
      %v678 = vrot.slane %v677, 4
      %v680 = vshll.u32 %v558, 16
      %v682 = vrot.slane %v680, 5
      %v683 = vsel %vm292, %v678, %v682
      %v685 = vshrl.u32 %v544, 16
      %v687 = vrot.slane %v685, 4
      %v688 = vshll.u32 %v544, 16
      %v690 = vrot.slane %v688, 5
      %v691 = vor.u32 %v687, %v690
      %v692 = vrot.slane %v691, 4
      %v694 = vshll.u32 %v545, 16
      %v696 = vrot.slane %v694, 5
      %v697 = vsel %vm292, %v692, %v696
      %v698 = vshrl.u32 %v545, 16
      %v700 = vrot.slane %v698, 4
      %v701 = vor.u32 %v700, %v696
      %v702 = vrot.slane %v701, 4
      %v704 = vshll.u32 %v559, 16
      %v706 = vrot.slane %v704, 5
      %v707 = vsel %vm292, %v702, %v706
      %v709 = vshrl.u32 %v546, 16
      %v711 = vrot.slane %v709, 4
      %v712 = vshll.u32 %v546, 16
      %v714 = vrot.slane %v712, 5
      %v715 = vor.u32 %v711, %v714
      %v716 = vrot.slane %v715, 4
      %v718 = vshll.u32 %v547, 16
      %v720 = vrot.slane %v718, 5
      %v721 = vsel %vm292, %v716, %v720
      %v722 = vshrl.u32 %v547, 16
      %v724 = vrot.slane %v722, 4
      %v725 = vor.u32 %v724, %v720
      %v726 = vrot.slane %v725, 4
      %v728 = vshll.u32 %v560, 16
      %v730 = vrot.slane %v728, 5
      %v731 = vsel %vm292, %v726, %v730
      %v733 = vshrl.u32 %v548, 16
      %v735 = vrot.slane %v733, 4
      %v736 = vshll.u32 %v548, 16
      %v738 = vrot.slane %v736, 5
      %v739 = vor.u32 %v735, %v738
      %v740 = vrot.slane %v739, 4
      %v742 = vshll.u32 %v549, 16
      %v744 = vrot.slane %v742, 5
      %v745 = vsel %vm292, %v740, %v744
      %v746 = vshrl.u32 %v549, 16
      %v748 = vrot.slane %v746, 4
      %v749 = vor.u32 %v748, %v744
      %v750 = vrot.slane %v749, 4
      %v752 = vshll.u32 %v561, 16
      %v754 = vrot.slane %v752, 5
      %v755 = vsel %vm292, %v750, %v754
      %v757 = vshrl.u32 %v550, 16
      %v759 = vrot.slane %v757, 4
      %v760 = vshll.u32 %v550, 16
      %v762 = vrot.slane %v760, 5
      %v763 = vor.u32 %v759, %v762
      %v764 = vrot.slane %v763, 4
      %v766 = vshll.u32 %v551, 16
      %v768 = vrot.slane %v766, 5
      %v769 = vsel %vm292, %v764, %v768
      %v770 = vshrl.u32 %v551, 16
      %v772 = vrot.slane %v770, 4
      %v773 = vor.u32 %v772, %v768
      %v774 = vrot.slane %v773, 4
      %v776 = vshll.u32 %v562, 16
      %v778 = vrot.slane %v776, 5
      %v779 = vsel %vm292, %v774, %v778
      %v781 = vshrl.u32 %v552, 16
      %v783 = vrot.slane %v781, 4
      %v784 = vshll.u32 %v552, 16
      %v786 = vrot.slane %v784, 5
      %v787 = vor.u32 %v783, %v786
      %v788 = vrot.slane %v787, 4
      %v790 = vshll.u32 %v553, 16
      %v792 = vrot.slane %v790, 5
      %v793 = vsel %vm292, %v788, %v792
      %v794 = vshrl.u32 %v553, 16
      %v796 = vrot.slane %v794, 4
      %v797 = vor.u32 %v796, %v792
      %v798 = vrot.slane %v797, 4
      %v800 = vshll.u32 %v563, 16
      %v802 = vrot.slane %v800, 5
      %v803 = vsel %vm292, %v798, %v802
      %v824 = vunpack.c.l.b16 %v260
      %v825 = vunpack.c.l.b16 %v261
      %v826 = vunpack.c.l.b16 %v262
      %v827 = vunpack.c.l.b16 %v263
      %v828 = vunpack.c.l.b16 %v264
      %v829 = vunpack.c.l.b16 %v265
      %v830 = vunpack.c.l.b16 %v266
      %v831 = vunpack.c.l.b16 %v267
      %v832 = vunpack.c.l.b16 %v268
      %v833 = vunpack.c.l.b16 %v269
      %v834 = vunpack.c.l.b16 %v270
      %v835 = vunpack.c.l.b16 %v271
      %v836 = vunpack.c.l.b16 %v272
      %v837 = vunpack.c.l.b16 %v273
      %v838 = vunpack.c.l.b16 %v274
      %v839 = vunpack.c.l.b16 %v275
      %v840 = vunpack.c.l.b16 %v276
      %v841 = vunpack.c.l.b16 %v277
      %v842 = vunpack.c.l.b16 %v278
      %v843 = vunpack.c.l.b16 %v279
      %v844 = vpack.c.b16 %v825, %v824
      %v845 = vpack.c.b16 %v827, %v826
      %v846 = vpack.c.b16 %v829, %v828
      %v847 = vpack.c.b16 %v831, %v830
      %v848 = vpack.c.b16 %v833, %v832
      %v849 = vpack.c.b16 %v835, %v834
      %v850 = vpack.c.b16 %v837, %v836
      %v851 = vpack.c.b16 %v839, %v838
      %v852 = vpack.c.b16 %v841, %v840
      %v853 = vpack.c.b16 %v843, %v842
      %v864 = vunpack.c.l.b16 %v306
      %v865 = vunpack.c.l.b16 %v316
      %v866 = vunpack.c.l.b16 %v330
      %v867 = vunpack.c.l.b16 %v340
      %v868 = vunpack.c.l.b16 %v354
      %v869 = vunpack.c.l.b16 %v364
      %v870 = vunpack.c.l.b16 %v378
      %v871 = vunpack.c.l.b16 %v388
      %v872 = vunpack.c.l.b16 %v402
      %v873 = vunpack.c.l.b16 %v412
      %v874 = vunpack.c.l.b16 %v426
      %v875 = vunpack.c.l.b16 %v436
      %v876 = vunpack.c.l.b16 %v450
      %v877 = vunpack.c.l.b16 %v460
      %v878 = vunpack.c.l.b16 %v474
      %v879 = vunpack.c.l.b16 %v484
      %v880 = vunpack.c.l.b16 %v498
      %v881 = vunpack.c.l.b16 %v508
      %v882 = vunpack.c.l.b16 %v522
      %v883 = vunpack.c.l.b16 %v532
      %v884 = vpack.c.b16 %v865, %v864
      %v885 = vpack.c.b16 %v867, %v866
      %v886 = vpack.c.b16 %v869, %v868
      %v887 = vpack.c.b16 %v871, %v870
      %v888 = vpack.c.b16 %v873, %v872
      %v889 = vpack.c.b16 %v875, %v874
      %v890 = vpack.c.b16 %v877, %v876
      %v891 = vpack.c.b16 %v879, %v878
      %v892 = vpack.c.b16 %v881, %v880
      %v893 = vpack.c.b16 %v883, %v882
      %v924 = vunpack.c.l.b16 %v534
      %v925 = vunpack.c.l.b16 %v535
      %v926 = vunpack.c.l.b16 %v536
      %v927 = vunpack.c.l.b16 %v537
      %v928 = vunpack.c.l.b16 %v538
      %v929 = vunpack.c.l.b16 %v539
      %v930 = vunpack.c.l.b16 %v540
      %v931 = vunpack.c.l.b16 %v541
      %v932 = vunpack.c.l.b16 %v542
      %v933 = vunpack.c.l.b16 %v543
      %v934 = vunpack.c.l.b16 %v544
      %v935 = vunpack.c.l.b16 %v545
      %v936 = vunpack.c.l.b16 %v546
      %v937 = vunpack.c.l.b16 %v547
      %v938 = vunpack.c.l.b16 %v548
      %v939 = vunpack.c.l.b16 %v549
      %v940 = vunpack.c.l.b16 %v550
      %v941 = vunpack.c.l.b16 %v551
      %v942 = vunpack.c.l.b16 %v552
      %v943 = vunpack.c.l.b16 %v553
      %v944 = vpack.c.b16 %v925, %v924
      %v945 = vpack.c.b16 %v927, %v926
      %v946 = vpack.c.b16 %v929, %v928
      %v947 = vpack.c.b16 %v931, %v930
      %v948 = vpack.c.b16 %v933, %v932
      %v949 = vpack.c.b16 %v935, %v934
      %v950 = vpack.c.b16 %v937, %v936
      %v951 = vpack.c.b16 %v939, %v938
      %v952 = vpack.c.b16 %v941, %v940
      %v953 = vpack.c.b16 %v943, %v942
      %v964 = vunpack.c.l.b16 %v577
      %v965 = vunpack.c.l.b16 %v587
      %v966 = vunpack.c.l.b16 %v601
      %v967 = vunpack.c.l.b16 %v611
      %v968 = vunpack.c.l.b16 %v625
      %v969 = vunpack.c.l.b16 %v635
      %v970 = vunpack.c.l.b16 %v649
      %v971 = vunpack.c.l.b16 %v659
      %v972 = vunpack.c.l.b16 %v673
      %v973 = vunpack.c.l.b16 %v683
      %v974 = vunpack.c.l.b16 %v697
      %v975 = vunpack.c.l.b16 %v707
      %v976 = vunpack.c.l.b16 %v721
      %v977 = vunpack.c.l.b16 %v731
      %v978 = vunpack.c.l.b16 %v745
      %v979 = vunpack.c.l.b16 %v755
      %v980 = vunpack.c.l.b16 %v769
      %v981 = vunpack.c.l.b16 %v779
      %v982 = vunpack.c.l.b16 %v793
      %v983 = vunpack.c.l.b16 %v803
      %v984 = vpack.c.b16 %v965, %v964
      %v985 = vpack.c.b16 %v967, %v966
      %v986 = vpack.c.b16 %v969, %v968
      %v987 = vpack.c.b16 %v971, %v970
      %v988 = vpack.c.b16 %v973, %v972
      %v989 = vpack.c.b16 %v975, %v974
      %v990 = vpack.c.b16 %v977, %v976
      %v991 = vpack.c.b16 %v979, %v978
      %v992 = vpack.c.b16 %v981, %v980
      %v993 = vpack.c.b16 %v983, %v982
      %v1004 = vld [vmem:[%s1] sm:$0xf]
      %v1005 = vld [vmem:[%s1 + $0x4] sm:$0xf]
      %v1006 = vld [vmem:[%s1 + $0x8] sm:$0xf]
      %v1007 = vld [vmem:[%s1 + $0xc] sm:$0xf]
      %v1008 = vld [vmem:[%s1 + $0x10] sm:$0xf]
      %v1009 = vld [vmem:[%s1 + $0x14] sm:$0xf]
      %v1010 = vld [vmem:[%s1 + $0x18] sm:$0xf]
      %v1011 = vld [vmem:[%s1 + $0x1c] sm:$0xf]
      %v1012 = vld [vmem:[%s1 + $0x20] sm:$0xf]
      %v1013 = vld [vmem:[%s1 + $0x24] sm:$0xf]
      %v1014 = vld [vmem:[%s1 + $0x28] sm:$0xf]
      %v1015 = vld [vmem:[%s1 + $0x2c] sm:$0xf]
      %v1016 = vld [vmem:[%s1 + $0x30] sm:$0xf]
      %v1017 = vld [vmem:[%s1 + $0x34] sm:$0xf]
      %v1018 = vld [vmem:[%s1 + $0x38] sm:$0xf]
      %v1019 = vld [vmem:[%s1 + $0x3c] sm:$0xf]
      %v1020 = vld [vmem:[%s1 + $0x40] sm:$0xf]
      %v1021 = vld [vmem:[%s1 + $0x44] sm:$0xf]
      %v1022 = vld [vmem:[%s1 + $0x48] sm:$0xf]
      %v1023 = vld [vmem:[%s1 + $0x4c] sm:$0xf]
      %v1024 = vld [vmem:[%s1 + $0x50] sm:$0xf]
      %v1025 = vld [vmem:[%s1 + $0x54] sm:$0xf]
      %v1026 = vld [vmem:[%s1 + $0x58] sm:$0xf]
      %v1027 = vld [vmem:[%s1 + $0x5c] sm:$0xf]
      %v1028 = vld [vmem:[%s1 + $0x60] sm:$0xf]
      %v1029 = vld [vmem:[%s1 + $0x64] sm:$0xf]
      %v1030 = vld [vmem:[%s1 + $0x68] sm:$0xf]
      %v1031 = vld [vmem:[%s1 + $0x6c] sm:$0xf]
      %v1032 = vld [vmem:[%s1 + $0x70] sm:$0xf]
      %v1033 = vld [vmem:[%s1 + $0x74] sm:$0xf]
      %v1034 = vld [vmem:[%s1 + $0x78] sm:$0xf]
      %v1035 = vld [vmem:[%s1 + $0x7c] sm:$0xf]
      %v1036 = vld [vmem:[%s1 + $0x80] sm:$0xf]
      %v1037 = vld [vmem:[%s1 + $0x84] sm:$0xf]
      %v1038 = vld [vmem:[%s1 + $0x88] sm:$0xf]
      %v1039 = vld [vmem:[%s1 + $0x8c] sm:$0xf]
      %v1040 = vld [vmem:[%s1 + $0x90] sm:$0xf]
      %v1041 = vld [vmem:[%s1 + $0x94] sm:$0xf]
      %v1042 = vld [vmem:[%s1 + $0x98] sm:$0xf]
      %v1043 = vld [vmem:[%s1 + $0x9c] sm:$0xf]
      %v1044 = vld [vmem:[%s1 + $0xa0] sm:$0xf]
      %v1045 = vld [vmem:[%s1 + $0xa4] sm:$0xf]
      %v1046 = vld [vmem:[%s1 + $0xa8] sm:$0xf]
      %v1047 = vld [vmem:[%s1 + $0xac] sm:$0xf]
      %v1048 = vld [vmem:[%s1 + $0xb0] sm:$0xf]
      %v1049 = vld [vmem:[%s1 + $0xb4] sm:$0xf]
      %v1050 = vld [vmem:[%s1 + $0xb8] sm:$0xf]
      %v1051 = vld [vmem:[%s1 + $0xbc] sm:$0xf]
      %v1052 = vld [vmem:[%s1 + $0xc0] sm:$0xf]
      %v1053 = vld [vmem:[%s1 + $0xc4] sm:$0xf]
      %v1054 = vld [vmem:[%s1 + $0xc8] sm:$0xf]
      %v1055 = vld [vmem:[%s1 + $0xcc] sm:$0xf]
      %v1056 = vld [vmem:[%s1 + $0xd0] sm:$0xf]
      %v1057 = vld [vmem:[%s1 + $0xd4] sm:$0xf]
      %v1058 = vld [vmem:[%s1 + $0xd8] sm:$0xf]
      %v1059 = vld [vmem:[%s1 + $0xdc] sm:$0xf]
      %v1060 = vld [vmem:[%s1 + $0xe0] sm:$0xf]
      %v1061 = vld [vmem:[%s1 + $0xe4] sm:$0xf]
      %v1062 = vld [vmem:[%s1 + $0xe8] sm:$0xf]
      %v1063 = vld [vmem:[%s1 + $0xec] sm:$0xf]
      %v1064 = vld [vmem:[%s1 + $0xf0] sm:$0xf]
      %v1065 = vld [vmem:[%s1 + $0xf4] sm:$0xf]
      %v1066 = vld [vmem:[%s1 + $0xf8] sm:$0xf]
      %v1067 = vld [vmem:[%s1 + $0xfc] sm:$0xf]
      %v1068 = vld [vmem:[%s2] sm:$0x1]
      %v1070 = vperm.slane %v1068, 0
      %v1136 = vunpack.c.l.b16 %v1004
      %v1137 = vunpack.c.l.b16 %v1005
      %v1138 = vunpack.c.l.b16 %v1006
      %v1139 = vunpack.c.l.b16 %v1007
      %v1140 = vunpack.c.l.b16 %v1008
      %v1141 = vunpack.c.l.b16 %v1009
      %v1142 = vunpack.c.l.b16 %v1010
      %v1143 = vunpack.c.l.b16 %v1011
      %v1144 = vunpack.c.l.b16 %v1012
      %v1145 = vunpack.c.l.b16 %v1013
      %v1146 = vunpack.c.l.b16 %v1014
      %v1147 = vunpack.c.l.b16 %v1015
      %v1148 = vunpack.c.l.b16 %v1016
      %v1149 = vunpack.c.l.b16 %v1017
      %v1150 = vunpack.c.l.b16 %v1018
      %v1151 = vunpack.c.l.b16 %v1019
      %v1152 = vunpack.c.l.b16 %v1020
      %v1153 = vunpack.c.l.b16 %v1021
      %v1154 = vunpack.c.l.b16 %v1022
      %v1155 = vunpack.c.l.b16 %v1023
      %v1156 = vunpack.c.l.b16 %v1024
      %v1157 = vunpack.c.l.b16 %v1025
      %v1158 = vunpack.c.l.b16 %v1026
      %v1159 = vunpack.c.l.b16 %v1027
      %v1160 = vunpack.c.l.b16 %v1028
      %v1161 = vunpack.c.l.b16 %v1029
      %v1162 = vunpack.c.l.b16 %v1030
      %v1163 = vunpack.c.l.b16 %v1031
      %v1164 = vunpack.c.l.b16 %v1032
      %v1165 = vunpack.c.l.b16 %v1033
      %v1166 = vunpack.c.l.b16 %v1034
      %v1167 = vunpack.c.l.b16 %v1035
      %v1168 = vunpack.c.l.b16 %v1036
      %v1169 = vunpack.c.l.b16 %v1037
      %v1170 = vunpack.c.l.b16 %v1038
      %v1171 = vunpack.c.l.b16 %v1039
      %v1172 = vunpack.c.l.b16 %v1040
      %v1173 = vunpack.c.l.b16 %v1041
      %v1174 = vunpack.c.l.b16 %v1042
      %v1175 = vunpack.c.l.b16 %v1043
      %v1176 = vunpack.c.l.b16 %v1044
      %v1177 = vunpack.c.l.b16 %v1045
      %v1178 = vunpack.c.l.b16 %v1046
      %v1179 = vunpack.c.l.b16 %v1047
      %v1180 = vunpack.c.l.b16 %v1048
      %v1181 = vunpack.c.l.b16 %v1049
      %v1182 = vunpack.c.l.b16 %v1050
      %v1183 = vunpack.c.l.b16 %v1051
      %v1184 = vunpack.c.l.b16 %v1052
      %v1185 = vunpack.c.l.b16 %v1053
      %v1186 = vunpack.c.l.b16 %v1054
      %v1187 = vunpack.c.l.b16 %v1055
      %v1188 = vunpack.c.l.b16 %v1056
      %v1189 = vunpack.c.l.b16 %v1057
      %v1190 = vunpack.c.l.b16 %v1058
      %v1191 = vunpack.c.l.b16 %v1059
      %v1192 = vunpack.c.l.b16 %v1060
      %v1193 = vunpack.c.l.b16 %v1061
      %v1194 = vunpack.c.l.b16 %v1062
      %v1195 = vunpack.c.l.b16 %v1063
      %v1196 = vunpack.c.l.b16 %v1064
      %v1197 = vunpack.c.l.b16 %v1065
      %v1198 = vunpack.c.l.b16 %v1066
      %v1199 = vunpack.c.l.b16 %v1067
      %v1200 = vpack.c.b16 %v1137, %v1136
      %v1201 = vpack.c.b16 %v1139, %v1138
      %v1202 = vpack.c.b16 %v1141, %v1140
      %v1203 = vpack.c.b16 %v1143, %v1142
      %v1204 = vpack.c.b16 %v1145, %v1144
      %v1205 = vpack.c.b16 %v1147, %v1146
      %v1206 = vpack.c.b16 %v1149, %v1148
      %v1207 = vpack.c.b16 %v1151, %v1150
      %v1208 = vpack.c.b16 %v1153, %v1152
      %v1209 = vpack.c.b16 %v1155, %v1154
      %v1210 = vpack.c.b16 %v1157, %v1156
      %v1211 = vpack.c.b16 %v1159, %v1158
      %v1212 = vpack.c.b16 %v1161, %v1160
      %v1213 = vpack.c.b16 %v1163, %v1162
      %v1214 = vpack.c.b16 %v1165, %v1164
      %v1215 = vpack.c.b16 %v1167, %v1166
      %v1216 = vpack.c.b16 %v1169, %v1168
      %v1217 = vpack.c.b16 %v1171, %v1170
      %v1218 = vpack.c.b16 %v1173, %v1172
      %v1219 = vpack.c.b16 %v1175, %v1174
      %v1220 = vpack.c.b16 %v1177, %v1176
      %v1221 = vpack.c.b16 %v1179, %v1178
      %v1222 = vpack.c.b16 %v1181, %v1180
      %v1223 = vpack.c.b16 %v1183, %v1182
      %v1224 = vpack.c.b16 %v1185, %v1184
      %v1225 = vpack.c.b16 %v1187, %v1186
      %v1226 = vpack.c.b16 %v1189, %v1188
      %v1227 = vpack.c.b16 %v1191, %v1190
      %v1228 = vpack.c.b16 %v1193, %v1192
      %v1229 = vpack.c.b16 %v1195, %v1194
      %v1230 = vpack.c.b16 %v1197, %v1196
      %v1231 = vpack.c.b16 %v1199, %v1198
      %1264 = vmatpush.bf16.msra.mxu0 %v1207
      %1265 = vmatpush.bf16.msra.mxu0 %v1206
      %1266 = vmatpush.bf16.msra.mxu0 %v1205
      %1267 = vmatpush.bf16.msra.mxu0 %v1204
      %1268 = vmatpush.bf16.msra.mxu0 %v1203
      %1269 = vmatpush.bf16.msra.mxu0 %v1202
      %1270 = vmatpush.bf16.msra.mxu0 %v1201
      %1271 = vmatpush.bf16.msra.mxu0 %v1200
      %1272 = vmatmul.bf16.gmra.mxu0 %v844
      %v1273 = vpop.f32.mrf.mxu0
      %v1274 = vadd.f32 %v1070, %v1273
      %v1275 = vpop.f32.mrf.mxu0
      %v1276 = vadd.f32 %v1070, %v1275
      %1277 = vmatmul.bf16.gmra.mxu0 %v845
      %v1278 = vpop.f32.mrf.mxu0
      %v1279 = vadd.f32 %v1070, %v1278
      %v1280 = vpop.f32.mrf.mxu0
      %v1281 = vadd.f32 %v1070, %v1280
      %1282 = vmatmul.bf16.gmra.mxu0 %v846
      %v1283 = vpop.f32.mrf.mxu0
      %v1284 = vadd.f32 %v1070, %v1283
      %v1285 = vpop.f32.mrf.mxu0
      %v1286 = vadd.f32 %v1070, %v1285
      %1287 = vmatmul.bf16.gmra.mxu0 %v847
      %v1288 = vpop.f32.mrf.mxu0
      %v1289 = vadd.f32 %v1070, %v1288
      %v1290 = vpop.f32.mrf.mxu0
      %v1291 = vadd.f32 %v1070, %v1290
      %1292 = vmatmul.bf16.gmra.mxu0 %v848
      %v1293 = vpop.f32.mrf.mxu0
      %v1294 = vadd.f32 %v1070, %v1293
      %v1295 = vpop.f32.mrf.mxu0
      %v1296 = vadd.f32 %v1070, %v1295
      %1297 = vmatmul.bf16.gmra.mxu0 %v849
      %v1298 = vpop.f32.mrf.mxu0
      %v1299 = vadd.f32 %v1070, %v1298
      %v1300 = vpop.f32.mrf.mxu0
      %v1301 = vadd.f32 %v1070, %v1300
      %1302 = vmatmul.bf16.gmra.mxu0 %v850
      %v1303 = vpop.f32.mrf.mxu0
      %v1304 = vadd.f32 %v1070, %v1303
      %v1305 = vpop.f32.mrf.mxu0
      %v1306 = vadd.f32 %v1070, %v1305
      %1307 = vmatmul.bf16.gmra.mxu0 %v851
      %v1308 = vpop.f32.mrf.mxu0
      %v1309 = vadd.f32 %v1070, %v1308
      %v1310 = vpop.f32.mrf.mxu0
      %v1311 = vadd.f32 %v1070, %v1310
      %1312 = vmatmul.bf16.gmra.mxu0 %v852
      %v1313 = vpop.f32.mrf.mxu0
      %v1314 = vadd.f32 %v1070, %v1313
      %v1315 = vpop.f32.mrf.mxu0
      %v1316 = vadd.f32 %v1070, %v1315
      %1317 = vmatmul.bf16.gmra.mxu0 %v853
      %v1318 = vpop.f32.mrf.mxu0
      %v1319 = vadd.f32 %v1070, %v1318
      %v1320 = vpop.f32.mrf.mxu0
      %v1321 = vadd.f32 %v1070, %v1320
      %1322 = vdwg.mxu0
      %1323 = vmatpush.bf16.msra.mxu0 %v1215
      %1324 = vmatpush.bf16.msra.mxu0 %v1214
      %1325 = vmatpush.bf16.msra.mxu0 %v1213
      %1326 = vmatpush.bf16.msra.mxu0 %v1212
      %1327 = vmatpush.bf16.msra.mxu0 %v1211
      %1328 = vmatpush.bf16.msra.mxu0 %v1210
      %1329 = vmatpush.bf16.msra.mxu0 %v1209
      %1330 = vmatpush.bf16.msra.mxu0 %v1208
      %1331 = vmatmul.bf16.gmra.mxu0 %v884
      %v1332 = vpop.f32.mrf.mxu0
      %v1333 = vadd.f32 %v1274, %v1332
      %v1334 = vpop.f32.mrf.mxu0
      %v1335 = vadd.f32 %v1276, %v1334
      %1336 = vmatmul.bf16.gmra.mxu0 %v885
      %v1337 = vpop.f32.mrf.mxu0
      %v1338 = vadd.f32 %v1279, %v1337
      %v1339 = vpop.f32.mrf.mxu0
      %v1340 = vadd.f32 %v1281, %v1339
      %1341 = vmatmul.bf16.gmra.mxu0 %v886
      %v1342 = vpop.f32.mrf.mxu0
      %v1343 = vadd.f32 %v1284, %v1342
      %v1344 = vpop.f32.mrf.mxu0
      %v1345 = vadd.f32 %v1286, %v1344
      %1346 = vmatmul.bf16.gmra.mxu0 %v887
      %v1347 = vpop.f32.mrf.mxu0
      %v1348 = vadd.f32 %v1289, %v1347
      %v1349 = vpop.f32.mrf.mxu0
      %v1350 = vadd.f32 %v1291, %v1349
      %1351 = vmatmul.bf16.gmra.mxu0 %v888
      %v1352 = vpop.f32.mrf.mxu0
      %v1353 = vadd.f32 %v1294, %v1352
      %v1354 = vpop.f32.mrf.mxu0
      %v1355 = vadd.f32 %v1296, %v1354
      %1356 = vmatmul.bf16.gmra.mxu0 %v889
      %v1357 = vpop.f32.mrf.mxu0
      %v1358 = vadd.f32 %v1299, %v1357
      %v1359 = vpop.f32.mrf.mxu0
      %v1360 = vadd.f32 %v1301, %v1359
      %1361 = vmatmul.bf16.gmra.mxu0 %v890
      %v1362 = vpop.f32.mrf.mxu0
      %v1363 = vadd.f32 %v1304, %v1362
      %v1364 = vpop.f32.mrf.mxu0
      %v1365 = vadd.f32 %v1306, %v1364
      %1366 = vmatmul.bf16.gmra.mxu0 %v891
      %v1367 = vpop.f32.mrf.mxu0
      %v1368 = vadd.f32 %v1309, %v1367
      %v1369 = vpop.f32.mrf.mxu0
      %v1370 = vadd.f32 %v1311, %v1369
      %1371 = vmatmul.bf16.gmra.mxu0 %v892
      %v1372 = vpop.f32.mrf.mxu0
      %v1373 = vadd.f32 %v1314, %v1372
      %v1374 = vpop.f32.mrf.mxu0
      %v1375 = vadd.f32 %v1316, %v1374
      %1376 = vmatmul.bf16.gmra.mxu0 %v893
      %v1377 = vpop.f32.mrf.mxu0
      %v1378 = vadd.f32 %v1319, %v1377
      %v1379 = vpop.f32.mrf.mxu0
      %v1380 = vadd.f32 %v1321, %v1379
      %1381 = vdwg.mxu0
      %1382 = vmatpush.bf16.msra.mxu0 %v1223
      %1383 = vmatpush.bf16.msra.mxu0 %v1222
      %1384 = vmatpush.bf16.msra.mxu0 %v1221
      %1385 = vmatpush.bf16.msra.mxu0 %v1220
      %1386 = vmatpush.bf16.msra.mxu0 %v1219
      %1387 = vmatpush.bf16.msra.mxu0 %v1218
      %1388 = vmatpush.bf16.msra.mxu0 %v1217
      %1389 = vmatpush.bf16.msra.mxu0 %v1216
      %1390 = vmatmul.bf16.gmra.mxu0 %v944
      %v1391 = vpop.f32.mrf.mxu0
      %v1392 = vadd.f32 %v1333, %v1391
      %v1393 = vpop.f32.mrf.mxu0
      %v1394 = vadd.f32 %v1335, %v1393
      %1395 = vmatmul.bf16.gmra.mxu0 %v945
      %v1396 = vpop.f32.mrf.mxu0
      %v1397 = vadd.f32 %v1338, %v1396
      %v1398 = vpop.f32.mrf.mxu0
      %v1399 = vadd.f32 %v1340, %v1398
      %1400 = vmatmul.bf16.gmra.mxu0 %v946
      %v1401 = vpop.f32.mrf.mxu0
      %v1402 = vadd.f32 %v1343, %v1401
      %v1403 = vpop.f32.mrf.mxu0
      %v1404 = vadd.f32 %v1345, %v1403
      %1405 = vmatmul.bf16.gmra.mxu0 %v947
      %v1406 = vpop.f32.mrf.mxu0
      %v1407 = vadd.f32 %v1348, %v1406
      %v1408 = vpop.f32.mrf.mxu0
      %v1409 = vadd.f32 %v1350, %v1408
      %1410 = vmatmul.bf16.gmra.mxu0 %v948
      %v1411 = vpop.f32.mrf.mxu0
      %v1412 = vadd.f32 %v1353, %v1411
      %v1413 = vpop.f32.mrf.mxu0
      %v1414 = vadd.f32 %v1355, %v1413
      %1415 = vmatmul.bf16.gmra.mxu0 %v949
      %v1416 = vpop.f32.mrf.mxu0
      %v1417 = vadd.f32 %v1358, %v1416
      %v1418 = vpop.f32.mrf.mxu0
      %v1419 = vadd.f32 %v1360, %v1418
      %1420 = vmatmul.bf16.gmra.mxu0 %v950
      %v1421 = vpop.f32.mrf.mxu0
      %v1422 = vadd.f32 %v1363, %v1421
      %v1423 = vpop.f32.mrf.mxu0
      %v1424 = vadd.f32 %v1365, %v1423
      %1425 = vmatmul.bf16.gmra.mxu0 %v951
      %v1426 = vpop.f32.mrf.mxu0
      %v1427 = vadd.f32 %v1368, %v1426
      %v1428 = vpop.f32.mrf.mxu0
      %v1429 = vadd.f32 %v1370, %v1428
      %1430 = vmatmul.bf16.gmra.mxu0 %v952
      %v1431 = vpop.f32.mrf.mxu0
      %v1432 = vadd.f32 %v1373, %v1431
      %v1433 = vpop.f32.mrf.mxu0
      %v1434 = vadd.f32 %v1375, %v1433
      %1435 = vmatmul.bf16.gmra.mxu0 %v953
      %v1436 = vpop.f32.mrf.mxu0
      %v1437 = vadd.f32 %v1378, %v1436
      %v1438 = vpop.f32.mrf.mxu0
      %v1439 = vadd.f32 %v1380, %v1438
      %1440 = vdwg.mxu0
      %1441 = vmatpush.bf16.msra.mxu0 %v1231
      %1442 = vmatpush.bf16.msra.mxu0 %v1230
      %1443 = vmatpush.bf16.msra.mxu0 %v1229
      %1444 = vmatpush.bf16.msra.mxu0 %v1228
      %1445 = vmatpush.bf16.msra.mxu0 %v1227
      %1446 = vmatpush.bf16.msra.mxu0 %v1226
      %1447 = vmatpush.bf16.msra.mxu0 %v1225
      %1448 = vmatpush.bf16.msra.mxu0 %v1224
      %1449 = vmatmul.bf16.gmra.mxu0 %v984
      %v1450 = vpop.f32.mrf.mxu0
      %v1451 = vadd.f32 %v1392, %v1450
      %v1452 = vpop.f32.mrf.mxu0
      %v1453 = vadd.f32 %v1394, %v1452
      %1454 = vmatmul.bf16.gmra.mxu0 %v985
      %v1455 = vpop.f32.mrf.mxu0
      %v1456 = vadd.f32 %v1397, %v1455
      %v1457 = vpop.f32.mrf.mxu0
      %v1458 = vadd.f32 %v1399, %v1457
      %1459 = vmatmul.bf16.gmra.mxu0 %v986
      %v1460 = vpop.f32.mrf.mxu0
      %v1461 = vadd.f32 %v1402, %v1460
      %v1462 = vpop.f32.mrf.mxu0
      %v1463 = vadd.f32 %v1404, %v1462
      %1464 = vmatmul.bf16.gmra.mxu0 %v987
      %v1465 = vpop.f32.mrf.mxu0
      %v1466 = vadd.f32 %v1407, %v1465
      %v1467 = vpop.f32.mrf.mxu0
      %v1468 = vadd.f32 %v1409, %v1467
      %1469 = vmatmul.bf16.gmra.mxu0 %v988
      %v1470 = vpop.f32.mrf.mxu0
      %v1471 = vadd.f32 %v1412, %v1470
      %v1472 = vpop.f32.mrf.mxu0
      %v1473 = vadd.f32 %v1414, %v1472
      %1474 = vmatmul.bf16.gmra.mxu0 %v989
      %v1475 = vpop.f32.mrf.mxu0
      %v1476 = vadd.f32 %v1417, %v1475
      %v1477 = vpop.f32.mrf.mxu0
      %v1478 = vadd.f32 %v1419, %v1477
      %1479 = vmatmul.bf16.gmra.mxu0 %v990
      %v1480 = vpop.f32.mrf.mxu0
      %v1481 = vadd.f32 %v1422, %v1480
      %v1482 = vpop.f32.mrf.mxu0
      %v1483 = vadd.f32 %v1424, %v1482
      %1484 = vmatmul.bf16.gmra.mxu0 %v991
      %v1485 = vpop.f32.mrf.mxu0
      %v1486 = vadd.f32 %v1427, %v1485
      %v1487 = vpop.f32.mrf.mxu0
      %v1488 = vadd.f32 %v1429, %v1487
      %1489 = vmatmul.bf16.gmra.mxu0 %v992
      %v1490 = vpop.f32.mrf.mxu0
      %v1491 = vadd.f32 %v1432, %v1490
      %v1492 = vpop.f32.mrf.mxu0
      %v1493 = vadd.f32 %v1434, %v1492
      %1494 = vmatmul.bf16.gmra.mxu0 %v993
      %v1495 = vpop.f32.mrf.mxu0
      %v1496 = vadd.f32 %v1437, %v1495
      %v1497 = vpop.f32.mrf.mxu0
      %v1498 = vadd.f32 %v1439, %v1497
      %1499 = vdwg.mxu0
      %v1500 = vmax.f32 %v1451, 0.0
      %v1501 = vmax.f32 %v1453, 0.0
      %v1502 = vmax.f32 %v1456, 0.0
      %v1503 = vmax.f32 %v1458, 0.0
      %v1504 = vmax.f32 %v1461, 0.0
      %v1505 = vmax.f32 %v1463, 0.0
      %v1506 = vmax.f32 %v1466, 0.0
      %v1507 = vmax.f32 %v1468, 0.0
      %v1508 = vmax.f32 %v1471, 0.0
      %v1509 = vmax.f32 %v1473, 0.0
      %v1510 = vmax.f32 %v1476, 0.0
      %v1511 = vmax.f32 %v1478, 0.0
      %v1512 = vmax.f32 %v1481, 0.0
      %v1513 = vmax.f32 %v1483, 0.0
      %v1514 = vmax.f32 %v1486, 0.0
      %v1515 = vmax.f32 %v1488, 0.0
      %v1516 = vmax.f32 %v1491, 0.0
      %v1517 = vmax.f32 %v1493, 0.0
      %v1518 = vmax.f32 %v1496, 0.0
      %v1519 = vmax.f32 %v1498, 0.0
      %v1520 = vpack.c.bf16 %v1500, %v1500
      %v1521 = vpack.c.bf16 %v1501, %v1501
      %v1522 = vpack.c.bf16 %v1502, %v1502
      %v1523 = vpack.c.bf16 %v1503, %v1503
      %v1524 = vpack.c.bf16 %v1504, %v1504
      %v1525 = vpack.c.bf16 %v1505, %v1505
      %v1526 = vpack.c.bf16 %v1506, %v1506
      %v1527 = vpack.c.bf16 %v1507, %v1507
      %v1528 = vpack.c.bf16 %v1508, %v1508
      %v1529 = vpack.c.bf16 %v1509, %v1509
      %v1530 = vpack.c.bf16 %v1510, %v1510
      %v1531 = vpack.c.bf16 %v1511, %v1511
      %v1532 = vpack.c.bf16 %v1512, %v1512
      %v1533 = vpack.c.bf16 %v1513, %v1513
      %v1534 = vpack.c.bf16 %v1514, %v1514
      %v1535 = vpack.c.bf16 %v1515, %v1515
      %v1536 = vpack.c.bf16 %v1516, %v1516
      %v1537 = vpack.c.bf16 %v1517, %v1517
      %v1538 = vpack.c.bf16 %v1518, %v1518
      %v1539 = vpack.c.bf16 %v1519, %v1519
      %1540 = vst [vmem:[#allocation2 + $0x8] sm:$0xf] %v1520
      %1541 = vst [vmem:[#allocation2 + $0xc] sm:$0xf] %v1521
      %1542 = vst [vmem:[#allocation2 + $0x1c] sm:$0xf] %v1522
      %1543 = vst [vmem:[#allocation2 + $0x20] sm:$0xf] %v1523
      %1544 = vst [vmem:[#allocation2 + $0x30] sm:$0xf] %v1524
      %1545 = vst [vmem:[#allocation2 + $0x34] sm:$0xf] %v1525
      %1546 = vst [vmem:[#allocation2 + $0x44] sm:$0xf] %v1526
      %1547 = vst [vmem:[#allocation2 + $0x48] sm:$0xf] %v1527
      %1548 = vst [vmem:[#allocation2 + $0x58] sm:$0xf] %v1528
      %1549 = vst [vmem:[#allocation2 + $0x5c] sm:$0xf] %v1529
      %1550 = vst [vmem:[#allocation2 + $0x6c] sm:$0xf] %v1530
      %1551 = vst [vmem:[#allocation2 + $0x70] sm:$0xf] %v1531
      %1552 = vst [vmem:[#allocation2 + $0x80] sm:$0xf] %v1532
      %1553 = vst [vmem:[#allocation2 + $0x84] sm:$0xf] %v1533
      %1554 = vst [vmem:[#allocation2 + $0x94] sm:$0xf] %v1534
      %1555 = vst [vmem:[#allocation2 + $0x98] sm:$0xf] %v1535
      %1556 = vst [vmem:[#allocation2 + $0xa8] sm:$0xf] %v1536
      %1557 = vst [vmem:[#allocation2 + $0xac] sm:$0xf] %v1537
      %1558 = vst [vmem:[#allocation2 + $0xbc] sm:$0xf] %v1538
      %1559 = vst [vmem:[#allocation2 + $0xc0] sm:$0xf] %v1539
      %vm1560 = vcmask 1043459
      %vm1561 = vsmask.f32 7950
      %vm1562 = vmand %vm1560, %vm1561
      %v1563 = vld [vmem:[#allocation2 + $0x4] sm:$0x8]
      %v1564 = vsel %vm1562, 0, %v1563
      %1565 = vst [vmem:[#allocation2 + $0x4] sm:$0x8] %v1564
      %v1566 = vld [vmem:[#allocation2 + $0x18] sm:$0x8]
      %v1567 = vsel %vm1562, 0, %v1566
      %1568 = vst [vmem:[#allocation2 + $0x18] sm:$0x8] %v1567
      %v1569 = vld [vmem:[#allocation2 + $0x2c] sm:$0x8]
      %v1570 = vsel %vm1562, 0, %v1569
      %1571 = vst [vmem:[#allocation2 + $0x2c] sm:$0x8] %v1570
      %v1572 = vld [vmem:[#allocation2 + $0x40] sm:$0x8]
      %v1573 = vsel %vm1562, 0, %v1572
      %1574 = vst [vmem:[#allocation2 + $0x40] sm:$0x8] %v1573
      %v1575 = vld [vmem:[#allocation2 + $0x54] sm:$0x8]
      %v1576 = vsel %vm1562, 0, %v1575
      %1577 = vst [vmem:[#allocation2 + $0x54] sm:$0x8] %v1576
      %v1578 = vld [vmem:[#allocation2 + $0x68] sm:$0x8]
      %v1579 = vsel %vm1562, 0, %v1578
      %1580 = vst [vmem:[#allocation2 + $0x68] sm:$0x8] %v1579
      %v1581 = vld [vmem:[#allocation2 + $0x7c] sm:$0x8]
      %v1582 = vsel %vm1562, 0, %v1581
      %1583 = vst [vmem:[#allocation2 + $0x7c] sm:$0x8] %v1582
      %v1584 = vld [vmem:[#allocation2 + $0x90] sm:$0x8]
      %v1585 = vsel %vm1562, 0, %v1584
      %1586 = vst [vmem:[#allocation2 + $0x90] sm:$0x8] %v1585
      %v1587 = vld [vmem:[#allocation2 + $0xa4] sm:$0x8]
      %v1588 = vsel %vm1562, 0, %v1587
      %1589 = vst [vmem:[#allocation2 + $0xa4] sm:$0x8] %v1588
      %v1590 = vld [vmem:[#allocation2 + $0xb8] sm:$0x8]
      %v1591 = vsel %vm1562, 0, %v1590
      %1592 = vst [vmem:[#allocation2 + $0xb8] sm:$0x8] %v1591
      %vm1593 = vcmask 1040384
      %vm1594 = vsmask.f32 256
      %vm1595 = vmand %vm1593, %vm1594
      %v1596 = vld [vmem:[#allocation2 + $0x10] sm:$0x1]
      %v1597 = vsel %vm1595, 0, %v1596
      %1598 = vst [vmem:[#allocation2 + $0x10] sm:$0x1] %v1597
      %v1599 = vld [vmem:[#allocation2 + $0x24] sm:$0x1]
      %v1600 = vsel %vm1595, 0, %v1599
      %1601 = vst [vmem:[#allocation2 + $0x24] sm:$0x1] %v1600
      %v1602 = vld [vmem:[#allocation2 + $0x38] sm:$0x1]
      %v1603 = vsel %vm1595, 0, %v1602
      %1604 = vst [vmem:[#allocation2 + $0x38] sm:$0x1] %v1603
      %v1605 = vld [vmem:[#allocation2 + $0x4c] sm:$0x1]
      %v1606 = vsel %vm1595, 0, %v1605
      %1607 = vst [vmem:[#allocation2 + $0x4c] sm:$0x1] %v1606
      %v1608 = vld [vmem:[#allocation2 + $0x60] sm:$0x1]
      %v1609 = vsel %vm1595, 0, %v1608
      %1610 = vst [vmem:[#allocation2 + $0x60] sm:$0x1] %v1609
      %v1611 = vld [vmem:[#allocation2 + $0x74] sm:$0x1]
      %v1612 = vsel %vm1595, 0, %v1611
      %1613 = vst [vmem:[#allocation2 + $0x74] sm:$0x1] %v1612
      %v1614 = vld [vmem:[#allocation2 + $0x88] sm:$0x1]
      %v1615 = vsel %vm1595, 0, %v1614
      %1616 = vst [vmem:[#allocation2 + $0x88] sm:$0x1] %v1615
      %v1617 = vld [vmem:[#allocation2 + $0x9c] sm:$0x1]
      %v1618 = vsel %vm1595, 0, %v1617
      %1619 = vst [vmem:[#allocation2 + $0x9c] sm:$0x1] %v1618
      %v1620 = vld [vmem:[#allocation2 + $0xb0] sm:$0x1]
      %v1621 = vsel %vm1595, 0, %v1620
      %1622 = vst [vmem:[#allocation2 + $0xb0] sm:$0x1] %v1621
      %v1623 = vld [vmem:[#allocation2 + $0xc4] sm:$0x1]
      %v1624 = vsel %vm1595, 0, %v1623
      %1625 = vst [vmem:[#allocation2 + $0xc4] sm:$0x1] %v1624
      %p1626 = scmp.eq.s32.totalorder %s21, 0
      // Predicated region
      $region41: #{downsample_forward.1} parent=39 // pred_check
        %p1627 = pneg %p1626
      $region42: #{downsample_forward.1} parent=39 // pred_check_branch
        %1629 = sbr.rel (%p1627) target = $region44
      $region43: #{downsample_forward.1} parent=39 // pred_region
        %1630 = vst [vmem:[#allocation2] sm:$0xf] 0
        %1631 = vst [vmem:[#allocation2 + $0x4] sm:$0xf] 0
        %1632 = vst [vmem:[#allocation2 + $0x8] sm:$0xf] 0
        %1633 = vst [vmem:[#allocation2 + $0xc] sm:$0xf] 0
        %1634 = vst [vmem:[#allocation2 + $0x10] sm:$0xf] 0
      $region44: #{downsample_forward.1} parent=39 // pred_fallthru
        _
      %p1635 = scmp.eq.s32.totalorder %s21, 1
      // Predicated region
      $region45: #{downsample_forward.1} parent=39 // pred_check
        %p1636 = pneg %p1635
      $region46: #{downsample_forward.1} parent=39 // pred_check_branch
        %1638 = sbr.rel (%p1636) target = $region48
      $region47: #{downsample_forward.1} parent=39 // pred_region
        %s1639 = scalar_lea.vmem [#allocation2], 180
        %1640 = vst [vmem:[%s1639] sm:$0xf] 0
        %1641 = vst [vmem:[%s1639 + $0x4] sm:$0xf] 0
        %1642 = vst [vmem:[%s1639 + $0x8] sm:$0xf] 0
        %1643 = vst [vmem:[%s1639 + $0xc] sm:$0xf] 0
        %1644 = vst [vmem:[%s1639 + $0x10] sm:$0xf] 0
      $region48: #{downsample_forward.1} parent=39 // pred_fallthru
        _
      %v1645 = vld [vmem:[#allocation2 + $0x4] sm:$0x8]
      %v1646 = vld [vmem:[#allocation2 + $0x8] sm:$0xf]
      %v1647 = vld [vmem:[#allocation2 + $0xc] sm:$0xf]
      %v1648 = vld [vmem:[#allocation2 + $0x18] sm:$0x8]
      %v1649 = vld [vmem:[#allocation2 + $0x1c] sm:$0xf]
      %v1650 = vld [vmem:[#allocation2 + $0x20] sm:$0xf]
      %v1651 = vld [vmem:[#allocation2 + $0x2c] sm:$0x8]
      %v1652 = vld [vmem:[#allocation2 + $0x30] sm:$0xf]
      %v1653 = vld [vmem:[#allocation2 + $0x34] sm:$0xf]
      %v1654 = vld [vmem:[#allocation2 + $0x40] sm:$0x8]
      %v1655 = vld [vmem:[#allocation2 + $0x44] sm:$0xf]
      %v1656 = vld [vmem:[#allocation2 + $0x48] sm:$0xf]
      %v1657 = vld [vmem:[#allocation2 + $0x54] sm:$0x8]
      %v1658 = vld [vmem:[#allocation2 + $0x58] sm:$0xf]
      %v1659 = vld [vmem:[#allocation2 + $0x5c] sm:$0xf]
      %v1660 = vld [vmem:[#allocation2 + $0x68] sm:$0x8]
      %v1661 = vld [vmem:[#allocation2 + $0x6c] sm:$0xf]
      %v1662 = vld [vmem:[#allocation2 + $0x70] sm:$0xf]
      %v1663 = vld [vmem:[#allocation2 + $0x7c] sm:$0x8]
      %v1664 = vld [vmem:[#allocation2 + $0x80] sm:$0xf]
      %v1665 = vld [vmem:[#allocation2 + $0x84] sm:$0xf]
      %v1666 = vld [vmem:[#allocation2 + $0x90] sm:$0x8]
      %v1667 = vld [vmem:[#allocation2 + $0x94] sm:$0xf]
      %v1668 = vld [vmem:[#allocation2 + $0x98] sm:$0xf]
      %vm1669 = vsmask.f32 4368
      %vm1670 = vmor %vm1594, %vm1669
      %v1672 = vshrl.u32 %v1645, 16
      %v1674 = vrot.slane %v1672, 7
      %v1675 = vrot.slane %v1674, 4
      %v1677 = vshrl.u32 %v1646, 16
      %v1679 = vrot.slane %v1677, 7
      %v1680 = vshll.u32 %v1646, 16
      %v1682 = vor.u32 %v1679, %v1680
      %v1683 = vsel %vm1670, %v1675, %v1682
      %v1684 = vrot.slane %v1679, 4
      %v1686 = vshrl.u32 %v1647, 16
      %v1688 = vrot.slane %v1686, 7
      %v1689 = vshll.u32 %v1647, 16
      %v1691 = vor.u32 %v1688, %v1689
      %v1692 = vsel %vm1670, %v1684, %v1691
      %v1694 = vshrl.u32 %v1648, 16
      %v1696 = vrot.slane %v1694, 7
      %v1697 = vrot.slane %v1696, 4
      %v1699 = vshrl.u32 %v1649, 16
      %v1701 = vrot.slane %v1699, 7
      %v1702 = vshll.u32 %v1649, 16
      %v1704 = vor.u32 %v1701, %v1702
      %v1705 = vsel %vm1670, %v1697, %v1704
      %v1706 = vrot.slane %v1701, 4
      %v1708 = vshrl.u32 %v1650, 16
      %v1710 = vrot.slane %v1708, 7
      %v1711 = vshll.u32 %v1650, 16
      %v1713 = vor.u32 %v1710, %v1711
      %v1714 = vsel %vm1670, %v1706, %v1713
      %v1716 = vshrl.u32 %v1651, 16
      %v1718 = vrot.slane %v1716, 7
      %v1719 = vrot.slane %v1718, 4
      %v1721 = vshrl.u32 %v1652, 16
      %v1723 = vrot.slane %v1721, 7
      %v1724 = vshll.u32 %v1652, 16
      %v1726 = vor.u32 %v1723, %v1724
      %v1727 = vsel %vm1670, %v1719, %v1726
      %v1728 = vrot.slane %v1723, 4
      %v1730 = vshrl.u32 %v1653, 16
      %v1732 = vrot.slane %v1730, 7
      %v1733 = vshll.u32 %v1653, 16
      %v1735 = vor.u32 %v1732, %v1733
      %v1736 = vsel %vm1670, %v1728, %v1735
      %v1738 = vshrl.u32 %v1654, 16
      %v1740 = vrot.slane %v1738, 7
      %v1741 = vrot.slane %v1740, 4
      %v1743 = vshrl.u32 %v1655, 16
      %v1745 = vrot.slane %v1743, 7
      %v1746 = vshll.u32 %v1655, 16
      %v1748 = vor.u32 %v1745, %v1746
      %v1749 = vsel %vm1670, %v1741, %v1748
      %v1750 = vrot.slane %v1745, 4
      %v1752 = vshrl.u32 %v1656, 16
      %v1754 = vrot.slane %v1752, 7
      %v1755 = vshll.u32 %v1656, 16
      %v1757 = vor.u32 %v1754, %v1755
      %v1758 = vsel %vm1670, %v1750, %v1757
      %v1760 = vshrl.u32 %v1657, 16
      %v1762 = vrot.slane %v1760, 7
      %v1763 = vrot.slane %v1762, 4
      %v1765 = vshrl.u32 %v1658, 16
      %v1767 = vrot.slane %v1765, 7
      %v1768 = vshll.u32 %v1658, 16
      %v1770 = vor.u32 %v1767, %v1768
      %v1771 = vsel %vm1670, %v1763, %v1770
      %v1772 = vrot.slane %v1767, 4
      %v1774 = vshrl.u32 %v1659, 16
      %v1776 = vrot.slane %v1774, 7
      %v1777 = vshll.u32 %v1659, 16
      %v1779 = vor.u32 %v1776, %v1777
      %v1780 = vsel %vm1670, %v1772, %v1779
      %v1782 = vshrl.u32 %v1660, 16
      %v1784 = vrot.slane %v1782, 7
      %v1785 = vrot.slane %v1784, 4
      %v1787 = vshrl.u32 %v1661, 16
      %v1789 = vrot.slane %v1787, 7
      %v1790 = vshll.u32 %v1661, 16
      %v1792 = vor.u32 %v1789, %v1790
      %v1793 = vsel %vm1670, %v1785, %v1792
      %v1794 = vrot.slane %v1789, 4
      %v1796 = vshrl.u32 %v1662, 16
      %v1798 = vrot.slane %v1796, 7
      %v1799 = vshll.u32 %v1662, 16
      %v1801 = vor.u32 %v1798, %v1799
      %v1802 = vsel %vm1670, %v1794, %v1801
      %v1804 = vshrl.u32 %v1663, 16
      %v1806 = vrot.slane %v1804, 7
      %v1807 = vrot.slane %v1806, 4
      %v1809 = vshrl.u32 %v1664, 16
      %v1811 = vrot.slane %v1809, 7
      %v1812 = vshll.u32 %v1664, 16
      %v1814 = vor.u32 %v1811, %v1812
      %v1815 = vsel %vm1670, %v1807, %v1814
      %v1816 = vrot.slane %v1811, 4
      %v1818 = vshrl.u32 %v1665, 16
      %v1820 = vrot.slane %v1818, 7
      %v1821 = vshll.u32 %v1665, 16
      %v1823 = vor.u32 %v1820, %v1821
      %v1824 = vsel %vm1670, %v1816, %v1823
      %v1826 = vshrl.u32 %v1666, 16
      %v1828 = vrot.slane %v1826, 7
      %v1829 = vrot.slane %v1828, 4
      %v1831 = vshrl.u32 %v1667, 16
      %v1833 = vrot.slane %v1831, 7
      %v1834 = vshll.u32 %v1667, 16
      %v1836 = vor.u32 %v1833, %v1834
      %v1837 = vsel %vm1670, %v1829, %v1836
      %v1838 = vrot.slane %v1833, 4
      %v1840 = vshrl.u32 %v1668, 16
      %v1842 = vrot.slane %v1840, 7
      %v1843 = vshll.u32 %v1668, 16
      %v1845 = vor.u32 %v1842, %v1843
      %v1846 = vsel %vm1670, %v1838, %v1845
      %v1847 = vld [vmem:[#allocation2 + $0x10] sm:$0x1]
      %v1848 = vld [vmem:[#allocation2 + $0x24] sm:$0x1]
      %v1849 = vld [vmem:[#allocation2 + $0x38] sm:$0x1]
      %v1850 = vld [vmem:[#allocation2 + $0x4c] sm:$0x1]
      %v1851 = vld [vmem:[#allocation2 + $0x60] sm:$0x1]
      %v1852 = vld [vmem:[#allocation2 + $0x74] sm:$0x1]
      %v1853 = vld [vmem:[#allocation2 + $0x88] sm:$0x1]
      %v1854 = vld [vmem:[#allocation2 + $0x9c] sm:$0x1]
      %v1855 = vrot.slane %v1677, 4
      %v1856 = vrot.slane %v1680, 5
      %v1857 = vor.u32 %v1855, %v1856
      %v1858 = vrot.slane %v1857, 4
      %v1859 = vrot.slane %v1689, 5
      %v1860 = vsel %vm292, %v1858, %v1859
      %v1861 = vrot.slane %v1686, 4
      %v1862 = vor.u32 %v1861, %v1859
      %v1863 = vrot.slane %v1862, 4
      %v1865 = vshll.u32 %v1847, 16
      %v1867 = vrot.slane %v1865, 5
      %v1868 = vsel %vm292, %v1863, %v1867
      %v1869 = vrot.slane %v1699, 4
      %v1870 = vrot.slane %v1702, 5
      %v1871 = vor.u32 %v1869, %v1870
      %v1872 = vrot.slane %v1871, 4
      %v1873 = vrot.slane %v1711, 5
      %v1874 = vsel %vm292, %v1872, %v1873
      %v1875 = vrot.slane %v1708, 4
      %v1876 = vor.u32 %v1875, %v1873
      %v1877 = vrot.slane %v1876, 4
      %v1879 = vshll.u32 %v1848, 16
      %v1881 = vrot.slane %v1879, 5
      %v1882 = vsel %vm292, %v1877, %v1881
      %v1883 = vrot.slane %v1721, 4
      %v1884 = vrot.slane %v1724, 5
      %v1885 = vor.u32 %v1883, %v1884
      %v1886 = vrot.slane %v1885, 4
      %v1887 = vrot.slane %v1733, 5
      %v1888 = vsel %vm292, %v1886, %v1887
      %v1889 = vrot.slane %v1730, 4
      %v1890 = vor.u32 %v1889, %v1887
      %v1891 = vrot.slane %v1890, 4
      %v1893 = vshll.u32 %v1849, 16
      %v1895 = vrot.slane %v1893, 5
      %v1896 = vsel %vm292, %v1891, %v1895
      %v1897 = vrot.slane %v1743, 4
      %v1898 = vrot.slane %v1746, 5
      %v1899 = vor.u32 %v1897, %v1898
      %v1900 = vrot.slane %v1899, 4
      %v1901 = vrot.slane %v1755, 5
      %v1902 = vsel %vm292, %v1900, %v1901
      %v1903 = vrot.slane %v1752, 4
      %v1904 = vor.u32 %v1903, %v1901
      %v1905 = vrot.slane %v1904, 4
      %v1907 = vshll.u32 %v1850, 16
      %v1909 = vrot.slane %v1907, 5
      %v1910 = vsel %vm292, %v1905, %v1909
      %v1911 = vrot.slane %v1765, 4
      %v1912 = vrot.slane %v1768, 5
      %v1913 = vor.u32 %v1911, %v1912
      %v1914 = vrot.slane %v1913, 4
      %v1915 = vrot.slane %v1777, 5
      %v1916 = vsel %vm292, %v1914, %v1915
      %v1917 = vrot.slane %v1774, 4
      %v1918 = vor.u32 %v1917, %v1915
      %v1919 = vrot.slane %v1918, 4
      %v1921 = vshll.u32 %v1851, 16
      %v1923 = vrot.slane %v1921, 5
      %v1924 = vsel %vm292, %v1919, %v1923
      %v1925 = vrot.slane %v1787, 4
      %v1926 = vrot.slane %v1790, 5
      %v1927 = vor.u32 %v1925, %v1926
      %v1928 = vrot.slane %v1927, 4
      %v1929 = vrot.slane %v1799, 5
      %v1930 = vsel %vm292, %v1928, %v1929
      %v1931 = vrot.slane %v1796, 4
      %v1932 = vor.u32 %v1931, %v1929
      %v1933 = vrot.slane %v1932, 4
      %v1935 = vshll.u32 %v1852, 16
      %v1937 = vrot.slane %v1935, 5
      %v1938 = vsel %vm292, %v1933, %v1937
      %v1939 = vrot.slane %v1809, 4
      %v1940 = vrot.slane %v1812, 5
      %v1941 = vor.u32 %v1939, %v1940
      %v1942 = vrot.slane %v1941, 4
      %v1943 = vrot.slane %v1821, 5
      %v1944 = vsel %vm292, %v1942, %v1943
      %v1945 = vrot.slane %v1818, 4
      %v1946 = vor.u32 %v1945, %v1943
      %v1947 = vrot.slane %v1946, 4
      %v1949 = vshll.u32 %v1853, 16
      %v1951 = vrot.slane %v1949, 5
      %v1952 = vsel %vm292, %v1947, %v1951
      %v1953 = vrot.slane %v1831, 4
      %v1954 = vrot.slane %v1834, 5
      %v1955 = vor.u32 %v1953, %v1954
      %v1956 = vrot.slane %v1955, 4
      %v1957 = vrot.slane %v1843, 5
      %v1958 = vsel %vm292, %v1956, %v1957
      %v1959 = vrot.slane %v1840, 4
      %v1960 = vor.u32 %v1959, %v1957
      %v1961 = vrot.slane %v1960, 4
      %v1963 = vshll.u32 %v1854, 16
      %v1965 = vrot.slane %v1963, 5
      %v1966 = vsel %vm292, %v1961, %v1965
      %s1967 = scalar_lea.vmem [#allocation2], 20
      %v1968 = vld [vmem:[%s1967 + $0x4] sm:$0x8]
      %v1969 = vld [vmem:[%s1967 + $0x8] sm:$0xf]
      %v1970 = vld [vmem:[%s1967 + $0xc] sm:$0xf]
      %v1971 = vld [vmem:[%s1967 + $0x18] sm:$0x8]
      %v1972 = vld [vmem:[%s1967 + $0x1c] sm:$0xf]
      %v1973 = vld [vmem:[%s1967 + $0x20] sm:$0xf]
      %v1974 = vld [vmem:[%s1967 + $0x2c] sm:$0x8]
      %v1975 = vld [vmem:[%s1967 + $0x30] sm:$0xf]
      %v1976 = vld [vmem:[%s1967 + $0x34] sm:$0xf]
      %v1977 = vld [vmem:[%s1967 + $0x40] sm:$0x8]
      %v1978 = vld [vmem:[%s1967 + $0x44] sm:$0xf]
      %v1979 = vld [vmem:[%s1967 + $0x48] sm:$0xf]
      %v1980 = vld [vmem:[%s1967 + $0x54] sm:$0x8]
      %v1981 = vld [vmem:[%s1967 + $0x58] sm:$0xf]
      %v1982 = vld [vmem:[%s1967 + $0x5c] sm:$0xf]
      %v1983 = vld [vmem:[%s1967 + $0x68] sm:$0x8]
      %v1984 = vld [vmem:[%s1967 + $0x6c] sm:$0xf]
      %v1985 = vld [vmem:[%s1967 + $0x70] sm:$0xf]
      %v1986 = vld [vmem:[%s1967 + $0x7c] sm:$0x8]
      %v1987 = vld [vmem:[%s1967 + $0x80] sm:$0xf]
      %v1988 = vld [vmem:[%s1967 + $0x84] sm:$0xf]
      %v1989 = vld [vmem:[%s1967 + $0x90] sm:$0x8]
      %v1990 = vld [vmem:[%s1967 + $0x94] sm:$0xf]
      %v1991 = vld [vmem:[%s1967 + $0x98] sm:$0xf]
      %v1993 = vshrl.u32 %v1968, 16
      %v1995 = vrot.slane %v1993, 7
      %v1996 = vrot.slane %v1995, 4
      %v1998 = vshrl.u32 %v1969, 16
      %v2000 = vrot.slane %v1998, 7
      %v2001 = vshll.u32 %v1969, 16
      %v2003 = vor.u32 %v2000, %v2001
      %v2004 = vsel %vm1670, %v1996, %v2003
      %v2005 = vrot.slane %v2000, 4
      %v2007 = vshrl.u32 %v1970, 16
      %v2009 = vrot.slane %v2007, 7
      %v2010 = vshll.u32 %v1970, 16
      %v2012 = vor.u32 %v2009, %v2010
      %v2013 = vsel %vm1670, %v2005, %v2012
      %v2015 = vshrl.u32 %v1971, 16
      %v2017 = vrot.slane %v2015, 7
      %v2018 = vrot.slane %v2017, 4
      %v2020 = vshrl.u32 %v1972, 16
      %v2022 = vrot.slane %v2020, 7
      %v2023 = vshll.u32 %v1972, 16
      %v2025 = vor.u32 %v2022, %v2023
      %v2026 = vsel %vm1670, %v2018, %v2025
      %v2027 = vrot.slane %v2022, 4
      %v2029 = vshrl.u32 %v1973, 16
      %v2031 = vrot.slane %v2029, 7
      %v2032 = vshll.u32 %v1973, 16
      %v2034 = vor.u32 %v2031, %v2032
      %v2035 = vsel %vm1670, %v2027, %v2034
      %v2037 = vshrl.u32 %v1974, 16
      %v2039 = vrot.slane %v2037, 7
      %v2040 = vrot.slane %v2039, 4
      %v2042 = vshrl.u32 %v1975, 16
      %v2044 = vrot.slane %v2042, 7
      %v2045 = vshll.u32 %v1975, 16
      %v2047 = vor.u32 %v2044, %v2045
      %v2048 = vsel %vm1670, %v2040, %v2047
      %v2049 = vrot.slane %v2044, 4
      %v2051 = vshrl.u32 %v1976, 16
      %v2053 = vrot.slane %v2051, 7
      %v2054 = vshll.u32 %v1976, 16
      %v2056 = vor.u32 %v2053, %v2054
      %v2057 = vsel %vm1670, %v2049, %v2056
      %v2059 = vshrl.u32 %v1977, 16
      %v2061 = vrot.slane %v2059, 7
      %v2062 = vrot.slane %v2061, 4
      %v2064 = vshrl.u32 %v1978, 16
      %v2066 = vrot.slane %v2064, 7
      %v2067 = vshll.u32 %v1978, 16
      %v2069 = vor.u32 %v2066, %v2067
      %v2070 = vsel %vm1670, %v2062, %v2069
      %v2071 = vrot.slane %v2066, 4
      %v2073 = vshrl.u32 %v1979, 16
      %v2075 = vrot.slane %v2073, 7
      %v2076 = vshll.u32 %v1979, 16
      %v2078 = vor.u32 %v2075, %v2076
      %v2079 = vsel %vm1670, %v2071, %v2078
      %v2081 = vshrl.u32 %v1980, 16
      %v2083 = vrot.slane %v2081, 7
      %v2084 = vrot.slane %v2083, 4
      %v2086 = vshrl.u32 %v1981, 16
      %v2088 = vrot.slane %v2086, 7
      %v2089 = vshll.u32 %v1981, 16
      %v2091 = vor.u32 %v2088, %v2089
      %v2092 = vsel %vm1670, %v2084, %v2091
      %v2093 = vrot.slane %v2088, 4
      %v2095 = vshrl.u32 %v1982, 16
      %v2097 = vrot.slane %v2095, 7
      %v2098 = vshll.u32 %v1982, 16
      %v2100 = vor.u32 %v2097, %v2098
      %v2101 = vsel %vm1670, %v2093, %v2100
      %v2103 = vshrl.u32 %v1983, 16
      %v2105 = vrot.slane %v2103, 7
      %v2106 = vrot.slane %v2105, 4
      %v2108 = vshrl.u32 %v1984, 16
      %v2110 = vrot.slane %v2108, 7
      %v2111 = vshll.u32 %v1984, 16
      %v2113 = vor.u32 %v2110, %v2111
      %v2114 = vsel %vm1670, %v2106, %v2113
      %v2115 = vrot.slane %v2110, 4
      %v2117 = vshrl.u32 %v1985, 16
      %v2119 = vrot.slane %v2117, 7
      %v2120 = vshll.u32 %v1985, 16
      %v2122 = vor.u32 %v2119, %v2120
      %v2123 = vsel %vm1670, %v2115, %v2122
      %v2125 = vshrl.u32 %v1986, 16
      %v2127 = vrot.slane %v2125, 7
      %v2128 = vrot.slane %v2127, 4
      %v2130 = vshrl.u32 %v1987, 16
      %v2132 = vrot.slane %v2130, 7
      %v2133 = vshll.u32 %v1987, 16
      %v2135 = vor.u32 %v2132, %v2133
      %v2136 = vsel %vm1670, %v2128, %v2135
      %v2137 = vrot.slane %v2132, 4
      %v2139 = vshrl.u32 %v1988, 16
      %v2141 = vrot.slane %v2139, 7
      %v2142 = vshll.u32 %v1988, 16
      %v2144 = vor.u32 %v2141, %v2142
      %v2145 = vsel %vm1670, %v2137, %v2144
      %v2147 = vshrl.u32 %v1989, 16
      %v2149 = vrot.slane %v2147, 7
      %v2150 = vrot.slane %v2149, 4
      %v2152 = vshrl.u32 %v1990, 16
      %v2154 = vrot.slane %v2152, 7
      %v2155 = vshll.u32 %v1990, 16
      %v2157 = vor.u32 %v2154, %v2155
      %v2158 = vsel %vm1670, %v2150, %v2157
      %v2159 = vrot.slane %v2154, 4
      %v2161 = vshrl.u32 %v1991, 16
      %v2163 = vrot.slane %v2161, 7
      %v2164 = vshll.u32 %v1991, 16
      %v2166 = vor.u32 %v2163, %v2164
      %v2167 = vsel %vm1670, %v2159, %v2166
      %v2168 = vld [vmem:[%s1967 + $0x10] sm:$0x1]
      %v2169 = vld [vmem:[%s1967 + $0x24] sm:$0x1]
      %v2170 = vld [vmem:[%s1967 + $0x38] sm:$0x1]
      %v2171 = vld [vmem:[%s1967 + $0x4c] sm:$0x1]
      %v2172 = vld [vmem:[%s1967 + $0x60] sm:$0x1]
      %v2173 = vld [vmem:[%s1967 + $0x74] sm:$0x1]
      %v2174 = vld [vmem:[%s1967 + $0x88] sm:$0x1]
      %v2175 = vld [vmem:[%s1967 + $0x9c] sm:$0x1]
      %v2176 = vrot.slane %v1998, 4
      %v2177 = vrot.slane %v2001, 5
      %v2178 = vor.u32 %v2176, %v2177
      %v2179 = vrot.slane %v2178, 4
      %v2180 = vrot.slane %v2010, 5
      %v2181 = vsel %vm292, %v2179, %v2180
      %v2182 = vrot.slane %v2007, 4
      %v2183 = vor.u32 %v2182, %v2180
      %v2184 = vrot.slane %v2183, 4
      %v2186 = vshll.u32 %v2168, 16
      %v2188 = vrot.slane %v2186, 5
      %v2189 = vsel %vm292, %v2184, %v2188
      %v2190 = vrot.slane %v2020, 4
      %v2191 = vrot.slane %v2023, 5
      %v2192 = vor.u32 %v2190, %v2191
      %v2193 = vrot.slane %v2192, 4
      %v2194 = vrot.slane %v2032, 5
      %v2195 = vsel %vm292, %v2193, %v2194
      %v2196 = vrot.slane %v2029, 4
      %v2197 = vor.u32 %v2196, %v2194
      %v2198 = vrot.slane %v2197, 4
      %v2200 = vshll.u32 %v2169, 16
      %v2202 = vrot.slane %v2200, 5
      %v2203 = vsel %vm292, %v2198, %v2202
      %v2204 = vrot.slane %v2042, 4
      %v2205 = vrot.slane %v2045, 5
      %v2206 = vor.u32 %v2204, %v2205
      %v2207 = vrot.slane %v2206, 4
      %v2208 = vrot.slane %v2054, 5
      %v2209 = vsel %vm292, %v2207, %v2208
      %v2210 = vrot.slane %v2051, 4
      %v2211 = vor.u32 %v2210, %v2208
      %v2212 = vrot.slane %v2211, 4
      %v2214 = vshll.u32 %v2170, 16
      %v2216 = vrot.slane %v2214, 5
      %v2217 = vsel %vm292, %v2212, %v2216
      %v2218 = vrot.slane %v2064, 4
      %v2219 = vrot.slane %v2067, 5
      %v2220 = vor.u32 %v2218, %v2219
      %v2221 = vrot.slane %v2220, 4
      %v2222 = vrot.slane %v2076, 5
      %v2223 = vsel %vm292, %v2221, %v2222
      %v2224 = vrot.slane %v2073, 4
      %v2225 = vor.u32 %v2224, %v2222
      %v2226 = vrot.slane %v2225, 4
      %v2228 = vshll.u32 %v2171, 16
      %v2230 = vrot.slane %v2228, 5
      %v2231 = vsel %vm292, %v2226, %v2230
      %v2232 = vrot.slane %v2086, 4
      %v2233 = vrot.slane %v2089, 5
      %v2234 = vor.u32 %v2232, %v2233
      %v2235 = vrot.slane %v2234, 4
      %v2236 = vrot.slane %v2098, 5
      %v2237 = vsel %vm292, %v2235, %v2236
      %v2238 = vrot.slane %v2095, 4
      %v2239 = vor.u32 %v2238, %v2236
      %v2240 = vrot.slane %v2239, 4
      %v2242 = vshll.u32 %v2172, 16
      %v2244 = vrot.slane %v2242, 5
      %v2245 = vsel %vm292, %v2240, %v2244
      %v2246 = vrot.slane %v2108, 4
      %v2247 = vrot.slane %v2111, 5
      %v2248 = vor.u32 %v2246, %v2247
      %v2249 = vrot.slane %v2248, 4
      %v2250 = vrot.slane %v2120, 5
      %v2251 = vsel %vm292, %v2249, %v2250
      %v2252 = vrot.slane %v2117, 4
      %v2253 = vor.u32 %v2252, %v2250
      %v2254 = vrot.slane %v2253, 4
      %v2256 = vshll.u32 %v2173, 16
      %v2258 = vrot.slane %v2256, 5
      %v2259 = vsel %vm292, %v2254, %v2258
      %v2260 = vrot.slane %v2130, 4
      %v2261 = vrot.slane %v2133, 5
      %v2262 = vor.u32 %v2260, %v2261
      %v2263 = vrot.slane %v2262, 4
      %v2264 = vrot.slane %v2142, 5
      %v2265 = vsel %vm292, %v2263, %v2264
      %v2266 = vrot.slane %v2139, 4
      %v2267 = vor.u32 %v2266, %v2264
      %v2268 = vrot.slane %v2267, 4
      %v2270 = vshll.u32 %v2174, 16
      %v2272 = vrot.slane %v2270, 5
      %v2273 = vsel %vm292, %v2268, %v2272
      %v2274 = vrot.slane %v2152, 4
      %v2275 = vrot.slane %v2155, 5
      %v2276 = vor.u32 %v2274, %v2275
      %v2277 = vrot.slane %v2276, 4
      %v2278 = vrot.slane %v2164, 5
      %v2279 = vsel %vm292, %v2277, %v2278
      %v2280 = vrot.slane %v2161, 4
      %v2281 = vor.u32 %v2280, %v2278
      %v2282 = vrot.slane %v2281, 4
      %v2284 = vshll.u32 %v2175, 16
      %v2286 = vrot.slane %v2284, 5
      %v2287 = vsel %vm292, %v2282, %v2286
      %s2288 = scalar_lea.vmem [#allocation2], 40
      %v2289 = vld [vmem:[%s2288 + $0x4] sm:$0x8]
      %v2290 = vld [vmem:[%s2288 + $0x8] sm:$0xf]
      %v2291 = vld [vmem:[%s2288 + $0xc] sm:$0xf]
      %v2292 = vld [vmem:[%s2288 + $0x18] sm:$0x8]
      %v2293 = vld [vmem:[%s2288 + $0x1c] sm:$0xf]
      %v2294 = vld [vmem:[%s2288 + $0x20] sm:$0xf]
      %v2295 = vld [vmem:[%s2288 + $0x2c] sm:$0x8]
      %v2296 = vld [vmem:[%s2288 + $0x30] sm:$0xf]
      %v2297 = vld [vmem:[%s2288 + $0x34] sm:$0xf]
      %v2298 = vld [vmem:[%s2288 + $0x40] sm:$0x8]
      %v2299 = vld [vmem:[%s2288 + $0x44] sm:$0xf]
      %v2300 = vld [vmem:[%s2288 + $0x48] sm:$0xf]
      %v2301 = vld [vmem:[%s2288 + $0x54] sm:$0x8]
      %v2302 = vld [vmem:[%s2288 + $0x58] sm:$0xf]
      %v2303 = vld [vmem:[%s2288 + $0x5c] sm:$0xf]
      %v2304 = vld [vmem:[%s2288 + $0x68] sm:$0x8]
      %v2305 = vld [vmem:[%s2288 + $0x6c] sm:$0xf]
      %v2306 = vld [vmem:[%s2288 + $0x70] sm:$0xf]
      %v2307 = vld [vmem:[%s2288 + $0x7c] sm:$0x8]
      %v2308 = vld [vmem:[%s2288 + $0x80] sm:$0xf]
      %v2309 = vld [vmem:[%s2288 + $0x84] sm:$0xf]
      %v2310 = vld [vmem:[%s2288 + $0x90] sm:$0x8]
      %v2311 = vld [vmem:[%s2288 + $0x94] sm:$0xf]
      %v2312 = vld [vmem:[%s2288 + $0x98] sm:$0xf]
      %v2314 = vshrl.u32 %v2289, 16
      %v2316 = vrot.slane %v2314, 7
      %v2317 = vrot.slane %v2316, 4
      %v2319 = vshrl.u32 %v2290, 16
      %v2321 = vrot.slane %v2319, 7
      %v2322 = vshll.u32 %v2290, 16
      %v2324 = vor.u32 %v2321, %v2322
      %v2325 = vsel %vm1670, %v2317, %v2324
      %v2326 = vrot.slane %v2321, 4
      %v2328 = vshrl.u32 %v2291, 16
      %v2330 = vrot.slane %v2328, 7
      %v2331 = vshll.u32 %v2291, 16
      %v2333 = vor.u32 %v2330, %v2331
      %v2334 = vsel %vm1670, %v2326, %v2333
      %v2336 = vshrl.u32 %v2292, 16
      %v2338 = vrot.slane %v2336, 7
      %v2339 = vrot.slane %v2338, 4
      %v2341 = vshrl.u32 %v2293, 16
      %v2343 = vrot.slane %v2341, 7
      %v2344 = vshll.u32 %v2293, 16
      %v2346 = vor.u32 %v2343, %v2344
      %v2347 = vsel %vm1670, %v2339, %v2346
      %v2348 = vrot.slane %v2343, 4
      %v2350 = vshrl.u32 %v2294, 16
      %v2352 = vrot.slane %v2350, 7
      %v2353 = vshll.u32 %v2294, 16
      %v2355 = vor.u32 %v2352, %v2353
      %v2356 = vsel %vm1670, %v2348, %v2355
      %v2358 = vshrl.u32 %v2295, 16
      %v2360 = vrot.slane %v2358, 7
      %v2361 = vrot.slane %v2360, 4
      %v2363 = vshrl.u32 %v2296, 16
      %v2365 = vrot.slane %v2363, 7
      %v2366 = vshll.u32 %v2296, 16
      %v2368 = vor.u32 %v2365, %v2366
      %v2369 = vsel %vm1670, %v2361, %v2368
      %v2370 = vrot.slane %v2365, 4
      %v2372 = vshrl.u32 %v2297, 16
      %v2374 = vrot.slane %v2372, 7
      %v2375 = vshll.u32 %v2297, 16
      %v2377 = vor.u32 %v2374, %v2375
      %v2378 = vsel %vm1670, %v2370, %v2377
      %v2380 = vshrl.u32 %v2298, 16
      %v2382 = vrot.slane %v2380, 7
      %v2383 = vrot.slane %v2382, 4
      %v2385 = vshrl.u32 %v2299, 16
      %v2387 = vrot.slane %v2385, 7
      %v2388 = vshll.u32 %v2299, 16
      %v2390 = vor.u32 %v2387, %v2388
      %v2391 = vsel %vm1670, %v2383, %v2390
      %v2392 = vrot.slane %v2387, 4
      %v2394 = vshrl.u32 %v2300, 16
      %v2396 = vrot.slane %v2394, 7
      %v2397 = vshll.u32 %v2300, 16
      %v2399 = vor.u32 %v2396, %v2397
      %v2400 = vsel %vm1670, %v2392, %v2399
      %v2402 = vshrl.u32 %v2301, 16
      %v2404 = vrot.slane %v2402, 7
      %v2405 = vrot.slane %v2404, 4
      %v2407 = vshrl.u32 %v2302, 16
      %v2409 = vrot.slane %v2407, 7
      %v2410 = vshll.u32 %v2302, 16
      %v2412 = vor.u32 %v2409, %v2410
      %v2413 = vsel %vm1670, %v2405, %v2412
      %v2414 = vrot.slane %v2409, 4
      %v2416 = vshrl.u32 %v2303, 16
      %v2418 = vrot.slane %v2416, 7
      %v2419 = vshll.u32 %v2303, 16
      %v2421 = vor.u32 %v2418, %v2419
      %v2422 = vsel %vm1670, %v2414, %v2421
      %v2424 = vshrl.u32 %v2304, 16
      %v2426 = vrot.slane %v2424, 7
      %v2427 = vrot.slane %v2426, 4
      %v2429 = vshrl.u32 %v2305, 16
      %v2431 = vrot.slane %v2429, 7
      %v2432 = vshll.u32 %v2305, 16
      %v2434 = vor.u32 %v2431, %v2432
      %v2435 = vsel %vm1670, %v2427, %v2434
      %v2436 = vrot.slane %v2431, 4
      %v2438 = vshrl.u32 %v2306, 16
      %v2440 = vrot.slane %v2438, 7
      %v2441 = vshll.u32 %v2306, 16
      %v2443 = vor.u32 %v2440, %v2441
      %v2444 = vsel %vm1670, %v2436, %v2443
      %v2446 = vshrl.u32 %v2307, 16
      %v2448 = vrot.slane %v2446, 7
      %v2449 = vrot.slane %v2448, 4
      %v2451 = vshrl.u32 %v2308, 16
      %v2453 = vrot.slane %v2451, 7
      %v2454 = vshll.u32 %v2308, 16
      %v2456 = vor.u32 %v2453, %v2454
      %v2457 = vsel %vm1670, %v2449, %v2456
      %v2458 = vrot.slane %v2453, 4
      %v2460 = vshrl.u32 %v2309, 16
      %v2462 = vrot.slane %v2460, 7
      %v2463 = vshll.u32 %v2309, 16
      %v2465 = vor.u32 %v2462, %v2463
      %v2466 = vsel %vm1670, %v2458, %v2465
      %v2468 = vshrl.u32 %v2310, 16
      %v2470 = vrot.slane %v2468, 7
      %v2471 = vrot.slane %v2470, 4
      %v2473 = vshrl.u32 %v2311, 16
      %v2475 = vrot.slane %v2473, 7
      %v2476 = vshll.u32 %v2311, 16
      %v2478 = vor.u32 %v2475, %v2476
      %v2479 = vsel %vm1670, %v2471, %v2478
      %v2480 = vrot.slane %v2475, 4
      %v2482 = vshrl.u32 %v2312, 16
      %v2484 = vrot.slane %v2482, 7
      %v2485 = vshll.u32 %v2312, 16
      %v2487 = vor.u32 %v2484, %v2485
      %v2488 = vsel %vm1670, %v2480, %v2487
      %v2489 = vld [vmem:[%s2288 + $0x10] sm:$0x1]
      %v2490 = vld [vmem:[%s2288 + $0x24] sm:$0x1]
      %v2491 = vld [vmem:[%s2288 + $0x38] sm:$0x1]
      %v2492 = vld [vmem:[%s2288 + $0x4c] sm:$0x1]
      %v2493 = vld [vmem:[%s2288 + $0x60] sm:$0x1]
      %v2494 = vld [vmem:[%s2288 + $0x74] sm:$0x1]
      %v2495 = vld [vmem:[%s2288 + $0x88] sm:$0x1]
      %v2496 = vld [vmem:[%s2288 + $0x9c] sm:$0x1]
      %v2497 = vrot.slane %v2319, 4
      %v2498 = vrot.slane %v2322, 5
      %v2499 = vor.u32 %v2497, %v2498
      %v2500 = vrot.slane %v2499, 4
      %v2501 = vrot.slane %v2331, 5
      %v2502 = vsel %vm292, %v2500, %v2501
      %v2503 = vrot.slane %v2328, 4
      %v2504 = vor.u32 %v2503, %v2501
      %v2505 = vrot.slane %v2504, 4
      %v2507 = vshll.u32 %v2489, 16
      %v2509 = vrot.slane %v2507, 5
      %v2510 = vsel %vm292, %v2505, %v2509
      %v2511 = vrot.slane %v2341, 4
      %v2512 = vrot.slane %v2344, 5
      %v2513 = vor.u32 %v2511, %v2512
      %v2514 = vrot.slane %v2513, 4
      %v2515 = vrot.slane %v2353, 5
      %v2516 = vsel %vm292, %v2514, %v2515
      %v2517 = vrot.slane %v2350, 4
      %v2518 = vor.u32 %v2517, %v2515
      %v2519 = vrot.slane %v2518, 4
      %v2521 = vshll.u32 %v2490, 16
      %v2523 = vrot.slane %v2521, 5
      %v2524 = vsel %vm292, %v2519, %v2523
      %v2525 = vrot.slane %v2363, 4
      %v2526 = vrot.slane %v2366, 5
      %v2527 = vor.u32 %v2525, %v2526
      %v2528 = vrot.slane %v2527, 4
      %v2529 = vrot.slane %v2375, 5
      %v2530 = vsel %vm292, %v2528, %v2529
      %v2531 = vrot.slane %v2372, 4
      %v2532 = vor.u32 %v2531, %v2529
      %v2533 = vrot.slane %v2532, 4
      %v2535 = vshll.u32 %v2491, 16
      %v2537 = vrot.slane %v2535, 5
      %v2538 = vsel %vm292, %v2533, %v2537
      %v2539 = vrot.slane %v2385, 4
      %v2540 = vrot.slane %v2388, 5
      %v2541 = vor.u32 %v2539, %v2540
      %v2542 = vrot.slane %v2541, 4
      %v2543 = vrot.slane %v2397, 5
      %v2544 = vsel %vm292, %v2542, %v2543
      %v2545 = vrot.slane %v2394, 4
      %v2546 = vor.u32 %v2545, %v2543
      %v2547 = vrot.slane %v2546, 4
      %v2549 = vshll.u32 %v2492, 16
      %v2551 = vrot.slane %v2549, 5
      %v2552 = vsel %vm292, %v2547, %v2551
      %v2553 = vrot.slane %v2407, 4
      %v2554 = vrot.slane %v2410, 5
      %v2555 = vor.u32 %v2553, %v2554
      %v2556 = vrot.slane %v2555, 4
      %v2557 = vrot.slane %v2419, 5
      %v2558 = vsel %vm292, %v2556, %v2557
      %v2559 = vrot.slane %v2416, 4
      %v2560 = vor.u32 %v2559, %v2557
      %v2561 = vrot.slane %v2560, 4
      %v2563 = vshll.u32 %v2493, 16
      %v2565 = vrot.slane %v2563, 5
      %v2566 = vsel %vm292, %v2561, %v2565
      %v2567 = vrot.slane %v2429, 4
      %v2568 = vrot.slane %v2432, 5
      %v2569 = vor.u32 %v2567, %v2568
      %v2570 = vrot.slane %v2569, 4
      %v2571 = vrot.slane %v2441, 5
      %v2572 = vsel %vm292, %v2570, %v2571
      %v2573 = vrot.slane %v2438, 4
      %v2574 = vor.u32 %v2573, %v2571
      %v2575 = vrot.slane %v2574, 4
      %v2577 = vshll.u32 %v2494, 16
      %v2579 = vrot.slane %v2577, 5
      %v2580 = vsel %vm292, %v2575, %v2579
      %v2581 = vrot.slane %v2451, 4
      %v2582 = vrot.slane %v2454, 5
      %v2583 = vor.u32 %v2581, %v2582
      %v2584 = vrot.slane %v2583, 4
      %v2585 = vrot.slane %v2463, 5
      %v2586 = vsel %vm292, %v2584, %v2585
      %v2587 = vrot.slane %v2460, 4
      %v2588 = vor.u32 %v2587, %v2585
      %v2589 = vrot.slane %v2588, 4
      %v2591 = vshll.u32 %v2495, 16
      %v2593 = vrot.slane %v2591, 5
      %v2594 = vsel %vm292, %v2589, %v2593
      %v2595 = vrot.slane %v2473, 4
      %v2596 = vrot.slane %v2476, 5
      %v2597 = vor.u32 %v2595, %v2596
      %v2598 = vrot.slane %v2597, 4
      %v2599 = vrot.slane %v2485, 5
      %v2600 = vsel %vm292, %v2598, %v2599
      %v2601 = vrot.slane %v2482, 4
      %v2602 = vor.u32 %v2601, %v2599
      %v2603 = vrot.slane %v2602, 4
      %v2605 = vshll.u32 %v2496, 16
      %v2607 = vrot.slane %v2605, 5
      %v2608 = vsel %vm292, %v2603, %v2607
      %v2609 = vunpack.c.l.b16 %v1683
      %v2610 = vunpack.c.l.b16 %v1692
      %v2611 = vunpack.c.l.b16 %v1705
      %v2612 = vunpack.c.l.b16 %v1714
      %v2613 = vunpack.c.l.b16 %v1727
      %v2614 = vunpack.c.l.b16 %v1736
      %v2615 = vunpack.c.l.b16 %v1749
      %v2616 = vunpack.c.l.b16 %v1758
      %v2617 = vunpack.c.l.b16 %v1771
      %v2618 = vunpack.c.l.b16 %v1780
      %v2619 = vunpack.c.l.b16 %v1793
      %v2620 = vunpack.c.l.b16 %v1802
      %v2621 = vunpack.c.l.b16 %v1815
      %v2622 = vunpack.c.l.b16 %v1824
      %v2623 = vunpack.c.l.b16 %v1837
      %v2624 = vunpack.c.l.b16 %v1846
      %v2625 = vpack.c.b16 %v2610, %v2609
      %v2626 = vpack.c.b16 %v2612, %v2611
      %v2627 = vpack.c.b16 %v2614, %v2613
      %v2628 = vpack.c.b16 %v2616, %v2615
      %v2629 = vpack.c.b16 %v2618, %v2617
      %v2630 = vpack.c.b16 %v2620, %v2619
      %v2631 = vpack.c.b16 %v2622, %v2621
      %v2632 = vpack.c.b16 %v2624, %v2623
      %v2657 = vunpack.c.l.b16 %v1646
      %v2658 = vunpack.c.l.b16 %v1647
      %v2659 = vunpack.c.l.b16 %v1649
      %v2660 = vunpack.c.l.b16 %v1650
      %v2661 = vunpack.c.l.b16 %v1652
      %v2662 = vunpack.c.l.b16 %v1653
      %v2663 = vunpack.c.l.b16 %v1655
      %v2664 = vunpack.c.l.b16 %v1656
      %v2665 = vunpack.c.l.b16 %v1658
      %v2666 = vunpack.c.l.b16 %v1659
      %v2667 = vunpack.c.l.b16 %v1661
      %v2668 = vunpack.c.l.b16 %v1662
      %v2669 = vunpack.c.l.b16 %v1664
      %v2670 = vunpack.c.l.b16 %v1665
      %v2671 = vunpack.c.l.b16 %v1667
      %v2672 = vunpack.c.l.b16 %v1668
      %v2673 = vpack.c.b16 %v2658, %v2657
      %v2674 = vpack.c.b16 %v2660, %v2659
      %v2675 = vpack.c.b16 %v2662, %v2661
      %v2676 = vpack.c.b16 %v2664, %v2663
      %v2677 = vpack.c.b16 %v2666, %v2665
      %v2678 = vpack.c.b16 %v2668, %v2667
      %v2679 = vpack.c.b16 %v2670, %v2669
      %v2680 = vpack.c.b16 %v2672, %v2671
      %v2689 = vunpack.c.l.b16 %v1860
      %v2690 = vunpack.c.l.b16 %v1868
      %v2691 = vunpack.c.l.b16 %v1874
      %v2692 = vunpack.c.l.b16 %v1882
      %v2693 = vunpack.c.l.b16 %v1888
      %v2694 = vunpack.c.l.b16 %v1896
      %v2695 = vunpack.c.l.b16 %v1902
      %v2696 = vunpack.c.l.b16 %v1910
      %v2697 = vunpack.c.l.b16 %v1916
      %v2698 = vunpack.c.l.b16 %v1924
      %v2699 = vunpack.c.l.b16 %v1930
      %v2700 = vunpack.c.l.b16 %v1938
      %v2701 = vunpack.c.l.b16 %v1944
      %v2702 = vunpack.c.l.b16 %v1952
      %v2703 = vunpack.c.l.b16 %v1958
      %v2704 = vunpack.c.l.b16 %v1966
      %v2705 = vpack.c.b16 %v2690, %v2689
      %v2706 = vpack.c.b16 %v2692, %v2691
      %v2707 = vpack.c.b16 %v2694, %v2693
      %v2708 = vpack.c.b16 %v2696, %v2695
      %v2709 = vpack.c.b16 %v2698, %v2697
      %v2710 = vpack.c.b16 %v2700, %v2699
      %v2711 = vpack.c.b16 %v2702, %v2701
      %v2712 = vpack.c.b16 %v2704, %v2703
      %v2721 = vunpack.c.l.b16 %v2004
      %v2722 = vunpack.c.l.b16 %v2013
      %v2723 = vunpack.c.l.b16 %v2026
      %v2724 = vunpack.c.l.b16 %v2035
      %v2725 = vunpack.c.l.b16 %v2048
      %v2726 = vunpack.c.l.b16 %v2057
      %v2727 = vunpack.c.l.b16 %v2070
      %v2728 = vunpack.c.l.b16 %v2079
      %v2729 = vunpack.c.l.b16 %v2092
      %v2730 = vunpack.c.l.b16 %v2101
      %v2731 = vunpack.c.l.b16 %v2114
      %v2732 = vunpack.c.l.b16 %v2123
      %v2733 = vunpack.c.l.b16 %v2136
      %v2734 = vunpack.c.l.b16 %v2145
      %v2735 = vunpack.c.l.b16 %v2158
      %v2736 = vunpack.c.l.b16 %v2167
      %v2737 = vpack.c.b16 %v2722, %v2721
      %v2738 = vpack.c.b16 %v2724, %v2723
      %v2739 = vpack.c.b16 %v2726, %v2725
      %v2740 = vpack.c.b16 %v2728, %v2727
      %v2741 = vpack.c.b16 %v2730, %v2729
      %v2742 = vpack.c.b16 %v2732, %v2731
      %v2743 = vpack.c.b16 %v2734, %v2733
      %v2744 = vpack.c.b16 %v2736, %v2735
      %v2769 = vunpack.c.l.b16 %v1969
      %v2770 = vunpack.c.l.b16 %v1970
      %v2771 = vunpack.c.l.b16 %v1972
      %v2772 = vunpack.c.l.b16 %v1973
      %v2773 = vunpack.c.l.b16 %v1975
      %v2774 = vunpack.c.l.b16 %v1976
      %v2775 = vunpack.c.l.b16 %v1978
      %v2776 = vunpack.c.l.b16 %v1979
      %v2777 = vunpack.c.l.b16 %v1981
      %v2778 = vunpack.c.l.b16 %v1982
      %v2779 = vunpack.c.l.b16 %v1984
      %v2780 = vunpack.c.l.b16 %v1985
      %v2781 = vunpack.c.l.b16 %v1987
      %v2782 = vunpack.c.l.b16 %v1988
      %v2783 = vunpack.c.l.b16 %v1990
      %v2784 = vunpack.c.l.b16 %v1991
      %v2785 = vpack.c.b16 %v2770, %v2769
      %v2786 = vpack.c.b16 %v2772, %v2771
      %v2787 = vpack.c.b16 %v2774, %v2773
      %v2788 = vpack.c.b16 %v2776, %v2775
      %v2789 = vpack.c.b16 %v2778, %v2777
      %v2790 = vpack.c.b16 %v2780, %v2779
      %v2791 = vpack.c.b16 %v2782, %v2781
      %v2792 = vpack.c.b16 %v2784, %v2783
      %v2801 = vunpack.c.l.b16 %v2181
      %v2802 = vunpack.c.l.b16 %v2189
      %v2803 = vunpack.c.l.b16 %v2195
      %v2804 = vunpack.c.l.b16 %v2203
      %v2805 = vunpack.c.l.b16 %v2209
      %v2806 = vunpack.c.l.b16 %v2217
      %v2807 = vunpack.c.l.b16 %v2223
      %v2808 = vunpack.c.l.b16 %v2231
      %v2809 = vunpack.c.l.b16 %v2237
      %v2810 = vunpack.c.l.b16 %v2245
      %v2811 = vunpack.c.l.b16 %v2251
      %v2812 = vunpack.c.l.b16 %v2259
      %v2813 = vunpack.c.l.b16 %v2265
      %v2814 = vunpack.c.l.b16 %v2273
      %v2815 = vunpack.c.l.b16 %v2279
      %v2816 = vunpack.c.l.b16 %v2287
      %v2817 = vpack.c.b16 %v2802, %v2801
      %v2818 = vpack.c.b16 %v2804, %v2803
      %v2819 = vpack.c.b16 %v2806, %v2805
      %v2820 = vpack.c.b16 %v2808, %v2807
      %v2821 = vpack.c.b16 %v2810, %v2809
      %v2822 = vpack.c.b16 %v2812, %v2811
      %v2823 = vpack.c.b16 %v2814, %v2813
      %v2824 = vpack.c.b16 %v2816, %v2815
      %v2833 = vunpack.c.l.b16 %v2325
      %v2834 = vunpack.c.l.b16 %v2334
      %v2835 = vunpack.c.l.b16 %v2347
      %v2836 = vunpack.c.l.b16 %v2356
      %v2837 = vunpack.c.l.b16 %v2369
      %v2838 = vunpack.c.l.b16 %v2378
      %v2839 = vunpack.c.l.b16 %v2391
      %v2840 = vunpack.c.l.b16 %v2400
      %v2841 = vunpack.c.l.b16 %v2413
      %v2842 = vunpack.c.l.b16 %v2422
      %v2843 = vunpack.c.l.b16 %v2435
      %v2844 = vunpack.c.l.b16 %v2444
      %v2845 = vunpack.c.l.b16 %v2457
      %v2846 = vunpack.c.l.b16 %v2466
      %v2847 = vunpack.c.l.b16 %v2479
      %v2848 = vunpack.c.l.b16 %v2488
      %v2849 = vpack.c.b16 %v2834, %v2833
      %v2850 = vpack.c.b16 %v2836, %v2835
      %v2851 = vpack.c.b16 %v2838, %v2837
      %v2852 = vpack.c.b16 %v2840, %v2839
      %v2853 = vpack.c.b16 %v2842, %v2841
      %v2854 = vpack.c.b16 %v2844, %v2843
      %v2855 = vpack.c.b16 %v2846, %v2845
      %v2856 = vpack.c.b16 %v2848, %v2847
      %v2881 = vunpack.c.l.b16 %v2290
      %v2882 = vunpack.c.l.b16 %v2291
      %v2883 = vunpack.c.l.b16 %v2293
      %v2884 = vunpack.c.l.b16 %v2294
      %v2885 = vunpack.c.l.b16 %v2296
      %v2886 = vunpack.c.l.b16 %v2297
      %v2887 = vunpack.c.l.b16 %v2299
      %v2888 = vunpack.c.l.b16 %v2300
      %v2889 = vunpack.c.l.b16 %v2302
      %v2890 = vunpack.c.l.b16 %v2303
      %v2891 = vunpack.c.l.b16 %v2305
      %v2892 = vunpack.c.l.b16 %v2306
      %v2893 = vunpack.c.l.b16 %v2308
      %v2894 = vunpack.c.l.b16 %v2309
      %v2895 = vunpack.c.l.b16 %v2311
      %v2896 = vunpack.c.l.b16 %v2312
      %v2897 = vpack.c.b16 %v2882, %v2881
      %v2898 = vpack.c.b16 %v2884, %v2883
      %v2899 = vpack.c.b16 %v2886, %v2885
      %v2900 = vpack.c.b16 %v2888, %v2887
      %v2901 = vpack.c.b16 %v2890, %v2889
      %v2902 = vpack.c.b16 %v2892, %v2891
      %v2903 = vpack.c.b16 %v2894, %v2893
      %v2904 = vpack.c.b16 %v2896, %v2895
      %v2913 = vunpack.c.l.b16 %v2502
      %v2914 = vunpack.c.l.b16 %v2510
      %v2915 = vunpack.c.l.b16 %v2516
      %v2916 = vunpack.c.l.b16 %v2524
      %v2917 = vunpack.c.l.b16 %v2530
      %v2918 = vunpack.c.l.b16 %v2538
      %v2919 = vunpack.c.l.b16 %v2544
      %v2920 = vunpack.c.l.b16 %v2552
      %v2921 = vunpack.c.l.b16 %v2558
      %v2922 = vunpack.c.l.b16 %v2566
      %v2923 = vunpack.c.l.b16 %v2572
      %v2924 = vunpack.c.l.b16 %v2580
      %v2925 = vunpack.c.l.b16 %v2586
      %v2926 = vunpack.c.l.b16 %v2594
      %v2927 = vunpack.c.l.b16 %v2600
      %v2928 = vunpack.c.l.b16 %v2608
      %v2929 = vpack.c.b16 %v2914, %v2913
      %v2930 = vpack.c.b16 %v2916, %v2915
      %v2931 = vpack.c.b16 %v2918, %v2917
      %v2932 = vpack.c.b16 %v2920, %v2919
      %v2933 = vpack.c.b16 %v2922, %v2921
      %v2934 = vpack.c.b16 %v2924, %v2923
      %v2935 = vpack.c.b16 %v2926, %v2925
      %v2936 = vpack.c.b16 %v2928, %v2927
      %v2945 = vld [vmem:[%s3] sm:$0xff]
      %v2946 = vld [vmem:[%s3 + $0x8] sm:$0xff]
      %v2947 = vld [vmem:[%s3 + $0x10] sm:$0xff]
      %v2948 = vld [vmem:[%s3 + $0x18] sm:$0xff]
      %v2949 = vld [vmem:[%s3 + $0x20] sm:$0xf]
      %v2950 = vld [vmem:[%s3 + $0x24] sm:$0xff]
      %v2951 = vld [vmem:[%s3 + $0x2c] sm:$0xff]
      %v2952 = vld [vmem:[%s3 + $0x34] sm:$0xff]
      %v2953 = vld [vmem:[%s3 + $0x3c] sm:$0xff]
      %v2954 = vld [vmem:[%s3 + $0x44] sm:$0xf]
      %v2955 = vld [vmem:[%s3 + $0x48] sm:$0xff]
      %v2956 = vld [vmem:[%s3 + $0x50] sm:$0xff]
      %v2957 = vld [vmem:[%s3 + $0x58] sm:$0xff]
      %v2958 = vld [vmem:[%s3 + $0x60] sm:$0xff]
      %v2959 = vld [vmem:[%s3 + $0x68] sm:$0xf]
      %v2960 = vld [vmem:[%s3 + $0x6c] sm:$0xff]
      %v2961 = vld [vmem:[%s3 + $0x74] sm:$0xff]
      %v2962 = vld [vmem:[%s3 + $0x7c] sm:$0xff]
      %v2963 = vld [vmem:[%s3 + $0x84] sm:$0xff]
      %v2964 = vld [vmem:[%s3 + $0x8c] sm:$0xf]
      %v2965 = vld [vmem:[%s3 + $0x90] sm:$0xff]
      %v2966 = vld [vmem:[%s3 + $0x98] sm:$0xff]
      %v2967 = vld [vmem:[%s3 + $0xa0] sm:$0xff]
      %v2968 = vld [vmem:[%s3 + $0xa8] sm:$0xff]
      %v2969 = vld [vmem:[%s3 + $0xb0] sm:$0xf]
      %v2970 = vld [vmem:[%s3 + $0xb4] sm:$0xff]
      %v2971 = vld [vmem:[%s3 + $0xbc] sm:$0xff]
      %v2972 = vld [vmem:[%s3 + $0xc4] sm:$0xff]
      %v2973 = vld [vmem:[%s3 + $0xcc] sm:$0xff]
      %v2974 = vld [vmem:[%s3 + $0xd4] sm:$0xf]
      %v2975 = vld [vmem:[%s3 + $0xd8] sm:$0xff]
      %v2976 = vld [vmem:[%s3 + $0xe0] sm:$0xff]
      %v2977 = vld [vmem:[%s3 + $0xe8] sm:$0xff]
      %v2978 = vld [vmem:[%s3 + $0xf0] sm:$0xff]
      %v2979 = vld [vmem:[%s3 + $0xf8] sm:$0xf]
      %v2980 = vld [vmem:[%s3 + $0xfc] sm:$0xff]
      %v2981 = vld [vmem:[%s3 + $0x104] sm:$0xff]
      %v2982 = vld [vmem:[%s3 + $0x10c] sm:$0xff]
      %v2983 = vld [vmem:[%s3 + $0x114] sm:$0xff]
      %v2984 = vld [vmem:[%s3 + $0x11c] sm:$0xf]
      %v2985 = vld [vmem:[%s3 + $0x120] sm:$0xff]
      %v2986 = vld [vmem:[%s3 + $0x128] sm:$0xff]
      %v2987 = vld [vmem:[%s3 + $0x130] sm:$0xff]
      %v2988 = vld [vmem:[%s3 + $0x138] sm:$0xff]
      %v2989 = vld [vmem:[%s3 + $0x140] sm:$0xf]
      %v2990 = vld [vmem:[%s3 + $0x144] sm:$0xff]
      %v2991 = vld [vmem:[%s3 + $0x14c] sm:$0xff]
      %v2992 = vld [vmem:[%s3 + $0x154] sm:$0xff]
      %v2993 = vld [vmem:[%s3 + $0x15c] sm:$0xff]
      %v2994 = vld [vmem:[%s3 + $0x164] sm:$0xf]
      %v2995 = vld [vmem:[%s3 + $0x168] sm:$0xff]
      %v2996 = vld [vmem:[%s3 + $0x170] sm:$0xff]
      %v2997 = vld [vmem:[%s3 + $0x178] sm:$0xff]
      %v2998 = vld [vmem:[%s3 + $0x180] sm:$0xff]
      %v2999 = vld [vmem:[%s3 + $0x188] sm:$0xf]
      %v3000 = vld [vmem:[%s3 + $0x18c] sm:$0xff]
      %v3001 = vld [vmem:[%s3 + $0x194] sm:$0xff]
      %v3002 = vld [vmem:[%s3 + $0x19c] sm:$0xff]
      %v3003 = vld [vmem:[%s3 + $0x1a4] sm:$0xff]
      %v3004 = vld [vmem:[%s3 + $0x1ac] sm:$0xf]
      %v3005 = vld [vmem:[%s3 + $0x1b0] sm:$0xff]
      %v3006 = vld [vmem:[%s3 + $0x1b8] sm:$0xff]
      %v3007 = vld [vmem:[%s3 + $0x1c0] sm:$0xff]
      %v3008 = vld [vmem:[%s3 + $0x1c8] sm:$0xff]
      %v3009 = vld [vmem:[%s3 + $0x1d0] sm:$0xf]
      %v3010 = vld [vmem:[%s3 + $0x1d4] sm:$0xff]
      %v3011 = vld [vmem:[%s3 + $0x1dc] sm:$0xff]
      %v3012 = vld [vmem:[%s3 + $0x1e4] sm:$0xff]
      %v3013 = vld [vmem:[%s3 + $0x1ec] sm:$0xff]
      %v3014 = vld [vmem:[%s3 + $0x1f4] sm:$0xf]
      %v3015 = vld [vmem:[%s3 + $0x1f8] sm:$0xff]
      %v3016 = vld [vmem:[%s3 + $0x200] sm:$0xff]
      %v3017 = vld [vmem:[%s3 + $0x208] sm:$0xff]
      %v3018 = vld [vmem:[%s3 + $0x210] sm:$0xff]
      %v3019 = vld [vmem:[%s3 + $0x218] sm:$0xf]
      %v3020 = vld [vmem:[%s3 + $0x21c] sm:$0xff]
      %v3021 = vld [vmem:[%s3 + $0x224] sm:$0xff]
      %v3022 = vld [vmem:[%s3 + $0x22c] sm:$0xff]
      %v3023 = vld [vmem:[%s3 + $0x234] sm:$0xff]
      %v3024 = vld [vmem:[%s3 + $0x23c] sm:$0xf]
      %v3025 = vld [vmem:[%s4] sm:$0xff]
      %v3026 = vld [vmem:[%s4 + $0x8] sm:$0xff]
      %v3027 = vld [vmem:[%s4 + $0x10] sm:$0xff]
      %v3028 = vld [vmem:[%s4 + $0x18] sm:$0xff]
      %v3029 = vld [vmem:[%s4 + $0x20] sm:$0xff]
      %v3030 = vld [vmem:[%s4 + $0x28] sm:$0xff]
      %v3031 = vld [vmem:[%s4 + $0x30] sm:$0xff]
      %v3032 = vld [vmem:[%s4 + $0x38] sm:$0xff]
      %v3033 = vld [vmem:[%s4 + $0x40] sm:$0xff]
      %v3034 = vld [vmem:[%s4 + $0x48] sm:$0xff]
      %v3035 = vld [vmem:[%s4 + $0x50] sm:$0xff]
      %v3036 = vld [vmem:[%s4 + $0x58] sm:$0xff]
      %v3037 = vld [vmem:[%s4 + $0x60] sm:$0xff]
      %v3038 = vld [vmem:[%s4 + $0x68] sm:$0xff]
      %v3039 = vld [vmem:[%s4 + $0x70] sm:$0xff]
      %v3040 = vld [vmem:[%s4 + $0x78] sm:$0xff]
      %3042 = vset.pattern.permute.xlu0 0
      %3043 = vperm.xlu0 %3042, %v3025
      %v3044 = vpop.permute.xlu0 %3043
      %3047 = vset.pattern.permute.xlu0 0
      %3048 = vperm.xlu0 %3047, %v3026
      %v3049 = vpop.permute.xlu0 %3048
      %3051 = vset.pattern.permute.xlu0 0
      %3052 = vperm.xlu0 %3051, %v3027
      %v3053 = vpop.permute.xlu0 %3052
      %3055 = vset.pattern.permute.xlu0 0
      %3056 = vperm.xlu0 %3055, %v3028
      %v3057 = vpop.permute.xlu0 %3056
      %3059 = vset.pattern.permute.xlu0 0
      %3060 = vperm.xlu0 %3059, %v3029
      %v3061 = vpop.permute.xlu0 %3060
      %3063 = vset.pattern.permute.xlu0 0
      %3064 = vperm.xlu0 %3063, %v3030
      %v3065 = vpop.permute.xlu0 %3064
      %3067 = vset.pattern.permute.xlu0 0
      %3068 = vperm.xlu0 %3067, %v3031
      %v3069 = vpop.permute.xlu0 %3068
      %3071 = vset.pattern.permute.xlu0 0
      %3072 = vperm.xlu0 %3071, %v3032
      %v3073 = vpop.permute.xlu0 %3072
      %3075 = vset.pattern.permute.xlu0 0
      %3076 = vperm.xlu0 %3075, %v3033
      %v3077 = vpop.permute.xlu0 %3076
      %3079 = vset.pattern.permute.xlu0 0
      %3080 = vperm.xlu0 %3079, %v3034
      %v3081 = vpop.permute.xlu0 %3080
      %3083 = vset.pattern.permute.xlu0 0
      %3084 = vperm.xlu0 %3083, %v3035
      %v3085 = vpop.permute.xlu0 %3084
      %3087 = vset.pattern.permute.xlu0 0
      %3088 = vperm.xlu0 %3087, %v3036
      %v3089 = vpop.permute.xlu0 %3088
      %3091 = vset.pattern.permute.xlu0 0
      %3092 = vperm.xlu0 %3091, %v3037
      %v3093 = vpop.permute.xlu0 %3092
      %3095 = vset.pattern.permute.xlu0 0
      %3096 = vperm.xlu0 %3095, %v3038
      %v3097 = vpop.permute.xlu0 %3096
      %3099 = vset.pattern.permute.xlu0 0
      %3100 = vperm.xlu0 %3099, %v3039
      %v3101 = vpop.permute.xlu0 %3100
      %3103 = vset.pattern.permute.xlu0 0
      %3104 = vperm.xlu0 %3103, %v3040
      %v3105 = vpop.permute.xlu0 %3104
      %v3186 = vunpack.c.l.b16 %v2945
      %v3187 = vunpack.c.h.b16 %v2945
      %v3188 = vunpack.c.l.b16 %v2946
      %v3189 = vunpack.c.h.b16 %v2946
      %v3190 = vunpack.c.l.b16 %v2947
      %v3191 = vunpack.c.h.b16 %v2947
      %v3192 = vunpack.c.l.b16 %v2948
      %v3193 = vunpack.c.h.b16 %v2948
      %v3194 = vunpack.c.l.b16 %v2949
      %v3195 = vunpack.c.l.b16 %v2950
      %v3196 = vunpack.c.h.b16 %v2950
      %v3197 = vunpack.c.l.b16 %v2951
      %v3198 = vunpack.c.h.b16 %v2951
      %v3199 = vunpack.c.l.b16 %v2952
      %v3200 = vunpack.c.h.b16 %v2952
      %v3201 = vunpack.c.l.b16 %v2953
      %v3202 = vunpack.c.h.b16 %v2953
      %v3203 = vunpack.c.l.b16 %v2954
      %v3204 = vunpack.c.l.b16 %v2955
      %v3205 = vunpack.c.h.b16 %v2955
      %v3206 = vunpack.c.l.b16 %v2956
      %v3207 = vunpack.c.h.b16 %v2956
      %v3208 = vunpack.c.l.b16 %v2957
      %v3209 = vunpack.c.h.b16 %v2957
      %v3210 = vunpack.c.l.b16 %v2958
      %v3211 = vunpack.c.h.b16 %v2958
      %v3212 = vunpack.c.l.b16 %v2959
      %v3213 = vunpack.c.l.b16 %v2960
      %v3214 = vunpack.c.h.b16 %v2960
      %v3215 = vunpack.c.l.b16 %v2961
      %v3216 = vunpack.c.h.b16 %v2961
      %v3217 = vunpack.c.l.b16 %v2962
      %v3218 = vunpack.c.h.b16 %v2962
      %v3219 = vunpack.c.l.b16 %v2963
      %v3220 = vunpack.c.h.b16 %v2963
      %v3221 = vunpack.c.l.b16 %v2964
      %v3222 = vunpack.c.l.b16 %v2965
      %v3223 = vunpack.c.h.b16 %v2965
      %v3224 = vunpack.c.l.b16 %v2966
      %v3225 = vunpack.c.h.b16 %v2966
      %v3226 = vunpack.c.l.b16 %v2967
      %v3227 = vunpack.c.h.b16 %v2967
      %v3228 = vunpack.c.l.b16 %v2968
      %v3229 = vunpack.c.h.b16 %v2968
      %v3230 = vunpack.c.l.b16 %v2969
      %v3231 = vunpack.c.l.b16 %v2970
      %v3232 = vunpack.c.h.b16 %v2970
      %v3233 = vunpack.c.l.b16 %v2971
      %v3234 = vunpack.c.h.b16 %v2971
      %v3235 = vunpack.c.l.b16 %v2972
      %v3236 = vunpack.c.h.b16 %v2972
      %v3237 = vunpack.c.l.b16 %v2973
      %v3238 = vunpack.c.h.b16 %v2973
      %v3239 = vunpack.c.l.b16 %v2974
      %v3240 = vunpack.c.l.b16 %v2975
      %v3241 = vunpack.c.h.b16 %v2975
      %v3242 = vunpack.c.l.b16 %v2976
      %v3243 = vunpack.c.h.b16 %v2976
      %v3244 = vunpack.c.l.b16 %v2977
      %v3245 = vunpack.c.h.b16 %v2977
      %v3246 = vunpack.c.l.b16 %v2978
      %v3247 = vunpack.c.h.b16 %v2978
      %v3248 = vunpack.c.l.b16 %v2979
      %v3249 = vunpack.c.l.b16 %v2980
      %v3250 = vunpack.c.h.b16 %v2980
      %v3251 = vunpack.c.l.b16 %v2981
      %v3252 = vunpack.c.h.b16 %v2981
      %v3253 = vunpack.c.l.b16 %v2982
      %v3254 = vunpack.c.h.b16 %v2982
      %v3255 = vunpack.c.l.b16 %v2983
      %v3256 = vunpack.c.h.b16 %v2983
      %v3257 = vunpack.c.l.b16 %v2984
      %v3258 = vunpack.c.l.b16 %v2985
      %v3259 = vunpack.c.h.b16 %v2985
      %v3260 = vunpack.c.l.b16 %v2986
      %v3261 = vunpack.c.h.b16 %v2986
      %v3262 = vunpack.c.l.b16 %v2987
      %v3263 = vunpack.c.h.b16 %v2987
      %v3264 = vunpack.c.l.b16 %v2988
      %v3265 = vunpack.c.h.b16 %v2988
      %v3266 = vunpack.c.l.b16 %v2989
      %v3267 = vunpack.c.l.b16 %v2990
      %v3268 = vunpack.c.h.b16 %v2990
      %v3269 = vunpack.c.l.b16 %v2991
      %v3270 = vunpack.c.h.b16 %v2991
      %v3271 = vunpack.c.l.b16 %v2992
      %v3272 = vunpack.c.h.b16 %v2992
      %v3273 = vunpack.c.l.b16 %v2993
      %v3274 = vunpack.c.h.b16 %v2993
      %v3275 = vunpack.c.l.b16 %v2994
      %v3276 = vunpack.c.l.b16 %v2995
      %v3277 = vunpack.c.h.b16 %v2995
      %v3278 = vunpack.c.l.b16 %v2996
      %v3279 = vunpack.c.h.b16 %v2996
      %v3280 = vunpack.c.l.b16 %v2997
      %v3281 = vunpack.c.h.b16 %v2997
      %v3282 = vunpack.c.l.b16 %v2998
      %v3283 = vunpack.c.h.b16 %v2998
      %v3284 = vunpack.c.l.b16 %v2999
      %v3285 = vunpack.c.l.b16 %v3000
      %v3286 = vunpack.c.h.b16 %v3000
      %v3287 = vunpack.c.l.b16 %v3001
      %v3288 = vunpack.c.h.b16 %v3001
      %v3289 = vunpack.c.l.b16 %v3002
      %v3290 = vunpack.c.h.b16 %v3002
      %v3291 = vunpack.c.l.b16 %v3003
      %v3292 = vunpack.c.h.b16 %v3003
      %v3293 = vunpack.c.l.b16 %v3004
      %v3294 = vunpack.c.l.b16 %v3005
      %v3295 = vunpack.c.h.b16 %v3005
      %v3296 = vunpack.c.l.b16 %v3006
      %v3297 = vunpack.c.h.b16 %v3006
      %v3298 = vunpack.c.l.b16 %v3007
      %v3299 = vunpack.c.h.b16 %v3007
      %v3300 = vunpack.c.l.b16 %v3008
      %v3301 = vunpack.c.h.b16 %v3008
      %v3302 = vunpack.c.l.b16 %v3009
      %v3303 = vunpack.c.l.b16 %v3010
      %v3304 = vunpack.c.h.b16 %v3010
      %v3305 = vunpack.c.l.b16 %v3011
      %v3306 = vunpack.c.h.b16 %v3011
      %v3307 = vunpack.c.l.b16 %v3012
      %v3308 = vunpack.c.h.b16 %v3012
      %v3309 = vunpack.c.l.b16 %v3013
      %v3310 = vunpack.c.h.b16 %v3013
      %v3311 = vunpack.c.l.b16 %v3014
      %v3312 = vunpack.c.l.b16 %v3015
      %v3313 = vunpack.c.h.b16 %v3015
      %v3314 = vunpack.c.l.b16 %v3016
      %v3315 = vunpack.c.h.b16 %v3016
      %v3316 = vunpack.c.l.b16 %v3017
      %v3317 = vunpack.c.h.b16 %v3017
      %v3318 = vunpack.c.l.b16 %v3018
      %v3319 = vunpack.c.h.b16 %v3018
      %v3320 = vunpack.c.l.b16 %v3019
      %v3321 = vunpack.c.l.b16 %v3020
      %v3322 = vunpack.c.h.b16 %v3020
      %v3323 = vunpack.c.l.b16 %v3021
      %v3324 = vunpack.c.h.b16 %v3021
      %v3325 = vunpack.c.l.b16 %v3022
      %v3326 = vunpack.c.h.b16 %v3022
      %v3327 = vunpack.c.l.b16 %v3023
      %v3328 = vunpack.c.h.b16 %v3023
      %v3329 = vunpack.c.l.b16 %v3024
      %v3330 = vpack.c.b16 %v3195, %v3186
      %v3331 = vpack.c.b16 %v3196, %v3187
      %v3332 = vpack.c.b16 %v3197, %v3188
      %v3333 = vpack.c.b16 %v3198, %v3189
      %v3334 = vpack.c.b16 %v3199, %v3190
      %v3335 = vpack.c.b16 %v3200, %v3191
      %v3336 = vpack.c.b16 %v3201, %v3192
      %v3337 = vpack.c.b16 %v3202, %v3193
      %v3338 = vpack.c.b16 %v3203, %v3194
      %v3339 = vpack.c.b16 %v3213, %v3204
      %v3340 = vpack.c.b16 %v3214, %v3205
      %v3341 = vpack.c.b16 %v3215, %v3206
      %v3342 = vpack.c.b16 %v3216, %v3207
      %v3343 = vpack.c.b16 %v3217, %v3208
      %v3344 = vpack.c.b16 %v3218, %v3209
      %v3345 = vpack.c.b16 %v3219, %v3210
      %v3346 = vpack.c.b16 %v3220, %v3211
      %v3347 = vpack.c.b16 %v3221, %v3212
      %v3348 = vpack.c.b16 %v3231, %v3222
      %v3349 = vpack.c.b16 %v3232, %v3223
      %v3350 = vpack.c.b16 %v3233, %v3224
      %v3351 = vpack.c.b16 %v3234, %v3225
      %v3352 = vpack.c.b16 %v3235, %v3226
      %v3353 = vpack.c.b16 %v3236, %v3227
      %v3354 = vpack.c.b16 %v3237, %v3228
      %v3355 = vpack.c.b16 %v3238, %v3229
      %v3356 = vpack.c.b16 %v3239, %v3230
      %v3357 = vpack.c.b16 %v3249, %v3240
      %v3358 = vpack.c.b16 %v3250, %v3241
      %v3359 = vpack.c.b16 %v3251, %v3242
      %v3360 = vpack.c.b16 %v3252, %v3243
      %v3361 = vpack.c.b16 %v3253, %v3244
      %v3362 = vpack.c.b16 %v3254, %v3245
      %v3363 = vpack.c.b16 %v3255, %v3246
      %v3364 = vpack.c.b16 %v3256, %v3247
      %v3365 = vpack.c.b16 %v3257, %v3248
      %v3366 = vpack.c.b16 %v3267, %v3258
      %v3367 = vpack.c.b16 %v3268, %v3259
      %v3368 = vpack.c.b16 %v3269, %v3260
      %v3369 = vpack.c.b16 %v3270, %v3261
      %v3370 = vpack.c.b16 %v3271, %v3262
      %v3371 = vpack.c.b16 %v3272, %v3263
      %v3372 = vpack.c.b16 %v3273, %v3264
      %v3373 = vpack.c.b16 %v3274, %v3265
      %v3374 = vpack.c.b16 %v3275, %v3266
      %v3375 = vpack.c.b16 %v3285, %v3276
      %v3376 = vpack.c.b16 %v3286, %v3277
      %v3377 = vpack.c.b16 %v3287, %v3278
      %v3378 = vpack.c.b16 %v3288, %v3279
      %v3379 = vpack.c.b16 %v3289, %v3280
      %v3380 = vpack.c.b16 %v3290, %v3281
      %v3381 = vpack.c.b16 %v3291, %v3282
      %v3382 = vpack.c.b16 %v3292, %v3283
      %v3383 = vpack.c.b16 %v3293, %v3284
      %v3384 = vpack.c.b16 %v3303, %v3294
      %v3385 = vpack.c.b16 %v3304, %v3295
      %v3386 = vpack.c.b16 %v3305, %v3296
      %v3387 = vpack.c.b16 %v3306, %v3297
      %v3388 = vpack.c.b16 %v3307, %v3298
      %v3389 = vpack.c.b16 %v3308, %v3299
      %v3390 = vpack.c.b16 %v3309, %v3300
      %v3391 = vpack.c.b16 %v3310, %v3301
      %v3392 = vpack.c.b16 %v3311, %v3302
      %v3393 = vpack.c.b16 %v3321, %v3312
      %v3394 = vpack.c.b16 %v3322, %v3313
      %v3395 = vpack.c.b16 %v3323, %v3314
      %v3396 = vpack.c.b16 %v3324, %v3315
      %v3397 = vpack.c.b16 %v3325, %v3316
      %v3398 = vpack.c.b16 %v3326, %v3317
      %v3399 = vpack.c.b16 %v3327, %v3318
      %v3400 = vpack.c.b16 %v3328, %v3319
      %v3401 = vpack.c.b16 %v3329, %v3320
      %3474 = vmatpush.bf16.xpose.msra.mxu0 %v2632
      %3475 = vmatpush.bf16.xpose.msra.mxu0 %v2631
      %3476 = vmatpush.bf16.xpose.msra.mxu0 %v2630
      %3477 = vmatpush.bf16.xpose.msra.mxu0 %v2629
      %3478 = vmatpush.bf16.xpose.msra.mxu0 %v2628
      %3479 = vmatpush.bf16.xpose.msra.mxu0 %v2627
      %3480 = vmatpush.bf16.xpose.msra.mxu0 %v2626
      %3481 = vmatpush.bf16.xpose.msra.mxu0 %v2625
      %3482 = vmatmul.bf16.gmra.mxu0 %v3330
      %v3483 = vpop.f32.mrf.mxu0
      %v3484 = vadd.f32 %v3044, %v3483
      %v3485 = vpop.f32.mrf.mxu0
      %3486 = vmatmul.bf16.gmra.mxu0 %v3339
      %v3487 = vpop.f32.mrf.mxu0
      %v3488 = vpop.f32.mrf.mxu0
      %3489 = vmatmul.bf16.gmra.mxu0 %v3348
      %v3490 = vpop.f32.mrf.mxu0
      %v3491 = vpop.f32.mrf.mxu0
      %3492 = vmatmul.bf16.gmra.mxu0 %v3357
      %v3493 = vpop.f32.mrf.mxu0
      %v3494 = vpop.f32.mrf.mxu0
      %3495 = vmatmul.bf16.gmra.mxu0 %v3366
      %v3496 = vpop.f32.mrf.mxu0
      %v3497 = vpop.f32.mrf.mxu0
      %3498 = vmatmul.bf16.gmra.mxu0 %v3375
      %v3499 = vpop.f32.mrf.mxu0
      %v3500 = vpop.f32.mrf.mxu0
      %3501 = vmatmul.bf16.gmra.mxu0 %v3384
      %v3502 = vpop.f32.mrf.mxu0
      %v3503 = vpop.f32.mrf.mxu0
      %3504 = vmatmul.bf16.gmra.mxu0 %v3393
      %v3505 = vpop.f32.mrf.mxu0
      %v3506 = vpop.f32.mrf.mxu0
      %3507 = vdwg.mxu0
      %3508 = vmatpush.bf16.xpose.msra.mxu0 %v2680
      %3509 = vmatpush.bf16.xpose.msra.mxu0 %v2679
      %3510 = vmatpush.bf16.xpose.msra.mxu0 %v2678
      %3511 = vmatpush.bf16.xpose.msra.mxu0 %v2677
      %3512 = vmatpush.bf16.xpose.msra.mxu0 %v2676
      %3513 = vmatpush.bf16.xpose.msra.mxu0 %v2675
      %3514 = vmatpush.bf16.xpose.msra.mxu0 %v2674
      %3515 = vmatpush.bf16.xpose.msra.mxu0 %v2673
      %3516 = vmatmul.bf16.gmra.mxu0 %v3331
      %v3517 = vpop.f32.mrf.mxu0
      %v3518 = vadd.f32 %v3484, %v3517
      %v3519 = vpop.f32.mrf.mxu0
      %3520 = vmatmul.bf16.gmra.mxu0 %v3340
      %v3521 = vpop.f32.mrf.mxu0
      %v3522 = vpop.f32.mrf.mxu0
      %3523 = vmatmul.bf16.gmra.mxu0 %v3349
      %v3524 = vpop.f32.mrf.mxu0
      %v3525 = vpop.f32.mrf.mxu0
      %3526 = vmatmul.bf16.gmra.mxu0 %v3358
      %v3527 = vpop.f32.mrf.mxu0
      %v3528 = vpop.f32.mrf.mxu0
      %3529 = vmatmul.bf16.gmra.mxu0 %v3367
      %v3530 = vpop.f32.mrf.mxu0
      %v3531 = vpop.f32.mrf.mxu0
      %3532 = vmatmul.bf16.gmra.mxu0 %v3376
      %v3533 = vpop.f32.mrf.mxu0
      %v3534 = vpop.f32.mrf.mxu0
      %3535 = vmatmul.bf16.gmra.mxu0 %v3385
      %v3536 = vpop.f32.mrf.mxu0
      %v3537 = vpop.f32.mrf.mxu0
      %3538 = vmatmul.bf16.gmra.mxu0 %v3394
      %v3539 = vpop.f32.mrf.mxu0
      %v3540 = vpop.f32.mrf.mxu0
      %3541 = vdwg.mxu0
      %3542 = vmatpush.bf16.xpose.msra.mxu0 %v2712
      %3543 = vmatpush.bf16.xpose.msra.mxu0 %v2711
      %3544 = vmatpush.bf16.xpose.msra.mxu0 %v2710
      %3545 = vmatpush.bf16.xpose.msra.mxu0 %v2709
      %3546 = vmatpush.bf16.xpose.msra.mxu0 %v2708
      %3547 = vmatpush.bf16.xpose.msra.mxu0 %v2707
      %3548 = vmatpush.bf16.xpose.msra.mxu0 %v2706
      %3549 = vmatpush.bf16.xpose.msra.mxu0 %v2705
      %3550 = vmatmul.bf16.gmra.mxu0 %v3332
      %v3551 = vpop.f32.mrf.mxu0
      %v3552 = vadd.f32 %v3518, %v3551
      %v3553 = vpop.f32.mrf.mxu0
      %3554 = vmatmul.bf16.gmra.mxu0 %v3341
      %v3555 = vpop.f32.mrf.mxu0
      %v3556 = vpop.f32.mrf.mxu0
      %3557 = vmatmul.bf16.gmra.mxu0 %v3350
      %v3558 = vpop.f32.mrf.mxu0
      %v3559 = vpop.f32.mrf.mxu0
      %3560 = vmatmul.bf16.gmra.mxu0 %v3359
      %v3561 = vpop.f32.mrf.mxu0
      %v3562 = vpop.f32.mrf.mxu0
      %3563 = vmatmul.bf16.gmra.mxu0 %v3368
      %v3564 = vpop.f32.mrf.mxu0
      %v3565 = vpop.f32.mrf.mxu0
      %3566 = vmatmul.bf16.gmra.mxu0 %v3377
      %v3567 = vpop.f32.mrf.mxu0
      %v3568 = vpop.f32.mrf.mxu0
      %3569 = vmatmul.bf16.gmra.mxu0 %v3386
      %v3570 = vpop.f32.mrf.mxu0
      %v3571 = vpop.f32.mrf.mxu0
      %3572 = vmatmul.bf16.gmra.mxu0 %v3395
      %v3573 = vpop.f32.mrf.mxu0
      %v3574 = vpop.f32.mrf.mxu0
      %3575 = vdwg.mxu0
      %3576 = vmatpush.bf16.xpose.msra.mxu0 %v2744
      %3577 = vmatpush.bf16.xpose.msra.mxu0 %v2743
      %3578 = vmatpush.bf16.xpose.msra.mxu0 %v2742
      %3579 = vmatpush.bf16.xpose.msra.mxu0 %v2741
      %3580 = vmatpush.bf16.xpose.msra.mxu0 %v2740
      %3581 = vmatpush.bf16.xpose.msra.mxu0 %v2739
      %3582 = vmatpush.bf16.xpose.msra.mxu0 %v2738
      %3583 = vmatpush.bf16.xpose.msra.mxu0 %v2737
      %3584 = vmatmul.bf16.gmra.mxu0 %v3333
      %v3585 = vpop.f32.mrf.mxu0
      %v3586 = vadd.f32 %v3552, %v3585
      %v3587 = vpop.f32.mrf.mxu0
      %3588 = vmatmul.bf16.gmra.mxu0 %v3342
      %v3589 = vpop.f32.mrf.mxu0
      %v3590 = vpop.f32.mrf.mxu0
      %3591 = vmatmul.bf16.gmra.mxu0 %v3351
      %v3592 = vpop.f32.mrf.mxu0
      %v3593 = vpop.f32.mrf.mxu0
      %3594 = vmatmul.bf16.gmra.mxu0 %v3360
      %v3595 = vpop.f32.mrf.mxu0
      %v3596 = vpop.f32.mrf.mxu0
      %3597 = vmatmul.bf16.gmra.mxu0 %v3369
      %v3598 = vpop.f32.mrf.mxu0
      %v3599 = vpop.f32.mrf.mxu0
      %3600 = vmatmul.bf16.gmra.mxu0 %v3378
      %v3601 = vpop.f32.mrf.mxu0
      %v3602 = vpop.f32.mrf.mxu0
      %3603 = vmatmul.bf16.gmra.mxu0 %v3387
      %v3604 = vpop.f32.mrf.mxu0
      %v3605 = vpop.f32.mrf.mxu0
      %3606 = vmatmul.bf16.gmra.mxu0 %v3396
      %v3607 = vpop.f32.mrf.mxu0
      %v3608 = vpop.f32.mrf.mxu0
      %3609 = vdwg.mxu0
      %3610 = vmatpush.bf16.xpose.msra.mxu0 %v2792
      %3611 = vmatpush.bf16.xpose.msra.mxu0 %v2791
      %3612 = vmatpush.bf16.xpose.msra.mxu0 %v2790
      %3613 = vmatpush.bf16.xpose.msra.mxu0 %v2789
      %3614 = vmatpush.bf16.xpose.msra.mxu0 %v2788
      %3615 = vmatpush.bf16.xpose.msra.mxu0 %v2787
      %3616 = vmatpush.bf16.xpose.msra.mxu0 %v2786
      %3617 = vmatpush.bf16.xpose.msra.mxu0 %v2785
      %3618 = vmatmul.bf16.gmra.mxu0 %v3334
      %v3619 = vpop.f32.mrf.mxu0
      %v3620 = vadd.f32 %v3586, %v3619
      %v3621 = vpop.f32.mrf.mxu0
      %3622 = vmatmul.bf16.gmra.mxu0 %v3343
      %v3623 = vpop.f32.mrf.mxu0
      %v3624 = vpop.f32.mrf.mxu0
      %3625 = vmatmul.bf16.gmra.mxu0 %v3352
      %v3626 = vpop.f32.mrf.mxu0
      %v3627 = vpop.f32.mrf.mxu0
      %3628 = vmatmul.bf16.gmra.mxu0 %v3361
      %v3629 = vpop.f32.mrf.mxu0
      %v3630 = vpop.f32.mrf.mxu0
      %3631 = vmatmul.bf16.gmra.mxu0 %v3370
      %v3632 = vpop.f32.mrf.mxu0
      %v3633 = vpop.f32.mrf.mxu0
      %3634 = vmatmul.bf16.gmra.mxu0 %v3379
      %v3635 = vpop.f32.mrf.mxu0
      %v3636 = vpop.f32.mrf.mxu0
      %3637 = vmatmul.bf16.gmra.mxu0 %v3388
      %v3638 = vpop.f32.mrf.mxu0
      %v3639 = vpop.f32.mrf.mxu0
      %3640 = vmatmul.bf16.gmra.mxu0 %v3397
      %v3641 = vpop.f32.mrf.mxu0
      %v3642 = vpop.f32.mrf.mxu0
      %3643 = vdwg.mxu0
      %3644 = vmatpush.bf16.xpose.msra.mxu0 %v2824
      %3645 = vmatpush.bf16.xpose.msra.mxu0 %v2823
      %3646 = vmatpush.bf16.xpose.msra.mxu0 %v2822
      %3647 = vmatpush.bf16.xpose.msra.mxu0 %v2821
      %3648 = vmatpush.bf16.xpose.msra.mxu0 %v2820
      %3649 = vmatpush.bf16.xpose.msra.mxu0 %v2819
      %3650 = vmatpush.bf16.xpose.msra.mxu0 %v2818
      %3651 = vmatpush.bf16.xpose.msra.mxu0 %v2817
      %3652 = vmatmul.bf16.gmra.mxu0 %v3335
      %v3653 = vpop.f32.mrf.mxu0
      %v3654 = vadd.f32 %v3620, %v3653
      %v3655 = vpop.f32.mrf.mxu0
      %3656 = vmatmul.bf16.gmra.mxu0 %v3344
      %v3657 = vpop.f32.mrf.mxu0
      %v3658 = vpop.f32.mrf.mxu0
      %3659 = vmatmul.bf16.gmra.mxu0 %v3353
      %v3660 = vpop.f32.mrf.mxu0
      %v3661 = vpop.f32.mrf.mxu0
      %3662 = vmatmul.bf16.gmra.mxu0 %v3362
      %v3663 = vpop.f32.mrf.mxu0
      %v3664 = vpop.f32.mrf.mxu0
      %3665 = vmatmul.bf16.gmra.mxu0 %v3371
      %v3666 = vpop.f32.mrf.mxu0
      %v3667 = vpop.f32.mrf.mxu0
      %3668 = vmatmul.bf16.gmra.mxu0 %v3380
      %v3669 = vpop.f32.mrf.mxu0
      %v3670 = vpop.f32.mrf.mxu0
      %3671 = vmatmul.bf16.gmra.mxu0 %v3389
      %v3672 = vpop.f32.mrf.mxu0
      %v3673 = vpop.f32.mrf.mxu0
      %3674 = vmatmul.bf16.gmra.mxu0 %v3398
      %v3675 = vpop.f32.mrf.mxu0
      %v3676 = vpop.f32.mrf.mxu0
      %3677 = vdwg.mxu0
      %3678 = vmatpush.bf16.xpose.msra.mxu0 %v2856
      %3679 = vmatpush.bf16.xpose.msra.mxu0 %v2855
      %3680 = vmatpush.bf16.xpose.msra.mxu0 %v2854
      %3681 = vmatpush.bf16.xpose.msra.mxu0 %v2853
      %3682 = vmatpush.bf16.xpose.msra.mxu0 %v2852
      %3683 = vmatpush.bf16.xpose.msra.mxu0 %v2851
      %3684 = vmatpush.bf16.xpose.msra.mxu0 %v2850
      %3685 = vmatpush.bf16.xpose.msra.mxu0 %v2849
      %3686 = vmatmul.bf16.gmra.mxu0 %v3336
      %v3687 = vpop.f32.mrf.mxu0
      %v3688 = vadd.f32 %v3654, %v3687
      %v3689 = vpop.f32.mrf.mxu0
      %3690 = vmatmul.bf16.gmra.mxu0 %v3345
      %v3691 = vpop.f32.mrf.mxu0
      %v3692 = vpop.f32.mrf.mxu0
      %3693 = vmatmul.bf16.gmra.mxu0 %v3354
      %v3694 = vpop.f32.mrf.mxu0
      %v3695 = vpop.f32.mrf.mxu0
      %3696 = vmatmul.bf16.gmra.mxu0 %v3363
      %v3697 = vpop.f32.mrf.mxu0
      %v3698 = vpop.f32.mrf.mxu0
      %3699 = vmatmul.bf16.gmra.mxu0 %v3372
      %v3700 = vpop.f32.mrf.mxu0
      %v3701 = vpop.f32.mrf.mxu0
      %3702 = vmatmul.bf16.gmra.mxu0 %v3381
      %v3703 = vpop.f32.mrf.mxu0
      %v3704 = vpop.f32.mrf.mxu0
      %3705 = vmatmul.bf16.gmra.mxu0 %v3390
      %v3706 = vpop.f32.mrf.mxu0
      %v3707 = vpop.f32.mrf.mxu0
      %3708 = vmatmul.bf16.gmra.mxu0 %v3399
      %v3709 = vpop.f32.mrf.mxu0
      %v3710 = vpop.f32.mrf.mxu0
      %3711 = vdwg.mxu0
      %3712 = vmatpush.bf16.xpose.msra.mxu0 %v2904
      %3713 = vmatpush.bf16.xpose.msra.mxu0 %v2903
      %3714 = vmatpush.bf16.xpose.msra.mxu0 %v2902
      %3715 = vmatpush.bf16.xpose.msra.mxu0 %v2901
      %3716 = vmatpush.bf16.xpose.msra.mxu0 %v2900
      %3717 = vmatpush.bf16.xpose.msra.mxu0 %v2899
      %3718 = vmatpush.bf16.xpose.msra.mxu0 %v2898
      %3719 = vmatpush.bf16.xpose.msra.mxu0 %v2897
      %3720 = vmatmul.bf16.gmra.mxu0 %v3337
      %v3721 = vpop.f32.mrf.mxu0
      %v3722 = vadd.f32 %v3688, %v3721
      %v3723 = vpop.f32.mrf.mxu0
      %3724 = vmatmul.bf16.gmra.mxu0 %v3346
      %v3725 = vpop.f32.mrf.mxu0
      %v3726 = vpop.f32.mrf.mxu0
      %3727 = vmatmul.bf16.gmra.mxu0 %v3355
      %v3728 = vpop.f32.mrf.mxu0
      %v3729 = vpop.f32.mrf.mxu0
      %3730 = vmatmul.bf16.gmra.mxu0 %v3364
      %v3731 = vpop.f32.mrf.mxu0
      %v3732 = vpop.f32.mrf.mxu0
      %3733 = vmatmul.bf16.gmra.mxu0 %v3373
      %v3734 = vpop.f32.mrf.mxu0
      %v3735 = vpop.f32.mrf.mxu0
      %3736 = vmatmul.bf16.gmra.mxu0 %v3382
      %v3737 = vpop.f32.mrf.mxu0
      %v3738 = vpop.f32.mrf.mxu0
      %3739 = vmatmul.bf16.gmra.mxu0 %v3391
      %v3740 = vpop.f32.mrf.mxu0
      %v3741 = vpop.f32.mrf.mxu0
      %3742 = vmatmul.bf16.gmra.mxu0 %v3400
      %v3743 = vpop.f32.mrf.mxu0
      %v3744 = vpop.f32.mrf.mxu0
      %3745 = vdwg.mxu0
      %3746 = vmatpush.bf16.xpose.msra.mxu0 %v2936
      %3747 = vmatpush.bf16.xpose.msra.mxu0 %v2935
      %3748 = vmatpush.bf16.xpose.msra.mxu0 %v2934
      %3749 = vmatpush.bf16.xpose.msra.mxu0 %v2933
      %3750 = vmatpush.bf16.xpose.msra.mxu0 %v2932
      %3751 = vmatpush.bf16.xpose.msra.mxu0 %v2931
      %3752 = vmatpush.bf16.xpose.msra.mxu0 %v2930
      %3753 = vmatpush.bf16.xpose.msra.mxu0 %v2929
      %3754 = vmatmul.bf16.gmra.mxu0 %v3338
      %v3755 = vpop.f32.mrf.mxu0
      %v3756 = vadd.f32 %v3722, %v3755
      %v3757 = vpop.f32.mrf.mxu0
      %3758 = vmatmul.bf16.gmra.mxu0 %v3347
      %v3759 = vpop.f32.mrf.mxu0
      %v3760 = vpop.f32.mrf.mxu0
      %3761 = vmatmul.bf16.gmra.mxu0 %v3356
      %v3762 = vpop.f32.mrf.mxu0
      %v3763 = vpop.f32.mrf.mxu0
      %3764 = vmatmul.bf16.gmra.mxu0 %v3365
      %v3765 = vpop.f32.mrf.mxu0
      %v3766 = vpop.f32.mrf.mxu0
      %3767 = vmatmul.bf16.gmra.mxu0 %v3374
      %v3768 = vpop.f32.mrf.mxu0
      %v3769 = vpop.f32.mrf.mxu0
      %3770 = vmatmul.bf16.gmra.mxu0 %v3383
      %v3771 = vpop.f32.mrf.mxu0
      %v3772 = vpop.f32.mrf.mxu0
      %3773 = vmatmul.bf16.gmra.mxu0 %v3392
      %v3774 = vpop.f32.mrf.mxu0
      %v3775 = vpop.f32.mrf.mxu0
      %3776 = vmatmul.bf16.gmra.mxu0 %v3401
      %v3777 = vpop.f32.mrf.mxu0
      %v3778 = vpop.f32.mrf.mxu0
      %3779 = vdwg.mxu0
      %v3780 = vmax.f32 %v3756, 0.0
      %3781 = vst [vmem:[%s258] sm:$0xff] %v3780
      %p3782 = scmp.lt.s32.totalorder %s20, 1
      %s3783 = scalar_select %p3782, %s20, 1
      %p3784 = scmp.lt.s32.totalorder %s21, 1
      %s3785 = scalar_select %p3784, %s21, 1
      %s3786 = smul.addr %s3783, 2
      %s3787 = sadd.s32 %s3785, %s3786
      %s3788 = smul.addr %s3787, 8
      %s3789 = scalar_lea.vmem %s5, %s3788
      // Predicated region
      $region49: #{downsample_forward.1} parent=39 // pred_check
        %p3790 = pneg %p160
      $region50: #{downsample_forward.1} parent=39 // pred_check_branch
        %3792 = sbr.rel (%p3790) target = $region52
      $region51: #{downsample_forward.1} parent=39 // pred_region
        _
      $region52: #{downsample_forward.1} parent=39 // pred_fallthru
        _
    $region40: #{downsample_forward.1} parent=5 // pred_fallthru
      _
    %p3793 = scmp.le.s32.totalorder 2, %s11
    // Predicated region
    $region53: #{downsample_forward.1} parent=5 // pred_check
      %p3794 = pneg %p3793
    $region54: #{downsample_forward.1} parent=5 // pred_check_branch
      %3796 = sbr.rel (%p3794) target = $region56
    $region55: #{downsample_forward.1} parent=5 // pred_region
      %s3797 = ssub.s32 %s11, 2
      // Predicated region
      $region57: #{downsample_forward.1} parent=55 // pred_check
        %p3798 = pneg %p166
      $region58: #{downsample_forward.1} parent=55 // pred_check_branch
        %3800 = sbr.rel (%p3798) target = $region60
      $region59: #{downsample_forward.1} parent=55 // pred_region
        %p3801 = scmp.lt.s32.totalorder %s22, 1
        %s3802 = scalar_select %p3801, %s22, 1
        %p3803 = scmp.lt.s32.totalorder %s23, 1
        %s3804 = scalar_select %p3803, %s23, 1
        %s3805 = smul.addr %s3802, 2
        %s3806 = sadd.s32 %s3804, %s3805
        %s3807 = smul.addr %s3806, 8
        %s3808 = scalar_lea.vmem %s5, %s3807
      $region60: #{downsample_forward.1} parent=55 // pred_fallthru
        _
    $region56: #{downsample_forward.1} parent=5 // pred_fallthru
      _
  $region6: #{downsample_forward.1} parent=0 // loop_footer
    %s15 = sadd.s32 1, %s11
  $region7: #{downsample_forward.1} parent=0 // loop_footer_branch
    %10 = sbr.rel target = $region3
  $region8: #{downsample_forward.1} parent=0 // loop_exit
    _

</llo_original>
